<compile_context>
chip_gen: v7x
topology: tpu7x:2x2x1
jax: 0.10.0
libtpu: 0.0.40
codegen_flags: <defaults>
</compile_context>

<pallas_src>
import functools

import jax
import jax.numpy as jnp
from jax import lax
from jax.experimental import pallas as pl
from jax.experimental.pallas import tpu as pltpu


# ----------------------------------------------------------------------------
# Pallas kernel 1: plain 2-D  out = act(x @ w^T + b)   (conv1, towers fused
# along Cout, grid over batch images).
#   x : (Mi, K) bf16   w : (Nout, K) bf16   b : (1, Nout) f32   out : (Mi, Nout)
# ----------------------------------------------------------------------------
def _mm_bias_act_2d_kernel(x_ref, w_ref, b_ref, o_ref, *, apply_relu):
    acc = lax.dot_general(
        x_ref[...], w_ref[...],
        dimension_numbers=(((1,), (1,)), ((), ())),
        preferred_element_type=jnp.float32,
    )
    acc = acc + b_ref[...].astype(jnp.float32)
    if apply_relu:
        acc = jnp.maximum(acc, 0.0)
    o_ref[...] = acc.astype(o_ref.dtype)


def conv1_matmul(patches, w_cat, b_cat, batch, m_per_image, out_dtype):
    """patches:(batch*m_per_image, K) bf16, w_cat:(Nout,K) bf16, b_cat:(1,Nout) f32."""
    M, K = patches.shape
    nout = w_cat.shape[0]
    kernel = functools.partial(_mm_bias_act_2d_kernel, apply_relu=True)
    return pl.pallas_call(
        kernel,
        out_shape=jax.ShapeDtypeStruct((M, nout), out_dtype),
        grid=(batch,),
        in_specs=[
            pl.BlockSpec((m_per_image, K), lambda i: (i, 0)),
            pl.BlockSpec((nout, K), lambda i: (0, 0)),
            pl.BlockSpec((1, nout), lambda i: (0, 0)),
        ],
        out_specs=pl.BlockSpec((m_per_image, nout), lambda i: (i, 0)),
        compiler_params=pltpu.CompilerParams(dimension_semantics=("parallel",)),
    )(patches, w_cat, b_cat)


# ----------------------------------------------------------------------------
# Pallas kernel 2: tower-batched  out[t] = act(x[t] @ w[t]^T + b[t])
#   x : (2, M, K) bf16   w : (2, Nout, K) bf16   b : (2, 1, Nout) f32
# grid=(2,) over towers, "parallel" (v7x: one tower per TensorCore).
# ----------------------------------------------------------------------------
def _tower_mm_kernel(x_ref, w_ref, b_ref, o_ref, *, apply_relu):
    acc = lax.dot_general(
        x_ref[0], w_ref[0],
        dimension_numbers=(((1,), (1,)), ((), ())),
        preferred_element_type=jnp.float32,
    )
    acc = acc + b_ref[0].astype(jnp.float32)
    if apply_relu:
        acc = jnp.maximum(acc, 0.0)
    o_ref[0] = acc.astype(o_ref.dtype)


def tower_matmul(x, w, b, apply_relu, out_dtype):
    T, M, K = x.shape
    nout = w.shape[1]
    kernel = functools.partial(_tower_mm_kernel, apply_relu=apply_relu)
    return pl.pallas_call(
        kernel,
        out_shape=jax.ShapeDtypeStruct((T, M, nout), out_dtype),
        grid=(T,),
        in_specs=[
            pl.BlockSpec((1, M, K), lambda t: (t, 0, 0)),
            pl.BlockSpec((1, nout, K), lambda t: (t, 0, 0)),
            pl.BlockSpec((1, 1, nout), lambda t: (t, 0, 0)),
        ],
        out_specs=pl.BlockSpec((1, M, nout), lambda t: (t, 0, 0)),
        compiler_params=pltpu.CompilerParams(dimension_semantics=("parallel",)),
    )(x, w, b)


# ----------------------------------------------------------------------------
# Glue: channel-last im2col (pure slicing / concat, no compute).
# Feature ordering is (kh, kw, c):  f = kh*KW*C + kw*C + c, matching the
# one-time weight permutation in prepare_fused_params.
# ----------------------------------------------------------------------------
def _im2col_nhwc(x, kh, kw, stride):
    """x: (..., H, W, C) -> ((..., OH, OW, KH*KW*C), OH, OW)."""
    h, w = x.shape[-3], x.shape[-2]
    oh = (h - kh) // stride + 1
    ow = (w - kw) // stride + 1
    cols = []
    for i in range(kh):
        for j in range(kw):
            cols.append(x[..., i:i + stride * oh:stride,
                          j:j + stride * ow:stride, :])
    return jnp.concatenate(cols, axis=-1), oh, ow


# ----------------------------------------------------------------------------
# Parameters: kept in PyTorch layout (OIHW conv, (out, C*H*W) linear, NCHW
# flatten) so the pure-JAX reference matches nn.Module semantics exactly, then
# permuted / stacked / bf16-cast ONCE for the Pallas path.
# ----------------------------------------------------------------------------
def init_tower_params(key, in_channels, output_size):
    ks = jax.random.split(key, 8)

    def conv_w(k, cout, cin, kh, kw):
        fan_in = cin * kh * kw
        return jax.random.normal(k, (cout, cin, kh, kw), jnp.float32) / jnp.sqrt(fan_in)

    def lin_w(k, nout, nin):
        return jax.random.normal(k, (nout, nin), jnp.float32) / jnp.sqrt(nin)

    return {
        "w1": conv_w(ks[0], 32, in_channels, 8, 8),
        "b1": 0.01 * jax.random.normal(ks[1], (32,), jnp.float32),
        "w2": conv_w(ks[2], 64, 32, 4, 4),
        "b2": 0.01 * jax.random.normal(ks[3], (64,), jnp.float32),
        "w3": conv_w(ks[4], 64, 64, 3, 3),
        "b3": 0.01 * jax.random.normal(ks[5], (64,), jnp.float32),
        "wf": lin_w(ks[6], output_size, 7 * 7 * 64),
        "bf": 0.01 * jax.random.normal(ks[7], (output_size,), jnp.float32),
    }


def prepare_fused_params(target_p, predictor_p):
    """One-time permutation/stack/cast of PyTorch-layout params for Pallas."""
    towers = (target_p, predictor_p)  # index 0 = target, 1 = predictor

    def conv_mat(w):  # OIHW -> (Cout, KH*KW*Cin), feature order (kh, kw, cin)
        cout = w.shape[0]
        return w.transpose(0, 2, 3, 1).reshape(cout, -1)

    def lin_mat(w):   # columns: NCHW-flatten (c*49+h*7+w) -> NHWC-flatten (h*7*64+w*64+c)
        out = w.shape[0]
        return w.reshape(out, 64, 7, 7).transpose(0, 2, 3, 1).reshape(out, -1)

    f = {
        # conv1: both towers concatenated along Cout (shared input patches)
        "w1": jnp.concatenate([conv_mat(p["w1"]) for p in towers], axis=0).astype(jnp.bfloat16),
        "b1": jnp.concatenate([p["b1"] for p in towers]).reshape(1, -1).astype(jnp.float32),
        # conv2 / conv3 / linear: tower-stacked on a leading axis
        "w2": jnp.stack([conv_mat(p["w2"]) for p in towers]).astype(jnp.bfloat16),
        "b2": jnp.stack([p["b2"].reshape(1, -1) for p in towers]).astype(jnp.float32),
        "w3": jnp.stack([conv_mat(p["w3"]) for p in towers]).astype(jnp.bfloat16),
        "b3": jnp.stack([p["b3"].reshape(1, -1) for p in towers]).astype(jnp.float32),
        "wf": jnp.stack([lin_mat(p["wf"]) for p in towers]).astype(jnp.bfloat16),
        "bf": jnp.stack([p["bf"].reshape(1, -1) for p in towers]).astype(jnp.float32),
    }
    return f


# ----------------------------------------------------------------------------
# Fused RND forward: returns (predictor_output, target_output) like PyTorch.
# ----------------------------------------------------------------------------
def rnd_forward(fused, x_nchw):
    n = x_nchw.shape[0]
    # one-time layout change to channel-last + bf16 for MXU
    x = jnp.transpose(x_nchw, (0, 2, 3, 1)).astype(jnp.bfloat16)       # (n, 84, 84, C)

    # ---- conv1 (both towers fused along Cout, shared patches) ----
    p1, oh1, ow1 = _im2col_nhwc(x, 8, 8, 4)                            # (n, 20, 20, 64*C)
    p1 = p1.reshape(n * oh1 * ow1, -1)
    h1 = conv1_matmul(p1, fused["w1"], fused["b1"], n, oh1 * ow1,
                      jnp.bfloat16)                                    # (n*400, 64)
    h1 = h1.reshape(n, oh1, ow1, 64)
    h1 = jnp.stack([h1[..., :32], h1[..., 32:]], axis=0)               # (2, n, 20, 20, 32)

    # ---- conv2 (tower-batched) ----
    p2, oh2, ow2 = _im2col_nhwc(h1, 4, 4, 2)                           # (2, n, 9, 9, 512)
    p2 = p2.reshape(2, n * oh2 * ow2, -1)
    h2 = tower_matmul(p2, fused["w2"], fused["b2"], True, jnp.bfloat16)  # (2, n*81, 64)
    h2 = h2.reshape(2, n, oh2, ow2, 64)

    # ---- conv3 (tower-batched) ----
    p3, oh3, ow3 = _im2col_nhwc(h2, 3, 3, 1)                           # (2, n, 7, 7, 576)
    p3 = p3.reshape(2, n * oh3 * ow3, -1)
    h3 = tower_matmul(p3, fused["w3"], fused["b3"], True, jnp.bfloat16)  # (2, n*49, 64)

    # ---- flatten (NHWC order; wf columns were permuted to match) + linear ----
    h3 = h3.reshape(2, n, oh3 * ow3 * 64)                              # (2, n, 3136)
    out = tower_matmul(h3, fused["wf"], fused["bf"], False, jnp.float32)  # (2, n, out)

    predictor_output = out[1]
    target_output = out[0]
    return predictor_output, target_output


# ----------------------------------------------------------------------------
# Pure-JAX f32 reference in PyTorch layout (sanity check of the Pallas path
# including the weight permutations).
# ----------------------------------------------------------------------------
def _ref_tower(params, x):
    def conv(x, w, b, s):
        y = lax.conv_general_dilated(
            x, w, window_strides=(s, s), padding="VALID",
            dimension_numbers=("NCHW", "OIHW", "NCHW"))
        return y + b.reshape(1, -1, 1, 1)

    h = jax.nn.relu(conv(x, params["w1"], params["b1"], 4))
    h = jax.nn.relu(conv(h, params["w2"], params["b2"], 2))
    h = jax.nn.relu(conv(h, params["w3"], params["b3"], 1))
    h = h.reshape(h.shape[0], -1)          # NCHW flatten, like nn.Flatten
    return h @ params["wf"].T + params["bf"]


if __name__ == "__main__":
    # RNDModel(input_shape=(C, 84, 84), output_size): spatial must be 84 because
    # the flatten feeds Linear(7*7*64, ...).  Keep batch/channels small.
    batch, channels, spatial, output_size = 2, 4, 84, 64

    key = jax.random.PRNGKey(0)
    k_x, k_pred, k_targ = jax.random.split(key, 3)

    x = jax.random.normal(k_x, (batch, channels, spatial, spatial), jnp.float32)
    predictor_params = init_tower_params(k_pred, channels, output_size)
    target_params = init_tower_params(k_targ, channels, output_size)
    fused = prepare_fused_params(target_params, predictor_params)

    fwd = jax.jit(rnd_forward)
    pred_out, targ_out = fwd(fused, x)
    pred_out = jax.block_until_ready(pred_out)
    targ_out = jax.block_until_ready(targ_out)

    assert pred_out.shape == (batch, output_size)
    assert targ_out.shape == (batch, output_size)

    # sanity check vs pure-JAX f32 reference (bf16 MXU operands -> loose tol)
    ref_pred = _ref_tower(predictor_params, x)
    ref_targ = _ref_tower(target_params, x)
    assert jnp.allclose(pred_out, ref_pred, rtol=5e-2, atol=5e-2), \
        float(jnp.max(jnp.abs(pred_out - ref_pred)))
    assert jnp.allclose(targ_out, ref_targ, rtol=5e-2, atol=5e-2), \
        float(jnp.max(jnp.abs(targ_out - ref_targ)))

    print("KERNEL_OK")
</pallas_src>

<mosaic_0001>
module attributes {stable_mosaic.version = 11 : i64} {
  func.func @_mm_bias_act_2d_kernel(%arg0: i32, %arg1: memref<400x256xbf16, #tpu.memory_space<vmem>>, %arg2: memref<64x256xbf16, #tpu.memory_space<vmem>>, %arg3: memref<1x64xf32, #tpu.memory_space<vmem>>, %arg4: memref<400x64xbf16, #tpu.memory_space<vmem>>) attributes {dimension_semantics = [#tpu.dimension_semantics<parallel>], iteration_bounds = array<i64: 2>, scalar_prefetch = 0 : i64, scratch_operands = 0 : i64, tpu.core_type = #tpu.core_type<tc>, window_params = [{transform_indices = @transform_0, window_bounds = array<i64: 400, 256>}, {pipeline_mode = #tpu.pipeline_mode<synchronous>, transform_indices = @transform_1, window_bounds = array<i64: 64, 256>}, {pipeline_mode = #tpu.pipeline_mode<synchronous>, transform_indices = @transform_2, window_bounds = array<i64: 1, 64>}, {transform_indices = @transform_3, window_bounds = array<i64: 400, 64>}]} {
    %c0 = arith.constant 0 : index
    %c0_0 = arith.constant 0 : index
    %0 = vector.load %arg1[%c0, %c0_0] : memref<400x256xbf16, #tpu.memory_space<vmem>>, vector<400x256xbf16>
    %c0_1 = arith.constant 0 : index
    %c0_2 = arith.constant 0 : index
    %1 = vector.load %arg2[%c0_1, %c0_2] : memref<64x256xbf16, #tpu.memory_space<vmem>>, vector<64x256xbf16>
    %cst = arith.constant dense<0.000000e+00> : vector<400x64xf32>
    %2 = tpu.matmul %0, %1, %cst {dimension_numbers = #tpu.dot_dimension_numbers<[1], [1], [0], [0], [0, 0, 1, 0], [], []>} : vector<400x256xbf16>, vector<64x256xbf16>, vector<400x64xf32> -> vector<400x64xf32>
    %c0_3 = arith.constant 0 : index
    %c0_4 = arith.constant 0 : index
    %3 = vector.load %arg3[%c0_3, %c0_4] : memref<1x64xf32, #tpu.memory_space<vmem>>, vector<1x64xf32>
    %4 = vector.broadcast %3 : vector<1x64xf32> to vector<400x64xf32>
    %5 = arith.addf %2, %4 : vector<400x64xf32>
    %cst_5 = arith.constant 0.000000e+00 : f32
    %6 = vector.broadcast %cst_5 : f32 to vector<400x64xf32>
    %7 = arith.maximumf %5, %6 : vector<400x64xf32>
    %8 = arith.truncf %7 : vector<400x64xf32> to vector<400x64xbf16>
    %c0_6 = arith.constant 0 : index
    %c0_7 = arith.constant 0 : index
    %9 = vector.load %arg4[%c0_6, %c0_7] : memref<400x64xbf16, #tpu.memory_space<vmem>>, vector<400x64xbf16>
    tpu.vector_store %arg4[%c0_6, %c0_7], %8 {strides = array<i32>} : memref<400x64xbf16, #tpu.memory_space<vmem>>, vector<400x64xbf16>,
    return
  }
  func.func @transform_0(%arg0: i32) -> (i32, i32) {
    %c0_i32 = arith.constant 0 : i32
    %c0_i32_0 = arith.constant 0 : i32
    return %arg0, %c0_i32 : i32, i32
  }
  func.func @transform_1(%arg0: i32) -> (i32, i32) {
    %c0_i32 = arith.constant 0 : i32
    %c0_i32_0 = arith.constant 0 : i32
    %c0_i32_1 = arith.constant 0 : i32
    return %c0_i32, %c0_i32_0 : i32, i32
  }
  func.func @transform_2(%arg0: i32) -> (i32, i32) {
    %c0_i32 = arith.constant 0 : i32
    %c0_i32_0 = arith.constant 0 : i32
    %c0_i32_1 = arith.constant 0 : i32
    return %c0_i32, %c0_i32_0 : i32, i32
  }
  func.func @transform_3(%arg0: i32) -> (i32, i32) {
    %c0_i32 = arith.constant 0 : i32
    %c0_i32_0 = arith.constant 0 : i32
    return %arg0, %c0_i32 : i32, i32
  }
}

module attributes {stable_mosaic.version = 11 : i64} {
  func.func @_tower_mm_kernel(%arg0: i32, %arg1: memref<1x162x512xbf16, #tpu.memory_space<vmem>>, %arg2: memref<1x64x512xbf16, #tpu.memory_space<vmem>>, %arg3: memref<1x1x64xf32, #tpu.memory_space<vmem>>, %arg4: memref<1x162x64xbf16, #tpu.memory_space<vmem>>) attributes {dimension_semantics = [#tpu.dimension_semantics<parallel>], iteration_bounds = array<i64: 2>, scalar_prefetch = 0 : i64, scratch_operands = 0 : i64, tpu.core_type = #tpu.core_type<tc>, window_params = [{transform_indices = @transform_0, window_bounds = array<i64: 1, 162, 512>}, {transform_indices = @transform_1, window_bounds = array<i64: 1, 64, 512>}, {transform_indices = @transform_2, window_bounds = array<i64: 1, 1, 64>}, {transform_indices = @transform_3, window_bounds = array<i64: 1, 162, 64>}]} {
    %c0 = arith.constant 0 : index
    %c0_0 = arith.constant 0 : index
    %c0_1 = arith.constant 0 : index
    %0 = vector.load %arg1[%c0, %c0_0, %c0_1] : memref<1x162x512xbf16, #tpu.memory_space<vmem>>, vector<1x162x512xbf16>
    %1 = vector.shape_cast %0 : vector<1x162x512xbf16> to vector<162x512xbf16>
    %c0_2 = arith.constant 0 : index
    %c0_3 = arith.constant 0 : index
    %c0_4 = arith.constant 0 : index
    %2 = vector.load %arg2[%c0_2, %c0_3, %c0_4] : memref<1x64x512xbf16, #tpu.memory_space<vmem>>, vector<1x64x512xbf16>
    %3 = vector.shape_cast %2 : vector<1x64x512xbf16> to vector<64x512xbf16>
    %cst = arith.constant dense<0.000000e+00> : vector<162x64xf32>
    %4 = tpu.matmul %1, %3, %cst {dimension_numbers = #tpu.dot_dimension_numbers<[1], [1], [0], [0], [0, 0, 1, 0], [], []>} : vector<162x512xbf16>, vector<64x512xbf16>, vector<162x64xf32> -> vector<162x64xf32>
    %c0_5 = arith.constant 0 : index
    %c0_6 = arith.constant 0 : index
    %c0_7 = arith.constant 0 : index
    %5 = vector.load %arg3[%c0_5, %c0_6, %c0_7] : memref<1x1x64xf32, #tpu.memory_space<vmem>>, vector<1x1x64xf32>
    %6 = vector.shape_cast %5 : vector<1x1x64xf32> to vector<1x64xf32>
    %7 = vector.broadcast %6 : vector<1x64xf32> to vector<162x64xf32>
    %8 = arith.addf %4, %7 : vector<162x64xf32>
    %cst_8 = arith.constant 0.000000e+00 : f32
    %9 = vector.broadcast %cst_8 : f32 to vector<162x64xf32>
    %10 = arith.maximumf %8, %9 : vector<162x64xf32>
    %11 = arith.truncf %10 : vector<162x64xf32> to vector<162x64xbf16>
    %c0_9 = arith.constant 0 : index
    %c0_10 = arith.constant 0 : index
    %c0_11 = arith.constant 0 : index
    %12 = vector.load %arg4[%c0_9, %c0_10, %c0_11] : memref<1x162x64xbf16, #tpu.memory_space<vmem>>, vector<1x162x64xbf16>
    %13 = vector.shape_cast %12 : vector<1x162x64xbf16> to vector<162x64xbf16>
    %14 = vector.shape_cast %11 : vector<162x64xbf16> to vector<1x162x64xbf16>
    tpu.vector_store %arg4[%c0_9, %c0_10, %c0_11], %14 {strides = array<i32>} : memref<1x162x64xbf16, #tpu.memory_space<vmem>>, vector<1x162x64xbf16>,
    return
  }
  func.func @transform_0(%arg0: i32) -> (i32, i32, i32) {
    %c0_i32 = arith.constant 0 : i32
    %c0_i32_0 = arith.constant 0 : i32
    %c0_i32_1 = arith.constant 0 : i32
    return %arg0, %c0_i32, %c0_i32_0 : i32, i32, i32
  }
  func.func @transform_1(%arg0: i32) -> (i32, i32, i32) {
    %c0_i32 = arith.constant 0 : i32
    %c0_i32_0 = arith.constant 0 : i32
    %c0_i32_1 = arith.constant 0 : i32
    return %arg0, %c0_i32, %c0_i32_0 : i32, i32, i32
  }
  func.func @transform_2(%arg0: i32) -> (i32, i32, i32) {
    %c0_i32 = arith.constant 0 : i32
    %c0_i32_0 = arith.constant 0 : i32
    %c0_i32_1 = arith.constant 0 : i32
    return %arg0, %c0_i32, %c0_i32_0 : i32, i32, i32
  }
  func.func @transform_3(%arg0: i32) -> (i32, i32, i32) {
    %c0_i32 = arith.constant 0 : i32
    %c0_i32_0 = arith.constant 0 : i32
    %c0_i32_1 = arith.constant 0 : i32
    return %arg0, %c0_i32, %c0_i32_0 : i32, i32, i32
  }
}

module attributes {stable_mosaic.version = 11 : i64} {
  func.func @_tower_mm_kernel(%arg0: i32, %arg1: memref<1x98x576xbf16, #tpu.memory_space<vmem>>, %arg2: memref<1x64x576xbf16, #tpu.memory_space<vmem>>, %arg3: memref<1x1x64xf32, #tpu.memory_space<vmem>>, %arg4: memref<1x98x64xbf16, #tpu.memory_space<vmem>>) attributes {dimension_semantics = [#tpu.dimension_semantics<parallel>], iteration_bounds = array<i64: 2>, scalar_prefetch = 0 : i64, scratch_operands = 0 : i64, tpu.core_type = #tpu.core_type<tc>, window_params = [{transform_indices = @transform_0, window_bounds = array<i64: 1, 98, 576>}, {transform_indices = @transform_1, window_bounds = array<i64: 1, 64, 576>}, {transform_indices = @transform_2, window_bounds = array<i64: 1, 1, 64>}, {transform_indices = @transform_3, window_bounds = array<i64: 1, 98, 64>}]} {
    %c0 = arith.constant 0 : index
    %c0_0 = arith.constant 0 : index
    %c0_1 = arith.constant 0 : index
    %0 = vector.load %arg1[%c0, %c0_0, %c0_1] : memref<1x98x576xbf16, #tpu.memory_space<vmem>>, vector<1x98x576xbf16>
    %1 = vector.shape_cast %0 : vector<1x98x576xbf16> to vector<98x576xbf16>
    %c0_2 = arith.constant 0 : index
    %c0_3 = arith.constant 0 : index
    %c0_4 = arith.constant 0 : index
    %2 = vector.load %arg2[%c0_2, %c0_3, %c0_4] : memref<1x64x576xbf16, #tpu.memory_space<vmem>>, vector<1x64x576xbf16>
    %3 = vector.shape_cast %2 : vector<1x64x576xbf16> to vector<64x576xbf16>
    %cst = arith.constant dense<0.000000e+00> : vector<98x64xf32>
    %4 = tpu.matmul %1, %3, %cst {dimension_numbers = #tpu.dot_dimension_numbers<[1], [1], [0], [0], [0, 0, 1, 0], [], []>} : vector<98x576xbf16>, vector<64x576xbf16>, vector<98x64xf32> -> vector<98x64xf32>
    %c0_5 = arith.constant 0 : index
    %c0_6 = arith.constant 0 : index
    %c0_7 = arith.constant 0 : index
    %5 = vector.load %arg3[%c0_5, %c0_6, %c0_7] : memref<1x1x64xf32, #tpu.memory_space<vmem>>, vector<1x1x64xf32>
    %6 = vector.shape_cast %5 : vector<1x1x64xf32> to vector<1x64xf32>
    %7 = vector.broadcast %6 : vector<1x64xf32> to vector<98x64xf32>
    %8 = arith.addf %4, %7 : vector<98x64xf32>
    %cst_8 = arith.constant 0.000000e+00 : f32
    %9 = vector.broadcast %cst_8 : f32 to vector<98x64xf32>
    %10 = arith.maximumf %8, %9 : vector<98x64xf32>
    %11 = arith.truncf %10 : vector<98x64xf32> to vector<98x64xbf16>
    %c0_9 = arith.constant 0 : index
    %c0_10 = arith.constant 0 : index
    %c0_11 = arith.constant 0 : index
    %12 = vector.load %arg4[%c0_9, %c0_10, %c0_11] : memref<1x98x64xbf16, #tpu.memory_space<vmem>>, vector<1x98x64xbf16>
    %13 = vector.shape_cast %12 : vector<1x98x64xbf16> to vector<98x64xbf16>
    %14 = vector.shape_cast %11 : vector<98x64xbf16> to vector<1x98x64xbf16>
    tpu.vector_store %arg4[%c0_9, %c0_10, %c0_11], %14 {strides = array<i32>} : memref<1x98x64xbf16, #tpu.memory_space<vmem>>, vector<1x98x64xbf16>,
    return
  }
  func.func @transform_0(%arg0: i32) -> (i32, i32, i32) {
    %c0_i32 = arith.constant 0 : i32
    %c0_i32_0 = arith.constant 0 : i32
    %c0_i32_1 = arith.constant 0 : i32
    return %arg0, %c0_i32, %c0_i32_0 : i32, i32, i32
  }
  func.func @transform_1(%arg0: i32) -> (i32, i32, i32) {
    %c0_i32 = arith.constant 0 : i32
    %c0_i32_0 = arith.constant 0 : i32
    %c0_i32_1 = arith.constant 0 : i32
    return %arg0, %c0_i32, %c0_i32_0 : i32, i32, i32
  }
  func.func @transform_2(%arg0: i32) -> (i32, i32, i32) {
    %c0_i32 = arith.constant 0 : i32
    %c0_i32_0 = arith.constant 0 : i32
    %c0_i32_1 = arith.constant 0 : i32
    return %arg0, %c0_i32, %c0_i32_0 : i32, i32, i32
  }
  func.func @transform_3(%arg0: i32) -> (i32, i32, i32) {
    %c0_i32 = arith.constant 0 : i32
    %c0_i32_0 = arith.constant 0 : i32
    %c0_i32_1 = arith.constant 0 : i32
    return %arg0, %c0_i32, %c0_i32_0 : i32, i32, i32
  }
}

module attributes {stable_mosaic.version = 11 : i64} {
  func.func @_tower_mm_kernel(%arg0: i32, %arg1: memref<1x2x3136xbf16, #tpu.memory_space<vmem>>, %arg2: memref<1x64x3136xbf16, #tpu.memory_space<vmem>>, %arg3: memref<1x1x64xf32, #tpu.memory_space<vmem>>, %arg4: memref<1x2x64xf32, #tpu.memory_space<vmem>>) attributes {dimension_semantics = [#tpu.dimension_semantics<parallel>], iteration_bounds = array<i64: 2>, scalar_prefetch = 0 : i64, scratch_operands = 0 : i64, tpu.core_type = #tpu.core_type<tc>, window_params = [{transform_indices = @transform_0, window_bounds = array<i64: 1, 2, 3136>}, {transform_indices = @transform_1, window_bounds = array<i64: 1, 64, 3136>}, {transform_indices = @transform_2, window_bounds = array<i64: 1, 1, 64>}, {transform_indices = @transform_3, window_bounds = array<i64: 1, 2, 64>}]} {
    %c0 = arith.constant 0 : index
    %c0_0 = arith.constant 0 : index
    %c0_1 = arith.constant 0 : index
    %0 = vector.load %arg1[%c0, %c0_0, %c0_1] : memref<1x2x3136xbf16, #tpu.memory_space<vmem>>, vector<1x2x3136xbf16>
    %1 = vector.shape_cast %0 : vector<1x2x3136xbf16> to vector<2x3136xbf16>
    %c0_2 = arith.constant 0 : index
    %c0_3 = arith.constant 0 : index
    %c0_4 = arith.constant 0 : index
    %2 = vector.load %arg2[%c0_2, %c0_3, %c0_4] : memref<1x64x3136xbf16, #tpu.memory_space<vmem>>, vector<1x64x3136xbf16>
    %3 = vector.shape_cast %2 : vector<1x64x3136xbf16> to vector<64x3136xbf16>
    %cst = arith.constant dense<0.000000e+00> : vector<2x64xf32>
    %4 = tpu.matmul %1, %3, %cst {dimension_numbers = #tpu.dot_dimension_numbers<[1], [1], [0], [0], [0, 0, 1, 0], [], []>} : vector<2x3136xbf16>, vector<64x3136xbf16>, vector<2x64xf32> -> vector<2x64xf32>
    %c0_5 = arith.constant 0 : index
    %c0_6 = arith.constant 0 : index
    %c0_7 = arith.constant 0 : index
    %5 = vector.load %arg3[%c0_5, %c0_6, %c0_7] : memref<1x1x64xf32, #tpu.memory_space<vmem>>, vector<1x1x64xf32>
    %6 = vector.shape_cast %5 : vector<1x1x64xf32> to vector<1x64xf32>
    %7 = vector.broadcast %6 : vector<1x64xf32> to vector<2x64xf32>
    %8 = arith.addf %4, %7 : vector<2x64xf32>
    %c0_8 = arith.constant 0 : index
    %c0_9 = arith.constant 0 : index
    %c0_10 = arith.constant 0 : index
    %9 = vector.load %arg4[%c0_8, %c0_9, %c0_10] : memref<1x2x64xf32, #tpu.memory_space<vmem>>, vector<1x2x64xf32>
    %10 = vector.shape_cast %9 : vector<1x2x64xf32> to vector<2x64xf32>
    %11 = vector.shape_cast %8 : vector<2x64xf32> to vector<1x2x64xf32>
    tpu.vector_store %arg4[%c0_8, %c0_9, %c0_10], %11 {strides = array<i32>} : memref<1x2x64xf32, #tpu.memory_space<vmem>>, vector<1x2x64xf32>,
    return
  }
  func.func @transform_0(%arg0: i32) -> (i32, i32, i32) {
    %c0_i32 = arith.constant 0 : i32
    %c0_i32_0 = arith.constant 0 : i32
    %c0_i32_1 = arith.constant 0 : i32
    return %arg0, %c0_i32, %c0_i32_0 : i32, i32, i32
  }
  func.func @transform_1(%arg0: i32) -> (i32, i32, i32) {
    %c0_i32 = arith.constant 0 : i32
    %c0_i32_0 = arith.constant 0 : i32
    %c0_i32_1 = arith.constant 0 : i32
    return %arg0, %c0_i32, %c0_i32_0 : i32, i32, i32
  }
  func.func @transform_2(%arg0: i32) -> (i32, i32, i32) {
    %c0_i32 = arith.constant 0 : i32
    %c0_i32_0 = arith.constant 0 : i32
    %c0_i32_1 = arith.constant 0 : i32
    return %arg0, %c0_i32, %c0_i32_0 : i32, i32, i32
  }
  func.func @transform_3(%arg0: i32) -> (i32, i32, i32) {
    %c0_i32 = arith.constant 0 : i32
    %c0_i32_0 = arith.constant 0 : i32
    %c0_i32_1 = arith.constant 0 : i32
    return %arg0, %c0_i32, %c0_i32_0 : i32, i32, i32
  }
}

</mosaic_0001>

<llo_original>
// kernel: rnd_forward.4
$region0: #{rnd_forward.4}
  #allocation0 [shape = 'u32[]', space=smem, size = 0x4, offset = 0x4, fixed_abs, tag = 'smem constant byte address 0x4 - core index']
  #allocation1 [shape = 'u32[144,128]{1,0:T(1,128)}', space=vmem, size = 0x12000, scoped, tag = 'internal scratch']
  %s0 = inlined_call_operand.vmem [shape: bf16[800,256], index: 0, kind: input, shape index: {}]
  %s1 = inlined_call_operand.vmem [shape: bf16[64,256], index: 1, kind: input, shape index: {}]
  %s2 = inlined_call_operand.vmem [shape: f32[1,64], index: 2, kind: input, shape index: {}]
  %s3 = inlined_call_operand.vmem [shape: bf16[800,64], index: 3, kind: output, shape index: {}]
  %s4 = sld [smem:[#allocation0]]
  $region45: #{rnd_forward.4} parent=0
    _
  %s6 = ssub.s32 1, %s4
  %s7 = scalar_select 0, %s6, %s4
  loop: start=0, step=1, limit=4
  $region2: #{rnd_forward.4} parent=0 // loop_pre_header
    _
  $region3: #{rnd_forward.4} parent=0 // loop_header
    %s9 = sphi 0, %s13
    %p10 = scmp.ge.s32.totalorder %s9, 4
    %s19 = sphi 0, %s21
    %s22 = sphi 0, %s19
    %s23 = sphi 0, %s22
    %s39 = sphi 0, %s23
    %s43 = sphi 0, %s43
    %s45 = sphi 0, %s43
    %s46 = sphi 0, %s45
    %s60 = sphi 0, %s46
    %s64 = sphi 0, %s64
    %s66 = sphi 0, %s64
    %s67 = sphi 0, %s66
    %s81 = sphi 0, %s67
    %s87 = sphi 0, %s89
    %s90 = sphi 0, %s87
    %s91 = sphi 0, %s90
    %s107 = sphi 0, %s91
  $region4: #{rnd_forward.4} parent=0 // loop_header_branch
    %12 = sbr.rel (%p10) target = $region8
  $region5: #{rnd_forward.4} parent=0 // loop_body
    %s14 = ssub.s32 %s9, 1
    %s15 = ssub.s32 %s9, 2
    %s16 = sadd.s32 %s9, 1
    %s17 = ssub.s32 %s9, %s16
    %p18 = scmp.eq.s32.totalorder %s17, 0
    %s20 = sadd.s32 %s19, 1
    %s21 = scalar_select %p18, %s19, %s20
    %p24 = pneg %p18
    %p25 = scmp.eq.s32.totalorder %s9, 1
    %p26 = por %p24, %p25
    %p27 = scmp.ne.s32.totalorder %s19, %s22
    %p28 = scmp.eq.s32.totalorder %s9, 0
    %p29 = por %p27, %p28
    %p30 = scmp.ne.s32.totalorder %s19, %s22
    %p31 = scmp.eq.s32.totalorder %s14, 1
    %p32 = por %p30, %p31
    %p33 = scmp.ne.s32.totalorder %s22, %s23
    %p34 = scmp.eq.s32.totalorder %s14, 0
    %p35 = por %p33, %p34
    %p36 = scmp.ne.s32.totalorder %s22, %s23
    %p37 = scmp.eq.s32.totalorder %s15, 1
    %p38 = por %p36, %p37
    %p40 = scmp.ne.s32.totalorder %s23, %s39
    %p41 = scmp.eq.s32.totalorder %s15, 0
    %p42 = por %p40, %p41
    %s44 = sadd.s32 %s43, 1
    %p47 = scmp.eq.s32.totalorder %s9, 1
    %p48 = scmp.ne.s32.totalorder %s43, %s45
    %p49 = scmp.eq.s32.totalorder %s9, 0
    %p50 = por %p48, %p49
    %p51 = scmp.ne.s32.totalorder %s43, %s45
    %p52 = scmp.eq.s32.totalorder %s14, 1
    %p53 = por %p51, %p52
    %p54 = scmp.ne.s32.totalorder %s45, %s46
    %p55 = scmp.eq.s32.totalorder %s14, 0
    %p56 = por %p54, %p55
    %p57 = scmp.ne.s32.totalorder %s45, %s46
    %p58 = scmp.eq.s32.totalorder %s15, 1
    %p59 = por %p57, %p58
    %p61 = scmp.ne.s32.totalorder %s46, %s60
    %p62 = scmp.eq.s32.totalorder %s15, 0
    %p63 = por %p61, %p62
    %s65 = sadd.s32 %s64, 1
    %p68 = scmp.eq.s32.totalorder %s9, 1
    %p69 = scmp.ne.s32.totalorder %s64, %s66
    %p70 = scmp.eq.s32.totalorder %s9, 0
    %p71 = por %p69, %p70
    %p72 = scmp.ne.s32.totalorder %s64, %s66
    %p73 = scmp.eq.s32.totalorder %s14, 1
    %p74 = por %p72, %p73
    %p75 = scmp.ne.s32.totalorder %s66, %s67
    %p76 = scmp.eq.s32.totalorder %s14, 0
    %p77 = por %p75, %p76
    %p78 = scmp.ne.s32.totalorder %s66, %s67
    %p79 = scmp.eq.s32.totalorder %s15, 1
    %p80 = por %p78, %p79
    %p82 = scmp.ne.s32.totalorder %s67, %s81
    %p83 = scmp.eq.s32.totalorder %s15, 0
    %p84 = por %p82, %p83
    %s85 = ssub.s32 %s9, %s16
    %p86 = scmp.eq.s32.totalorder %s85, 0
    %s88 = sadd.s32 %s87, 1
    %s89 = scalar_select %p86, %s87, %s88
    %p92 = pneg %p86
    %p93 = scmp.eq.s32.totalorder %s9, 1
    %p94 = por %p92, %p93
    %p95 = scmp.ne.s32.totalorder %s87, %s90
    %p96 = scmp.eq.s32.totalorder %s9, 0
    %p97 = por %p95, %p96
    %p98 = scmp.ne.s32.totalorder %s87, %s90
    %p99 = scmp.eq.s32.totalorder %s14, 1
    %p100 = por %p98, %p99
    %p101 = scmp.ne.s32.totalorder %s90, %s91
    %p102 = scmp.eq.s32.totalorder %s14, 0
    %p103 = por %p101, %p102
    %p104 = scmp.ne.s32.totalorder %s90, %s91
    %p105 = scmp.eq.s32.totalorder %s15, 1
    %p106 = por %p104, %p105
    %p108 = scmp.ne.s32.totalorder %s91, %s107
    %p109 = scmp.eq.s32.totalorder %s15, 0
    %p110 = por %p108, %p109
    %p111 = scmp.le.s32.totalorder 1, %s9
    %p112 = scmp.lt.s32.totalorder %s9, 3
    %p113 = pnand %p111, %p112
    %p114 = pneg %p113
    // Predicated region
    $region9: #{rnd_forward.4} parent=5 // pred_check
      _
    $region10: #{rnd_forward.4} parent=5 // pred_check_branch
      %116 = sbr.rel (%p113) target = $region12
    $region11: #{rnd_forward.4} parent=5 // pred_region
      %s117 = ssub.s32 %s9, 1
      // Predicated region
      $region13: #{rnd_forward.4} parent=11 // pred_check
        %p118 = pneg %p56
      $region14: #{rnd_forward.4} parent=11 // pred_check_branch
        %120 = sbr.rel (%p118) target = $region16
      $region15: #{rnd_forward.4} parent=11 // pred_region
        _
      $region16: #{rnd_forward.4} parent=11 // pred_fallthru
        _
      // Predicated region
      $region17: #{rnd_forward.4} parent=11 // pred_check
        %p121 = pneg %p77
      $region18: #{rnd_forward.4} parent=11 // pred_check_branch
        %123 = sbr.rel (%p121) target = $region20
      $region19: #{rnd_forward.4} parent=11 // pred_region
        _
      $region20: #{rnd_forward.4} parent=11 // pred_fallthru
        _
    $region12: #{rnd_forward.4} parent=5 // pred_fallthru
      _
    %p124 = scmp.lt.s32.totalorder %s9, 2
    // Predicated region
    $region21: #{rnd_forward.4} parent=5 // pred_check
      %p125 = pneg %p124
    $region22: #{rnd_forward.4} parent=5 // pred_check_branch
      %127 = sbr.rel (%p125) target = $region24
    $region23: #{rnd_forward.4} parent=5 // pred_region
      // Predicated region
      $region25: #{rnd_forward.4} parent=23 // pred_check
        %p128 = pneg %p29
      $region26: #{rnd_forward.4} parent=23 // pred_check_branch
        %130 = sbr.rel (%p128) target = $region28
      $region27: #{rnd_forward.4} parent=23 // pred_region
        %s131 = smul.u32 50, %s9
        %p132 = scmp.lt.s32.totalorder %s131, 99
        %s133 = scalar_select %p132, %s131, 99
        %s134 = smul.addr %s133, 2
        %s135 = smul.addr %s134, 4
        %s136 = scalar_lea.vmem %s0, %s135
        %s137 = smul.u32 50, %s9
      $region28: #{rnd_forward.4} parent=23 // pred_fallthru
        _
    $region24: #{rnd_forward.4} parent=5 // pred_fallthru
      _
    %p138 = scmp.le.s32.totalorder 1, %s9
    %p139 = scmp.lt.s32.totalorder %s9, 3
    %p140 = pnand %p138, %p139
    %p141 = pneg %p140
    // Predicated region
    $region29: #{rnd_forward.4} parent=5 // pred_check
      _
    $region30: #{rnd_forward.4} parent=5 // pred_check_branch
      %143 = sbr.rel (%p140) target = $region32
    $region31: #{rnd_forward.4} parent=5 // pred_region
      %s144 = ssub.s32 %s9, 1
      %s145 = smul.u32 50, %s14
      %p146 = scmp.lt.s32.totalorder %s145, 99
      %s147 = scalar_select %p146, %s145, 99
      %s148 = smul.addr %s147, 2
      %s149 = smul.addr %s148, 4
      %s150 = scalar_lea.vmem %s0, %s149
      %p151 = pneg %p35
      %p152 = pneg %p32
      %p153 = pneg %p56
      %p154 = pneg %p53
      %p155 = pneg %p77
      %p156 = pneg %p74
      %p157 = pneg %p103
      %p158 = pneg %p100
      %s159 = smul.u32 50, %s14
      %p160 = scmp.lt.s32.totalorder %s159, 99
      %s161 = scalar_select %p160, %s159, 99
      %s162 = smul.addr %s161, 4
      %s163 = scalar_lea.vmem %s3, %s162
      %s164 = smul.u32 50, %s14
      %p165 = scmp.lt.s32.totalorder %s164, 99
      %s166 = scalar_select %p165, %s164, 99
      %s167 = smul.addr %s166, 2
      %s168 = smul.addr %s167, 4
      %s169 = scalar_lea.vmem %s0, %s168
      %s170 = smul.u32 50, %s14
      %s171 = smul.u32 50, %s14
      %p172 = scmp.lt.s32.totalorder %s171, 99
      %s173 = scalar_select %p172, %s171, 99
      %s174 = smul.addr %s173, 4
      %s175 = scalar_lea.vmem %s3, %s174
      %s176 = smul.u32 50, %s14
      %v178 = vld [vmem:[%s169] sm:$0xff]
      %v179 = vld [vmem:[%s169 + $0x8] sm:$0xff]
      %v180 = vld [vmem:[%s169 + $0x10] sm:$0xff]
      %v181 = vld [vmem:[%s169 + $0x18] sm:$0xff]
      %v182 = vld [vmem:[%s169 + $0x20] sm:$0xff]
      %v183 = vld [vmem:[%s169 + $0x28] sm:$0xff]
      %v184 = vld [vmem:[%s169 + $0x30] sm:$0xff]
      %v185 = vld [vmem:[%s169 + $0x38] sm:$0xff]
      %v186 = vld [vmem:[%s169 + $0x40] sm:$0xff]
      %v187 = vld [vmem:[%s169 + $0x48] sm:$0xff]
      %v188 = vld [vmem:[%s169 + $0x50] sm:$0xff]
      %v189 = vld [vmem:[%s169 + $0x58] sm:$0xff]
      %v190 = vld [vmem:[%s169 + $0x60] sm:$0xff]
      %v191 = vld [vmem:[%s169 + $0x68] sm:$0xff]
      %v192 = vld [vmem:[%s169 + $0x70] sm:$0xff]
      %v193 = vld [vmem:[%s169 + $0x78] sm:$0xff]
      %v194 = vld [vmem:[%s169 + $0x80] sm:$0xff]
      %v195 = vld [vmem:[%s169 + $0x88] sm:$0xff]
      %v196 = vld [vmem:[%s169 + $0x90] sm:$0xff]
      %v197 = vld [vmem:[%s169 + $0x98] sm:$0xff]
      %v198 = vld [vmem:[%s169 + $0xa0] sm:$0xff]
      %v199 = vld [vmem:[%s169 + $0xa8] sm:$0xff]
      %v200 = vld [vmem:[%s169 + $0xb0] sm:$0xff]
      %v201 = vld [vmem:[%s169 + $0xb8] sm:$0xff]
      %v202 = vld [vmem:[%s169 + $0xc0] sm:$0xff]
      %v203 = vld [vmem:[%s169 + $0xc8] sm:$0xff]
      %v204 = vld [vmem:[%s169 + $0xd0] sm:$0xff]
      %v205 = vld [vmem:[%s169 + $0xd8] sm:$0xff]
      %v206 = vld [vmem:[%s169 + $0xe0] sm:$0xff]
      %v207 = vld [vmem:[%s169 + $0xe8] sm:$0xff]
      %v208 = vld [vmem:[%s169 + $0xf0] sm:$0xff]
      %v209 = vld [vmem:[%s169 + $0xf8] sm:$0xff]
      %v210 = vld [vmem:[%s169 + $0x100] sm:$0xff]
      %v211 = vld [vmem:[%s169 + $0x108] sm:$0xff]
      %v212 = vld [vmem:[%s169 + $0x110] sm:$0xff]
      %v213 = vld [vmem:[%s169 + $0x118] sm:$0xff]
      %v214 = vld [vmem:[%s169 + $0x120] sm:$0xff]
      %v215 = vld [vmem:[%s169 + $0x128] sm:$0xff]
      %v216 = vld [vmem:[%s169 + $0x130] sm:$0xff]
      %v217 = vld [vmem:[%s169 + $0x138] sm:$0xff]
      %v218 = vld [vmem:[%s169 + $0x140] sm:$0xff]
      %v219 = vld [vmem:[%s169 + $0x148] sm:$0xff]
      %v220 = vld [vmem:[%s169 + $0x150] sm:$0xff]
      %v221 = vld [vmem:[%s169 + $0x158] sm:$0xff]
      %v222 = vld [vmem:[%s169 + $0x160] sm:$0xff]
      %v223 = vld [vmem:[%s169 + $0x168] sm:$0xff]
      %v224 = vld [vmem:[%s169 + $0x170] sm:$0xff]
      %v225 = vld [vmem:[%s169 + $0x178] sm:$0xff]
      %v226 = vld [vmem:[%s169 + $0x180] sm:$0xff]
      %v227 = vld [vmem:[%s169 + $0x188] sm:$0xff]
      %v228 = vld [vmem:[%s1] sm:$0xff]
      %v229 = vld [vmem:[%s1 + $0x8] sm:$0xff]
      %v230 = vld [vmem:[%s1 + $0x10] sm:$0xff]
      %v231 = vld [vmem:[%s1 + $0x18] sm:$0xff]
      %v232 = vld [vmem:[%s1 + $0x20] sm:$0xff]
      %v233 = vld [vmem:[%s1 + $0x28] sm:$0xff]
      %v234 = vld [vmem:[%s1 + $0x30] sm:$0xff]
      %v235 = vld [vmem:[%s1 + $0x38] sm:$0xff]
      %v236 = vld [vmem:[%s2] sm:$0x1]
      %v238 = vlaneseq
      %v239 = vshrl.u32 %v238, 7
      %v240 = vsub.s32 0, %v239
      %v241 = vrot.slane %v236, %v240
      %v293 = vunpack.c.l.b16 %v178
      %v294 = vunpack.c.h.b16 %v178
      %v295 = vunpack.c.l.b16 %v179
      %v296 = vunpack.c.h.b16 %v179
      %v297 = vunpack.c.l.b16 %v180
      %v298 = vunpack.c.h.b16 %v180
      %v299 = vunpack.c.l.b16 %v181
      %v300 = vunpack.c.h.b16 %v181
      %v301 = vunpack.c.l.b16 %v182
      %v302 = vunpack.c.h.b16 %v182
      %v303 = vunpack.c.l.b16 %v183
      %v304 = vunpack.c.h.b16 %v183
      %v305 = vunpack.c.l.b16 %v184
      %v306 = vunpack.c.h.b16 %v184
      %v307 = vunpack.c.l.b16 %v185
      %v308 = vunpack.c.h.b16 %v185
      %v309 = vunpack.c.l.b16 %v186
      %v310 = vunpack.c.h.b16 %v186
      %v311 = vunpack.c.l.b16 %v187
      %v312 = vunpack.c.h.b16 %v187
      %v313 = vunpack.c.l.b16 %v188
      %v314 = vunpack.c.h.b16 %v188
      %v315 = vunpack.c.l.b16 %v189
      %v316 = vunpack.c.h.b16 %v189
      %v317 = vunpack.c.l.b16 %v190
      %v318 = vunpack.c.h.b16 %v190
      %v319 = vunpack.c.l.b16 %v191
      %v320 = vunpack.c.h.b16 %v191
      %v321 = vunpack.c.l.b16 %v192
      %v322 = vunpack.c.h.b16 %v192
      %v323 = vunpack.c.l.b16 %v193
      %v324 = vunpack.c.h.b16 %v193
      %v325 = vunpack.c.l.b16 %v194
      %v326 = vunpack.c.h.b16 %v194
      %v327 = vunpack.c.l.b16 %v195
      %v328 = vunpack.c.h.b16 %v195
      %v329 = vunpack.c.l.b16 %v196
      %v330 = vunpack.c.h.b16 %v196
      %v331 = vunpack.c.l.b16 %v197
      %v332 = vunpack.c.h.b16 %v197
      %v333 = vunpack.c.l.b16 %v198
      %v334 = vunpack.c.h.b16 %v198
      %v335 = vunpack.c.l.b16 %v199
      %v336 = vunpack.c.h.b16 %v199
      %v337 = vunpack.c.l.b16 %v200
      %v338 = vunpack.c.h.b16 %v200
      %v339 = vunpack.c.l.b16 %v201
      %v340 = vunpack.c.h.b16 %v201
      %v341 = vunpack.c.l.b16 %v202
      %v342 = vunpack.c.h.b16 %v202
      %v343 = vunpack.c.l.b16 %v203
      %v344 = vunpack.c.h.b16 %v203
      %v345 = vunpack.c.l.b16 %v204
      %v346 = vunpack.c.h.b16 %v204
      %v347 = vunpack.c.l.b16 %v205
      %v348 = vunpack.c.h.b16 %v205
      %v349 = vunpack.c.l.b16 %v206
      %v350 = vunpack.c.h.b16 %v206
      %v351 = vunpack.c.l.b16 %v207
      %v352 = vunpack.c.h.b16 %v207
      %v353 = vunpack.c.l.b16 %v208
      %v354 = vunpack.c.h.b16 %v208
      %v355 = vunpack.c.l.b16 %v209
      %v356 = vunpack.c.h.b16 %v209
      %v357 = vunpack.c.l.b16 %v210
      %v358 = vunpack.c.h.b16 %v210
      %v359 = vunpack.c.l.b16 %v211
      %v360 = vunpack.c.h.b16 %v211
      %v361 = vunpack.c.l.b16 %v212
      %v362 = vunpack.c.h.b16 %v212
      %v363 = vunpack.c.l.b16 %v213
      %v364 = vunpack.c.h.b16 %v213
      %v365 = vunpack.c.l.b16 %v214
      %v366 = vunpack.c.h.b16 %v214
      %v367 = vunpack.c.l.b16 %v215
      %v368 = vunpack.c.h.b16 %v215
      %v369 = vunpack.c.l.b16 %v216
      %v370 = vunpack.c.h.b16 %v216
      %v371 = vunpack.c.l.b16 %v217
      %v372 = vunpack.c.h.b16 %v217
      %v373 = vunpack.c.l.b16 %v218
      %v374 = vunpack.c.h.b16 %v218
      %v375 = vunpack.c.l.b16 %v219
      %v376 = vunpack.c.h.b16 %v219
      %v377 = vunpack.c.l.b16 %v220
      %v378 = vunpack.c.h.b16 %v220
      %v379 = vunpack.c.l.b16 %v221
      %v380 = vunpack.c.h.b16 %v221
      %v381 = vunpack.c.l.b16 %v222
      %v382 = vunpack.c.h.b16 %v222
      %v383 = vunpack.c.l.b16 %v223
      %v384 = vunpack.c.h.b16 %v223
      %v385 = vunpack.c.l.b16 %v224
      %v386 = vunpack.c.h.b16 %v224
      %v387 = vunpack.c.l.b16 %v225
      %v388 = vunpack.c.h.b16 %v225
      %v389 = vunpack.c.l.b16 %v226
      %v390 = vunpack.c.h.b16 %v226
      %v391 = vunpack.c.l.b16 %v227
      %v392 = vunpack.c.h.b16 %v227
      %v393 = vpack.c.b16 %v295, %v293
      %v394 = vpack.c.b16 %v296, %v294
      %v395 = vpack.c.b16 %v299, %v297
      %v396 = vpack.c.b16 %v300, %v298
      %v397 = vpack.c.b16 %v303, %v301
      %v398 = vpack.c.b16 %v304, %v302
      %v399 = vpack.c.b16 %v307, %v305
      %v400 = vpack.c.b16 %v308, %v306
      %v401 = vpack.c.b16 %v311, %v309
      %v402 = vpack.c.b16 %v312, %v310
      %v403 = vpack.c.b16 %v315, %v313
      %v404 = vpack.c.b16 %v316, %v314
      %v405 = vpack.c.b16 %v319, %v317
      %v406 = vpack.c.b16 %v320, %v318
      %v407 = vpack.c.b16 %v323, %v321
      %v408 = vpack.c.b16 %v324, %v322
      %v409 = vpack.c.b16 %v327, %v325
      %v410 = vpack.c.b16 %v328, %v326
      %v411 = vpack.c.b16 %v331, %v329
      %v412 = vpack.c.b16 %v332, %v330
      %v413 = vpack.c.b16 %v335, %v333
      %v414 = vpack.c.b16 %v336, %v334
      %v415 = vpack.c.b16 %v339, %v337
      %v416 = vpack.c.b16 %v340, %v338
      %v417 = vpack.c.b16 %v343, %v341
      %v418 = vpack.c.b16 %v344, %v342
      %v419 = vpack.c.b16 %v347, %v345
      %v420 = vpack.c.b16 %v348, %v346
      %v421 = vpack.c.b16 %v351, %v349
      %v422 = vpack.c.b16 %v352, %v350
      %v423 = vpack.c.b16 %v355, %v353
      %v424 = vpack.c.b16 %v356, %v354
      %v425 = vpack.c.b16 %v359, %v357
      %v426 = vpack.c.b16 %v360, %v358
      %v427 = vpack.c.b16 %v363, %v361
      %v428 = vpack.c.b16 %v364, %v362
      %v429 = vpack.c.b16 %v367, %v365
      %v430 = vpack.c.b16 %v368, %v366
      %v431 = vpack.c.b16 %v371, %v369
      %v432 = vpack.c.b16 %v372, %v370
      %v433 = vpack.c.b16 %v375, %v373
      %v434 = vpack.c.b16 %v376, %v374
      %v435 = vpack.c.b16 %v379, %v377
      %v436 = vpack.c.b16 %v380, %v378
      %v437 = vpack.c.b16 %v383, %v381
      %v438 = vpack.c.b16 %v384, %v382
      %v439 = vpack.c.b16 %v387, %v385
      %v440 = vpack.c.b16 %v388, %v386
      %v441 = vpack.c.b16 %v391, %v389
      %v442 = vpack.c.b16 %v392, %v390
      %v501 = vunpack.c.l.b16 %v228
      %v502 = vunpack.c.h.b16 %v228
      %v503 = vunpack.c.l.b16 %v229
      %v504 = vunpack.c.h.b16 %v229
      %v505 = vunpack.c.l.b16 %v230
      %v506 = vunpack.c.h.b16 %v230
      %v507 = vunpack.c.l.b16 %v231
      %v508 = vunpack.c.h.b16 %v231
      %v509 = vunpack.c.l.b16 %v232
      %v510 = vunpack.c.h.b16 %v232
      %v511 = vunpack.c.l.b16 %v233
      %v512 = vunpack.c.h.b16 %v233
      %v513 = vunpack.c.l.b16 %v234
      %v514 = vunpack.c.h.b16 %v234
      %v515 = vunpack.c.l.b16 %v235
      %v516 = vunpack.c.h.b16 %v235
      %v517 = vpack.c.b16 %v503, %v501
      %v518 = vpack.c.b16 %v504, %v502
      %v519 = vpack.c.b16 %v507, %v505
      %v520 = vpack.c.b16 %v508, %v506
      %v521 = vpack.c.b16 %v511, %v509
      %v522 = vpack.c.b16 %v512, %v510
      %v523 = vpack.c.b16 %v515, %v513
      %v524 = vpack.c.b16 %v516, %v514
      %533 = vmatprep.subr.bf16.mxu0 %v518
      %534 = vmatpush1.bf16.xpose.msra.mxu0 %v517
      %535 = vmatprep.subr.bf16.mxu0 %v520
      %536 = vmatpush1.bf16.xpose.msra.mxu0 %v519
      %537 = vmatprep.subr.bf16.mxu0 %v522
      %538 = vmatpush1.bf16.xpose.msra.mxu0 %v521
      %539 = vmatprep.subr.bf16.mxu0 %v524
      %540 = vmatpush1.bf16.xpose.msra.mxu0 %v523
      %541 = vmatprep.subr.bf16.mxu0 0
      %542 = vmatpush1.bf16.xpose.msra.mxu0 0
      %543 = vmatprep.subr.bf16.mxu0 0
      %544 = vmatpush1.bf16.xpose.msra.mxu0 0
      %545 = vmatprep.subr.bf16.mxu0 0
      %546 = vmatpush1.bf16.xpose.msra.mxu0 0
      %547 = vmatprep.subr.bf16.mxu0 0
      %548 = vmatpush1.bf16.xpose.msra.mxu0 0
      %549 = vmatprep.subr.bf16.mxu0 0
      %550 = vmatpush1.bf16.xpose.msra.mxu0 0
      %551 = vmatprep.subr.bf16.mxu0 0
      %552 = vmatpush1.bf16.xpose.msra.mxu0 0
      %553 = vmatprep.subr.bf16.mxu0 0
      %554 = vmatpush1.bf16.xpose.msra.mxu0 0
      %555 = vmatprep.subr.bf16.mxu0 0
      %556 = vmatpush1.bf16.xpose.msra.mxu0 0
      %557 = vmatprep.subr.bf16.mxu0 0
      %558 = vmatpush1.bf16.xpose.msra.mxu0 0
      %559 = vmatprep.subr.bf16.mxu0 0
      %560 = vmatpush1.bf16.xpose.msra.mxu0 0
      %561 = vmatprep.subr.bf16.mxu0 0
      %562 = vmatpush1.bf16.xpose.msra.mxu0 0
      %563 = vmatprep.subr.bf16.mxu0 0
      %564 = vmatpush1.bf16.xpose.msra.mxu0 0
      %565 = vmatprep.mubr.bf16.mxu0 %v394
      %566 = vmatmul.mubr.bf16.gmra.mrb[0].mxu0 %v393
      %v567 = vpop.f32.mrb[0].mxu0
      %v568 = vadd.f32 %v241, %v567
      %v569 = vpop.f32.mrb[0].mxu0
      %v570 = vpop.f32.mrb[0].mxu0
      %v571 = vadd.f32 %v241, %v570
      %v572 = vpop.f32.mrb[0].mxu0
      %573 = vmatprep.mubr.bf16.mxu0 %v396
      %574 = vmatmul.mubr.bf16.gmra.mrb[0].mxu0 %v395
      %v575 = vpop.f32.mrb[0].mxu0
      %v576 = vadd.f32 %v241, %v575
      %v577 = vpop.f32.mrb[0].mxu0
      %v578 = vpop.f32.mrb[0].mxu0
      %v579 = vadd.f32 %v241, %v578
      %v580 = vpop.f32.mrb[0].mxu0
      %581 = vmatprep.mubr.bf16.mxu0 %v398
      %582 = vmatmul.mubr.bf16.gmra.mrb[0].mxu0 %v397
      %v583 = vpop.f32.mrb[0].mxu0
      %v584 = vadd.f32 %v241, %v583
      %v585 = vpop.f32.mrb[0].mxu0
      %v586 = vpop.f32.mrb[0].mxu0
      %v587 = vadd.f32 %v241, %v586
      %v588 = vpop.f32.mrb[0].mxu0
      %589 = vmatprep.mubr.bf16.mxu0 %v400
      %590 = vmatmul.mubr.bf16.gmra.mrb[0].mxu0 %v399
      %v591 = vpop.f32.mrb[0].mxu0
      %v592 = vadd.f32 %v241, %v591
      %v593 = vpop.f32.mrb[0].mxu0
      %v594 = vpop.f32.mrb[0].mxu0
      %v595 = vadd.f32 %v241, %v594
      %v596 = vpop.f32.mrb[0].mxu0
      %597 = vmatprep.mubr.bf16.mxu0 %v402
      %598 = vmatmul.mubr.bf16.gmra.mrb[0].mxu0 %v401
      %v599 = vpop.f32.mrb[0].mxu0
      %v600 = vadd.f32 %v241, %v599
      %v601 = vpop.f32.mrb[0].mxu0
      %v602 = vpop.f32.mrb[0].mxu0
      %v603 = vadd.f32 %v241, %v602
      %v604 = vpop.f32.mrb[0].mxu0
      %605 = vmatprep.mubr.bf16.mxu0 %v404
      %606 = vmatmul.mubr.bf16.gmra.mrb[0].mxu0 %v403
      %v607 = vpop.f32.mrb[0].mxu0
      %v608 = vadd.f32 %v241, %v607
      %v609 = vpop.f32.mrb[0].mxu0
      %v610 = vpop.f32.mrb[0].mxu0
      %v611 = vadd.f32 %v241, %v610
      %v612 = vpop.f32.mrb[0].mxu0
      %613 = vmatprep.mubr.bf16.mxu0 %v406
      %614 = vmatmul.mubr.bf16.gmra.mrb[0].mxu0 %v405
      %v615 = vpop.f32.mrb[0].mxu0
      %v616 = vadd.f32 %v241, %v615
      %v617 = vpop.f32.mrb[0].mxu0
      %v618 = vpop.f32.mrb[0].mxu0
      %v619 = vadd.f32 %v241, %v618
      %v620 = vpop.f32.mrb[0].mxu0
      %621 = vmatprep.mubr.bf16.mxu0 %v408
      %622 = vmatmul.mubr.bf16.gmra.mrb[0].mxu0 %v407
      %v623 = vpop.f32.mrb[0].mxu0
      %v624 = vadd.f32 %v241, %v623
      %v625 = vpop.f32.mrb[0].mxu0
      %v626 = vpop.f32.mrb[0].mxu0
      %v627 = vadd.f32 %v241, %v626
      %v628 = vpop.f32.mrb[0].mxu0
      %629 = vmatprep.mubr.bf16.mxu0 %v410
      %630 = vmatmul.mubr.bf16.gmra.mrb[0].mxu0 %v409
      %v631 = vpop.f32.mrb[0].mxu0
      %v632 = vadd.f32 %v241, %v631
      %v633 = vpop.f32.mrb[0].mxu0
      %v634 = vpop.f32.mrb[0].mxu0
      %v635 = vadd.f32 %v241, %v634
      %v636 = vpop.f32.mrb[0].mxu0
      %637 = vmatprep.mubr.bf16.mxu0 %v412
      %638 = vmatmul.mubr.bf16.gmra.mrb[0].mxu0 %v411
      %v639 = vpop.f32.mrb[0].mxu0
      %v640 = vadd.f32 %v241, %v639
      %v641 = vpop.f32.mrb[0].mxu0
      %v642 = vpop.f32.mrb[0].mxu0
      %v643 = vadd.f32 %v241, %v642
      %v644 = vpop.f32.mrb[0].mxu0
      %645 = vmatprep.mubr.bf16.mxu0 %v414
      %646 = vmatmul.mubr.bf16.gmra.mrb[0].mxu0 %v413
      %v647 = vpop.f32.mrb[0].mxu0
      %v648 = vadd.f32 %v241, %v647
      %v649 = vpop.f32.mrb[0].mxu0
      %v650 = vpop.f32.mrb[0].mxu0
      %v651 = vadd.f32 %v241, %v650
      %v652 = vpop.f32.mrb[0].mxu0
      %653 = vmatprep.mubr.bf16.mxu0 %v416
      %654 = vmatmul.mubr.bf16.gmra.mrb[0].mxu0 %v415
      %v655 = vpop.f32.mrb[0].mxu0
      %v656 = vadd.f32 %v241, %v655
      %v657 = vpop.f32.mrb[0].mxu0
      %v658 = vpop.f32.mrb[0].mxu0
      %v659 = vadd.f32 %v241, %v658
      %v660 = vpop.f32.mrb[0].mxu0
      %661 = vmatprep.mubr.bf16.mxu0 %v418
      %662 = vmatmul.mubr.bf16.gmra.mrb[0].mxu0 %v417
      %v663 = vpop.f32.mrb[0].mxu0
      %v664 = vadd.f32 %v241, %v663
      %v665 = vpop.f32.mrb[0].mxu0
      %v666 = vpop.f32.mrb[0].mxu0
      %v667 = vadd.f32 %v241, %v666
      %v668 = vpop.f32.mrb[0].mxu0
      %669 = vmatprep.mubr.bf16.mxu0 %v420
      %670 = vmatmul.mubr.bf16.gmra.mrb[0].mxu0 %v419
      %v671 = vpop.f32.mrb[0].mxu0
      %v672 = vadd.f32 %v241, %v671
      %v673 = vpop.f32.mrb[0].mxu0
      %v674 = vpop.f32.mrb[0].mxu0
      %v675 = vadd.f32 %v241, %v674
      %v676 = vpop.f32.mrb[0].mxu0
      %677 = vmatprep.mubr.bf16.mxu0 %v422
      %678 = vmatmul.mubr.bf16.gmra.mrb[0].mxu0 %v421
      %v679 = vpop.f32.mrb[0].mxu0
      %v680 = vadd.f32 %v241, %v679
      %v681 = vpop.f32.mrb[0].mxu0
      %v682 = vpop.f32.mrb[0].mxu0
      %v683 = vadd.f32 %v241, %v682
      %v684 = vpop.f32.mrb[0].mxu0
      %685 = vmatprep.mubr.bf16.mxu0 %v424
      %686 = vmatmul.mubr.bf16.gmra.mrb[0].mxu0 %v423
      %v687 = vpop.f32.mrb[0].mxu0
      %v688 = vadd.f32 %v241, %v687
      %v689 = vpop.f32.mrb[0].mxu0
      %v690 = vpop.f32.mrb[0].mxu0
      %v691 = vadd.f32 %v241, %v690
      %v692 = vpop.f32.mrb[0].mxu0
      %693 = vmatprep.mubr.bf16.mxu0 %v426
      %694 = vmatmul.mubr.bf16.gmra.mrb[0].mxu0 %v425
      %v695 = vpop.f32.mrb[0].mxu0
      %v696 = vadd.f32 %v241, %v695
      %v697 = vpop.f32.mrb[0].mxu0
      %v698 = vpop.f32.mrb[0].mxu0
      %v699 = vadd.f32 %v241, %v698
      %v700 = vpop.f32.mrb[0].mxu0
      %701 = vmatprep.mubr.bf16.mxu0 %v428
      %702 = vmatmul.mubr.bf16.gmra.mrb[0].mxu0 %v427
      %v703 = vpop.f32.mrb[0].mxu0
      %v704 = vadd.f32 %v241, %v703
      %v705 = vpop.f32.mrb[0].mxu0
      %v706 = vpop.f32.mrb[0].mxu0
      %v707 = vadd.f32 %v241, %v706
      %v708 = vpop.f32.mrb[0].mxu0
      %709 = vmatprep.mubr.bf16.mxu0 %v430
      %710 = vmatmul.mubr.bf16.gmra.mrb[0].mxu0 %v429
      %v711 = vpop.f32.mrb[0].mxu0
      %v712 = vadd.f32 %v241, %v711
      %v713 = vpop.f32.mrb[0].mxu0
      %v714 = vpop.f32.mrb[0].mxu0
      %v715 = vadd.f32 %v241, %v714
      %v716 = vpop.f32.mrb[0].mxu0
      %717 = vmatprep.mubr.bf16.mxu0 %v432
      %718 = vmatmul.mubr.bf16.gmra.mrb[0].mxu0 %v431
      %v719 = vpop.f32.mrb[0].mxu0
      %v720 = vadd.f32 %v241, %v719
      %v721 = vpop.f32.mrb[0].mxu0
      %v722 = vpop.f32.mrb[0].mxu0
      %v723 = vadd.f32 %v241, %v722
      %v724 = vpop.f32.mrb[0].mxu0
      %725 = vmatprep.mubr.bf16.mxu0 %v434
      %726 = vmatmul.mubr.bf16.gmra.mrb[0].mxu0 %v433
      %v727 = vpop.f32.mrb[0].mxu0
      %v728 = vadd.f32 %v241, %v727
      %v729 = vpop.f32.mrb[0].mxu0
      %v730 = vpop.f32.mrb[0].mxu0
      %v731 = vadd.f32 %v241, %v730
      %v732 = vpop.f32.mrb[0].mxu0
      %733 = vmatprep.mubr.bf16.mxu0 %v436
      %734 = vmatmul.mubr.bf16.gmra.mrb[0].mxu0 %v435
      %v735 = vpop.f32.mrb[0].mxu0
      %v736 = vadd.f32 %v241, %v735
      %v737 = vpop.f32.mrb[0].mxu0
      %v738 = vpop.f32.mrb[0].mxu0
      %v739 = vadd.f32 %v241, %v738
      %v740 = vpop.f32.mrb[0].mxu0
      %741 = vmatprep.mubr.bf16.mxu0 %v438
      %742 = vmatmul.mubr.bf16.gmra.mrb[0].mxu0 %v437
      %v743 = vpop.f32.mrb[0].mxu0
      %v744 = vadd.f32 %v241, %v743
      %v745 = vpop.f32.mrb[0].mxu0
      %v746 = vpop.f32.mrb[0].mxu0
      %v747 = vadd.f32 %v241, %v746
      %v748 = vpop.f32.mrb[0].mxu0
      %749 = vmatprep.mubr.bf16.mxu0 %v440
      %750 = vmatmul.mubr.bf16.gmra.mrb[0].mxu0 %v439
      %v751 = vpop.f32.mrb[0].mxu0
      %v752 = vadd.f32 %v241, %v751
      %v753 = vpop.f32.mrb[0].mxu0
      %v754 = vpop.f32.mrb[0].mxu0
      %v755 = vadd.f32 %v241, %v754
      %v756 = vpop.f32.mrb[0].mxu0
      %757 = vmatprep.mubr.bf16.mxu0 %v442
      %758 = vmatmul.mubr.bf16.gmra.mrb[0].mxu0 %v441
      %v759 = vpop.f32.mrb[0].mxu0
      %v760 = vadd.f32 %v241, %v759
      %v761 = vpop.f32.mrb[0].mxu0
      %v762 = vpop.f32.mrb[0].mxu0
      %v763 = vadd.f32 %v241, %v762
      %v764 = vpop.f32.mrb[0].mxu0
      %765 = vdwg.mxu0
      %v766 = vmax.f32 %v568, 0.0
      %v767 = vmax.f32 %v571, 0.0
      %v768 = vmax.f32 %v576, 0.0
      %v769 = vmax.f32 %v579, 0.0
      %v770 = vmax.f32 %v584, 0.0
      %v771 = vmax.f32 %v587, 0.0
      %v772 = vmax.f32 %v592, 0.0
      %v773 = vmax.f32 %v595, 0.0
      %v774 = vmax.f32 %v600, 0.0
      %v775 = vmax.f32 %v603, 0.0
      %v776 = vmax.f32 %v608, 0.0
      %v777 = vmax.f32 %v611, 0.0
      %v778 = vmax.f32 %v616, 0.0
      %v779 = vmax.f32 %v619, 0.0
      %v780 = vmax.f32 %v624, 0.0
      %v781 = vmax.f32 %v627, 0.0
      %v782 = vmax.f32 %v632, 0.0
      %v783 = vmax.f32 %v635, 0.0
      %v784 = vmax.f32 %v640, 0.0
      %v785 = vmax.f32 %v643, 0.0
      %v786 = vmax.f32 %v648, 0.0
      %v787 = vmax.f32 %v651, 0.0
      %v788 = vmax.f32 %v656, 0.0
      %v789 = vmax.f32 %v659, 0.0
      %v790 = vmax.f32 %v664, 0.0
      %v791 = vmax.f32 %v667, 0.0
      %v792 = vmax.f32 %v672, 0.0
      %v793 = vmax.f32 %v675, 0.0
      %v794 = vmax.f32 %v680, 0.0
      %v795 = vmax.f32 %v683, 0.0
      %v796 = vmax.f32 %v688, 0.0
      %v797 = vmax.f32 %v691, 0.0
      %v798 = vmax.f32 %v696, 0.0
      %v799 = vmax.f32 %v699, 0.0
      %v800 = vmax.f32 %v704, 0.0
      %v801 = vmax.f32 %v707, 0.0
      %v802 = vmax.f32 %v712, 0.0
      %v803 = vmax.f32 %v715, 0.0
      %v804 = vmax.f32 %v720, 0.0
      %v805 = vmax.f32 %v723, 0.0
      %v806 = vmax.f32 %v728, 0.0
      %v807 = vmax.f32 %v731, 0.0
      %v808 = vmax.f32 %v736, 0.0
      %v809 = vmax.f32 %v739, 0.0
      %v810 = vmax.f32 %v744, 0.0
      %v811 = vmax.f32 %v747, 0.0
      %v812 = vmax.f32 %v752, 0.0
      %v813 = vmax.f32 %v755, 0.0
      %v814 = vmax.f32 %v760, 0.0
      %v815 = vmax.f32 %v763, 0.0
      %v816 = vpack.c.bf16 %v767, %v766
      %v817 = vpack.c.bf16 %v769, %v768
      %v818 = vpack.c.bf16 %v771, %v770
      %v819 = vpack.c.bf16 %v773, %v772
      %v820 = vpack.c.bf16 %v775, %v774
      %v821 = vpack.c.bf16 %v777, %v776
      %v822 = vpack.c.bf16 %v779, %v778
      %v823 = vpack.c.bf16 %v781, %v780
      %v824 = vpack.c.bf16 %v783, %v782
      %v825 = vpack.c.bf16 %v785, %v784
      %v826 = vpack.c.bf16 %v787, %v786
      %v827 = vpack.c.bf16 %v789, %v788
      %v828 = vpack.c.bf16 %v791, %v790
      %v829 = vpack.c.bf16 %v793, %v792
      %v830 = vpack.c.bf16 %v795, %v794
      %v831 = vpack.c.bf16 %v797, %v796
      %v832 = vpack.c.bf16 %v799, %v798
      %v833 = vpack.c.bf16 %v801, %v800
      %v834 = vpack.c.bf16 %v803, %v802
      %v835 = vpack.c.bf16 %v805, %v804
      %v836 = vpack.c.bf16 %v807, %v806
      %v837 = vpack.c.bf16 %v809, %v808
      %v838 = vpack.c.bf16 %v811, %v810
      %v839 = vpack.c.bf16 %v813, %v812
      %v840 = vpack.c.bf16 %v815, %v814
      %v866 = vunpack.c.l.b16 %v816
      %v867 = vunpack.c.h.b16 %v816
      %v868 = vunpack.c.l.b16 %v817
      %v869 = vunpack.c.h.b16 %v817
      %v870 = vunpack.c.l.b16 %v818
      %v871 = vunpack.c.h.b16 %v818
      %v872 = vunpack.c.l.b16 %v819
      %v873 = vunpack.c.h.b16 %v819
      %v874 = vunpack.c.l.b16 %v820
      %v875 = vunpack.c.h.b16 %v820
      %v876 = vunpack.c.l.b16 %v821
      %v877 = vunpack.c.h.b16 %v821
      %v878 = vunpack.c.l.b16 %v822
      %v879 = vunpack.c.h.b16 %v822
      %v880 = vunpack.c.l.b16 %v823
      %v881 = vunpack.c.h.b16 %v823
      %v882 = vunpack.c.l.b16 %v824
      %v883 = vunpack.c.h.b16 %v824
      %v884 = vunpack.c.l.b16 %v825
      %v885 = vunpack.c.h.b16 %v825
      %v886 = vunpack.c.l.b16 %v826
      %v887 = vunpack.c.h.b16 %v826
      %v888 = vunpack.c.l.b16 %v827
      %v889 = vunpack.c.h.b16 %v827
      %v890 = vunpack.c.l.b16 %v828
      %v891 = vunpack.c.h.b16 %v828
      %v892 = vunpack.c.l.b16 %v829
      %v893 = vunpack.c.h.b16 %v829
      %v894 = vunpack.c.l.b16 %v830
      %v895 = vunpack.c.h.b16 %v830
      %v896 = vunpack.c.l.b16 %v831
      %v897 = vunpack.c.h.b16 %v831
      %v898 = vunpack.c.l.b16 %v832
      %v899 = vunpack.c.h.b16 %v832
      %v900 = vunpack.c.l.b16 %v833
      %v901 = vunpack.c.h.b16 %v833
      %v902 = vunpack.c.l.b16 %v834
      %v903 = vunpack.c.h.b16 %v834
      %v904 = vunpack.c.l.b16 %v835
      %v905 = vunpack.c.h.b16 %v835
      %v906 = vunpack.c.l.b16 %v836
      %v907 = vunpack.c.h.b16 %v836
      %v908 = vunpack.c.l.b16 %v837
      %v909 = vunpack.c.h.b16 %v837
      %v910 = vunpack.c.l.b16 %v838
      %v911 = vunpack.c.h.b16 %v838
      %v912 = vunpack.c.l.b16 %v839
      %v913 = vunpack.c.h.b16 %v839
      %v914 = vunpack.c.l.b16 %v840
      %v915 = vunpack.c.h.b16 %v840
      %v916 = vpack.c.b16 %v866, %v866
      %v917 = vpack.c.b16 %v867, %v867
      %v918 = vpack.c.b16 %v868, %v868
      %v919 = vpack.c.b16 %v869, %v869
      %v920 = vpack.c.b16 %v870, %v870
      %v921 = vpack.c.b16 %v871, %v871
      %v922 = vpack.c.b16 %v872, %v872
      %v923 = vpack.c.b16 %v873, %v873
      %v924 = vpack.c.b16 %v874, %v874
      %v925 = vpack.c.b16 %v875, %v875
      %v926 = vpack.c.b16 %v876, %v876
      %v927 = vpack.c.b16 %v877, %v877
      %v928 = vpack.c.b16 %v878, %v878
      %v929 = vpack.c.b16 %v879, %v879
      %v930 = vpack.c.b16 %v880, %v880
      %v931 = vpack.c.b16 %v881, %v881
      %v932 = vpack.c.b16 %v882, %v882
      %v933 = vpack.c.b16 %v883, %v883
      %v934 = vpack.c.b16 %v884, %v884
      %v935 = vpack.c.b16 %v885, %v885
      %v936 = vpack.c.b16 %v886, %v886
      %v937 = vpack.c.b16 %v887, %v887
      %v938 = vpack.c.b16 %v888, %v888
      %v939 = vpack.c.b16 %v889, %v889
      %v940 = vpack.c.b16 %v890, %v890
      %v941 = vpack.c.b16 %v891, %v891
      %v942 = vpack.c.b16 %v892, %v892
      %v943 = vpack.c.b16 %v893, %v893
      %v944 = vpack.c.b16 %v894, %v894
      %v945 = vpack.c.b16 %v895, %v895
      %v946 = vpack.c.b16 %v896, %v896
      %v947 = vpack.c.b16 %v897, %v897
      %v948 = vpack.c.b16 %v898, %v898
      %v949 = vpack.c.b16 %v899, %v899
      %v950 = vpack.c.b16 %v900, %v900
      %v951 = vpack.c.b16 %v901, %v901
      %v952 = vpack.c.b16 %v902, %v902
      %v953 = vpack.c.b16 %v903, %v903
      %v954 = vpack.c.b16 %v904, %v904
      %v955 = vpack.c.b16 %v905, %v905
      %v956 = vpack.c.b16 %v906, %v906
      %v957 = vpack.c.b16 %v907, %v907
      %v958 = vpack.c.b16 %v908, %v908
      %v959 = vpack.c.b16 %v909, %v909
      %v960 = vpack.c.b16 %v910, %v910
      %v961 = vpack.c.b16 %v911, %v911
      %v962 = vpack.c.b16 %v912, %v912
      %v963 = vpack.c.b16 %v913, %v913
      %v964 = vpack.c.b16 %v914, %v914
      %v965 = vpack.c.b16 %v915, %v915
      %vm1016 = vcmask 519168
      %1017 = vst.msk [vmem:[%s175] sm:$0xf] %vm1016, %v916
      %1018 = vst.msk [vmem:[%s175 + $0x4] sm:$0xf] %vm1016, %v917
      %1019 = vst.msk [vmem:[%s175 + $0x8] sm:$0xf] %vm1016, %v918
      %1020 = vst.msk [vmem:[%s175 + $0xc] sm:$0xf] %vm1016, %v919
      %1021 = vst.msk [vmem:[%s175 + $0x10] sm:$0xf] %vm1016, %v920
      %1022 = vst.msk [vmem:[%s175 + $0x14] sm:$0xf] %vm1016, %v921
      %1023 = vst.msk [vmem:[%s175 + $0x18] sm:$0xf] %vm1016, %v922
      %1024 = vst.msk [vmem:[%s175 + $0x1c] sm:$0xf] %vm1016, %v923
      %1025 = vst.msk [vmem:[%s175 + $0x20] sm:$0xf] %vm1016, %v924
      %1026 = vst.msk [vmem:[%s175 + $0x24] sm:$0xf] %vm1016, %v925
      %1027 = vst.msk [vmem:[%s175 + $0x28] sm:$0xf] %vm1016, %v926
      %1028 = vst.msk [vmem:[%s175 + $0x2c] sm:$0xf] %vm1016, %v927
      %1029 = vst.msk [vmem:[%s175 + $0x30] sm:$0xf] %vm1016, %v928
      %1030 = vst.msk [vmem:[%s175 + $0x34] sm:$0xf] %vm1016, %v929
      %1031 = vst.msk [vmem:[%s175 + $0x38] sm:$0xf] %vm1016, %v930
      %1032 = vst.msk [vmem:[%s175 + $0x3c] sm:$0xf] %vm1016, %v931
      %1033 = vst.msk [vmem:[%s175 + $0x40] sm:$0xf] %vm1016, %v932
      %1034 = vst.msk [vmem:[%s175 + $0x44] sm:$0xf] %vm1016, %v933
      %1035 = vst.msk [vmem:[%s175 + $0x48] sm:$0xf] %vm1016, %v934
      %1036 = vst.msk [vmem:[%s175 + $0x4c] sm:$0xf] %vm1016, %v935
      %1037 = vst.msk [vmem:[%s175 + $0x50] sm:$0xf] %vm1016, %v936
      %1038 = vst.msk [vmem:[%s175 + $0x54] sm:$0xf] %vm1016, %v937
      %1039 = vst.msk [vmem:[%s175 + $0x58] sm:$0xf] %vm1016, %v938
      %1040 = vst.msk [vmem:[%s175 + $0x5c] sm:$0xf] %vm1016, %v939
      %1041 = vst.msk [vmem:[%s175 + $0x60] sm:$0xf] %vm1016, %v940
      %1042 = vst.msk [vmem:[%s175 + $0x64] sm:$0xf] %vm1016, %v941
      %1043 = vst.msk [vmem:[%s175 + $0x68] sm:$0xf] %vm1016, %v942
      %1044 = vst.msk [vmem:[%s175 + $0x6c] sm:$0xf] %vm1016, %v943
      %1045 = vst.msk [vmem:[%s175 + $0x70] sm:$0xf] %vm1016, %v944
      %1046 = vst.msk [vmem:[%s175 + $0x74] sm:$0xf] %vm1016, %v945
      %1047 = vst.msk [vmem:[%s175 + $0x78] sm:$0xf] %vm1016, %v946
      %1048 = vst.msk [vmem:[%s175 + $0x7c] sm:$0xf] %vm1016, %v947
      %1049 = vst.msk [vmem:[%s175 + $0x80] sm:$0xf] %vm1016, %v948
      %1050 = vst.msk [vmem:[%s175 + $0x84] sm:$0xf] %vm1016, %v949
      %1051 = vst.msk [vmem:[%s175 + $0x88] sm:$0xf] %vm1016, %v950
      %1052 = vst.msk [vmem:[%s175 + $0x8c] sm:$0xf] %vm1016, %v951
      %1053 = vst.msk [vmem:[%s175 + $0x90] sm:$0xf] %vm1016, %v952
      %1054 = vst.msk [vmem:[%s175 + $0x94] sm:$0xf] %vm1016, %v953
      %1055 = vst.msk [vmem:[%s175 + $0x98] sm:$0xf] %vm1016, %v954
      %1056 = vst.msk [vmem:[%s175 + $0x9c] sm:$0xf] %vm1016, %v955
      %1057 = vst.msk [vmem:[%s175 + $0xa0] sm:$0xf] %vm1016, %v956
      %1058 = vst.msk [vmem:[%s175 + $0xa4] sm:$0xf] %vm1016, %v957
      %1059 = vst.msk [vmem:[%s175 + $0xa8] sm:$0xf] %vm1016, %v958
      %1060 = vst.msk [vmem:[%s175 + $0xac] sm:$0xf] %vm1016, %v959
      %1061 = vst.msk [vmem:[%s175 + $0xb0] sm:$0xf] %vm1016, %v960
      %1062 = vst.msk [vmem:[%s175 + $0xb4] sm:$0xf] %vm1016, %v961
      %1063 = vst.msk [vmem:[%s175 + $0xb8] sm:$0xf] %vm1016, %v962
      %1064 = vst.msk [vmem:[%s175 + $0xbc] sm:$0xf] %vm1016, %v963
      %1065 = vst.msk [vmem:[%s175 + $0xc0] sm:$0xf] %vm1016, %v964
      %1066 = vst.msk [vmem:[%s175 + $0xc4] sm:$0xf] %vm1016, %v965
      %s1067 = smul.u32 50, %s14
      %p1068 = scmp.lt.s32.totalorder %s1067, 99
      %s1069 = scalar_select %p1068, %s1067, 99
      %s1070 = smul.addr %s1069, 4
      %s1071 = scalar_lea.vmem %s3, %s1070
      // Predicated region
      $region33: #{rnd_forward.4} parent=31 // pred_check
        %p1072 = pneg %p100
      $region34: #{rnd_forward.4} parent=31 // pred_check_branch
        %1074 = sbr.rel (%p1072) target = $region36
      $region35: #{rnd_forward.4} parent=31 // pred_region
        %s1075 = smul.u32 50, %s14
      $region36: #{rnd_forward.4} parent=31 // pred_fallthru
        _
    $region32: #{rnd_forward.4} parent=5 // pred_fallthru
      _
    %p1076 = scmp.le.s32.totalorder 2, %s9
    // Predicated region
    $region37: #{rnd_forward.4} parent=5 // pred_check
      %p1077 = pneg %p1076
    $region38: #{rnd_forward.4} parent=5 // pred_check_branch
      %1079 = sbr.rel (%p1077) target = $region40
    $region39: #{rnd_forward.4} parent=5 // pred_region
      %s1080 = ssub.s32 %s9, 2
      // Predicated region
      $region41: #{rnd_forward.4} parent=39 // pred_check
        %p1081 = pneg %p106
      $region42: #{rnd_forward.4} parent=39 // pred_check_branch
        %1083 = sbr.rel (%p1081) target = $region44
      $region43: #{rnd_forward.4} parent=39 // pred_region
        %s1084 = smul.u32 50, %s15
        %p1085 = scmp.lt.s32.totalorder %s1084, 99
        %s1086 = scalar_select %p1085, %s1084, 99
        %s1087 = smul.addr %s1086, 4
        %s1088 = scalar_lea.vmem %s3, %s1087
      $region44: #{rnd_forward.4} parent=39 // pred_fallthru
        _
    $region40: #{rnd_forward.4} parent=5 // pred_fallthru
      _
  $region6: #{rnd_forward.4} parent=0 // loop_footer
    %s13 = sadd.s32 1, %s9
  $region7: #{rnd_forward.4} parent=0 // loop_footer_branch
    %8 = sbr.rel target = $region3
  $region8: #{rnd_forward.4} parent=0 // loop_exit
    _

// kernel: rnd_forward.5
$region0: #{rnd_forward.5}
  #allocation0 [shape = 'u32[]', space=smem, size = 0x4, offset = 0x4, fixed_abs, tag = 'smem constant byte address 0x4 - core index']
  #allocation1 [shape = 'u32[144,128]{1,0:T(1,128)}', space=vmem, size = 0x12000, scoped, tag = 'internal scratch']
  %s0 = inlined_call_operand.vmem [shape: bf16[2,162,512], index: 0, kind: input, shape index: {}]
  %s1 = inlined_call_operand.vmem [shape: bf16[2,64,512], index: 1, kind: input, shape index: {}]
  %s2 = inlined_call_operand.vmem [shape: f32[2,1,64], index: 2, kind: input, shape index: {}]
  %s3 = inlined_call_operand.vmem [shape: bf16[2,162,64], index: 3, kind: output, shape index: {}]
  %s4 = sld [smem:[#allocation0]]
  $region45: #{rnd_forward.5} parent=0
    _
  %s6 = ssub.s32 1, %s4
  %s7 = scalar_select 0, %s6, %s4
  loop: start=0, step=1, limit=4
  $region2: #{rnd_forward.5} parent=0 // loop_pre_header
    _
  $region3: #{rnd_forward.5} parent=0 // loop_header
    %s9 = sphi 0, %s13
    %p10 = scmp.ge.s32.totalorder %s9, 4
    %s19 = sphi 0, %s21
    %s22 = sphi 0, %s19
    %s23 = sphi 0, %s22
    %s39 = sphi 0, %s23
    %s45 = sphi 0, %s47
    %s48 = sphi 0, %s45
    %s49 = sphi 0, %s48
    %s65 = sphi 0, %s49
    %s71 = sphi 0, %s73
    %s74 = sphi 0, %s71
    %s75 = sphi 0, %s74
    %s91 = sphi 0, %s75
    %s97 = sphi 0, %s99
    %s100 = sphi 0, %s97
    %s101 = sphi 0, %s100
    %s117 = sphi 0, %s101
  $region4: #{rnd_forward.5} parent=0 // loop_header_branch
    %12 = sbr.rel (%p10) target = $region8
  $region5: #{rnd_forward.5} parent=0 // loop_body
    %s14 = ssub.s32 %s9, 1
    %s15 = ssub.s32 %s9, 2
    %s16 = sadd.s32 %s9, 1
    %s17 = ssub.s32 %s9, %s16
    %p18 = scmp.eq.s32.totalorder %s17, 0
    %s20 = sadd.s32 %s19, 1
    %s21 = scalar_select %p18, %s19, %s20
    %p24 = pneg %p18
    %p25 = scmp.eq.s32.totalorder %s9, 1
    %p26 = por %p24, %p25
    %p27 = scmp.ne.s32.totalorder %s19, %s22
    %p28 = scmp.eq.s32.totalorder %s9, 0
    %p29 = por %p27, %p28
    %p30 = scmp.ne.s32.totalorder %s19, %s22
    %p31 = scmp.eq.s32.totalorder %s14, 1
    %p32 = por %p30, %p31
    %p33 = scmp.ne.s32.totalorder %s22, %s23
    %p34 = scmp.eq.s32.totalorder %s14, 0
    %p35 = por %p33, %p34
    %p36 = scmp.ne.s32.totalorder %s22, %s23
    %p37 = scmp.eq.s32.totalorder %s15, 1
    %p38 = por %p36, %p37
    %p40 = scmp.ne.s32.totalorder %s23, %s39
    %p41 = scmp.eq.s32.totalorder %s15, 0
    %p42 = por %p40, %p41
    %s43 = ssub.s32 %s9, %s16
    %p44 = scmp.eq.s32.totalorder %s43, 0
    %s46 = sadd.s32 %s45, 1
    %s47 = scalar_select %p44, %s45, %s46
    %p50 = pneg %p44
    %p51 = scmp.eq.s32.totalorder %s9, 1
    %p52 = por %p50, %p51
    %p53 = scmp.ne.s32.totalorder %s45, %s48
    %p54 = scmp.eq.s32.totalorder %s9, 0
    %p55 = por %p53, %p54
    %p56 = scmp.ne.s32.totalorder %s45, %s48
    %p57 = scmp.eq.s32.totalorder %s14, 1
    %p58 = por %p56, %p57
    %p59 = scmp.ne.s32.totalorder %s48, %s49
    %p60 = scmp.eq.s32.totalorder %s14, 0
    %p61 = por %p59, %p60
    %p62 = scmp.ne.s32.totalorder %s48, %s49
    %p63 = scmp.eq.s32.totalorder %s15, 1
    %p64 = por %p62, %p63
    %p66 = scmp.ne.s32.totalorder %s49, %s65
    %p67 = scmp.eq.s32.totalorder %s15, 0
    %p68 = por %p66, %p67
    %s69 = ssub.s32 %s9, %s16
    %p70 = scmp.eq.s32.totalorder %s69, 0
    %s72 = sadd.s32 %s71, 1
    %s73 = scalar_select %p70, %s71, %s72
    %p76 = pneg %p70
    %p77 = scmp.eq.s32.totalorder %s9, 1
    %p78 = por %p76, %p77
    %p79 = scmp.ne.s32.totalorder %s71, %s74
    %p80 = scmp.eq.s32.totalorder %s9, 0
    %p81 = por %p79, %p80
    %p82 = scmp.ne.s32.totalorder %s71, %s74
    %p83 = scmp.eq.s32.totalorder %s14, 1
    %p84 = por %p82, %p83
    %p85 = scmp.ne.s32.totalorder %s74, %s75
    %p86 = scmp.eq.s32.totalorder %s14, 0
    %p87 = por %p85, %p86
    %p88 = scmp.ne.s32.totalorder %s74, %s75
    %p89 = scmp.eq.s32.totalorder %s15, 1
    %p90 = por %p88, %p89
    %p92 = scmp.ne.s32.totalorder %s75, %s91
    %p93 = scmp.eq.s32.totalorder %s15, 0
    %p94 = por %p92, %p93
    %s95 = ssub.s32 %s9, %s16
    %p96 = scmp.eq.s32.totalorder %s95, 0
    %s98 = sadd.s32 %s97, 1
    %s99 = scalar_select %p96, %s97, %s98
    %p102 = pneg %p96
    %p103 = scmp.eq.s32.totalorder %s9, 1
    %p104 = por %p102, %p103
    %p105 = scmp.ne.s32.totalorder %s97, %s100
    %p106 = scmp.eq.s32.totalorder %s9, 0
    %p107 = por %p105, %p106
    %p108 = scmp.ne.s32.totalorder %s97, %s100
    %p109 = scmp.eq.s32.totalorder %s14, 1
    %p110 = por %p108, %p109
    %p111 = scmp.ne.s32.totalorder %s100, %s101
    %p112 = scmp.eq.s32.totalorder %s14, 0
    %p113 = por %p111, %p112
    %p114 = scmp.ne.s32.totalorder %s100, %s101
    %p115 = scmp.eq.s32.totalorder %s15, 1
    %p116 = por %p114, %p115
    %p118 = scmp.ne.s32.totalorder %s101, %s117
    %p119 = scmp.eq.s32.totalorder %s15, 0
    %p120 = por %p118, %p119
    %p121 = scmp.le.s32.totalorder 1, %s9
    %p122 = scmp.lt.s32.totalorder %s9, 3
    %p123 = pnand %p121, %p122
    %p124 = pneg %p123
    // Predicated region
    $region9: #{rnd_forward.5} parent=5 // pred_check
      _
    $region10: #{rnd_forward.5} parent=5 // pred_check_branch
      %126 = sbr.rel (%p123) target = $region12
    $region11: #{rnd_forward.5} parent=5 // pred_region
      %s127 = ssub.s32 %s9, 1
    $region12: #{rnd_forward.5} parent=5 // pred_fallthru
      _
    %p128 = scmp.lt.s32.totalorder %s9, 2
    // Predicated region
    $region13: #{rnd_forward.5} parent=5 // pred_check
      %p129 = pneg %p128
    $region14: #{rnd_forward.5} parent=5 // pred_check_branch
      %131 = sbr.rel (%p129) target = $region16
    $region15: #{rnd_forward.5} parent=5 // pred_region
      // Predicated region
      $region17: #{rnd_forward.5} parent=15 // pred_check
        %p132 = pneg %p29
      $region18: #{rnd_forward.5} parent=15 // pred_check_branch
        %134 = sbr.rel (%p132) target = $region20
      $region19: #{rnd_forward.5} parent=15 // pred_region
        %p135 = scmp.lt.s32.totalorder %s9, 1
        %s136 = scalar_select %p135, %s9, 1
        %s137 = smul.addr %s136, 84
        %s138 = smul.addr %s137, 4
        %s139 = scalar_lea.vmem %s0, %s138
      $region20: #{rnd_forward.5} parent=15 // pred_fallthru
        _
      // Predicated region
      $region21: #{rnd_forward.5} parent=15 // pred_check
        %p140 = pneg %p55
      $region22: #{rnd_forward.5} parent=15 // pred_check_branch
        %142 = sbr.rel (%p140) target = $region24
      $region23: #{rnd_forward.5} parent=15 // pred_region
        %p143 = scmp.lt.s32.totalorder %s9, 1
        %s144 = scalar_select %p143, %s9, 1
        %s145 = smul.addr %s144, 32
        %s146 = smul.addr %s145, 4
        %s147 = scalar_lea.vmem %s1, %s146
      $region24: #{rnd_forward.5} parent=15 // pred_fallthru
        _
      // Predicated region
      $region25: #{rnd_forward.5} parent=15 // pred_check
        %p148 = pneg %p81
      $region26: #{rnd_forward.5} parent=15 // pred_check_branch
        %150 = sbr.rel (%p148) target = $region28
      $region27: #{rnd_forward.5} parent=15 // pred_region
        %p151 = scmp.lt.s32.totalorder %s9, 1
        %s152 = scalar_select %p151, %s9, 1
        %s153 = scalar_lea.vmem %s2, %s152
      $region28: #{rnd_forward.5} parent=15 // pred_fallthru
        _
    $region16: #{rnd_forward.5} parent=5 // pred_fallthru
      _
    %p154 = scmp.le.s32.totalorder 1, %s9
    %p155 = scmp.lt.s32.totalorder %s9, 3
    %p156 = pnand %p154, %p155
    %p157 = pneg %p156
    // Predicated region
    $region29: #{rnd_forward.5} parent=5 // pred_check
      _
    $region30: #{rnd_forward.5} parent=5 // pred_check_branch
      %159 = sbr.rel (%p156) target = $region32
    $region31: #{rnd_forward.5} parent=5 // pred_region
      %s160 = ssub.s32 %s9, 1
      %p161 = scmp.lt.s32.totalorder %s14, 1
      %s162 = scalar_select %p161, %s14, 1
      %s163 = smul.addr %s162, 84
      %s164 = smul.addr %s163, 4
      %s165 = scalar_lea.vmem %s0, %s164
      %p166 = pneg %p35
      %p167 = pneg %p32
      %p168 = scmp.lt.s32.totalorder %s14, 1
      %s169 = scalar_select %p168, %s14, 1
      %s170 = smul.addr %s169, 32
      %s171 = smul.addr %s170, 4
      %s172 = scalar_lea.vmem %s1, %s171
      %p173 = pneg %p61
      %p174 = pneg %p58
      %p175 = scmp.lt.s32.totalorder %s14, 1
      %s176 = scalar_select %p175, %s14, 1
      %s177 = scalar_lea.vmem %s2, %s176
      %p178 = pneg %p87
      %p179 = pneg %p84
      %p180 = pneg %p113
      %p181 = pneg %p110
      %p182 = scmp.lt.s32.totalorder %s14, 1
      %s183 = scalar_select %p182, %s14, 1
      %s184 = smul.addr %s183, 21
      %s185 = smul.addr %s184, 4
      %s186 = scalar_lea.vmem %s3, %s185
      %p187 = scmp.lt.s32.totalorder %s14, 1
      %s188 = scalar_select %p187, %s14, 1
      %s189 = smul.addr %s188, 84
      %s190 = smul.addr %s189, 4
      %s191 = scalar_lea.vmem %s0, %s190
      %p192 = scmp.lt.s32.totalorder %s14, 1
      %s193 = scalar_select %p192, %s14, 1
      %s194 = smul.addr %s193, 32
      %s195 = smul.addr %s194, 4
      %s196 = scalar_lea.vmem %s1, %s195
      %p197 = scmp.lt.s32.totalorder %s14, 1
      %s198 = scalar_select %p197, %s14, 1
      %s199 = scalar_lea.vmem %s2, %s198
      %p200 = scmp.lt.s32.totalorder %s14, 1
      %s201 = scalar_select %p200, %s14, 1
      %s202 = smul.addr %s201, 21
      %s203 = smul.addr %s202, 4
      %s204 = scalar_lea.vmem %s3, %s203
      %v206 = vld [vmem:[%s191] sm:$0xff]
      %v207 = vld [vmem:[%s191 + $0x8] sm:$0xff]
      %v208 = vld [vmem:[%s191 + $0x10] sm:$0xff]
      %v209 = vld [vmem:[%s191 + $0x18] sm:$0xff]
      %v210 = vld [vmem:[%s191 + $0x20] sm:$0xff]
      %v211 = vld [vmem:[%s191 + $0x28] sm:$0xff]
      %v212 = vld [vmem:[%s191 + $0x30] sm:$0xff]
      %v213 = vld [vmem:[%s191 + $0x38] sm:$0xff]
      %v214 = vld [vmem:[%s191 + $0x40] sm:$0xff]
      %v215 = vld [vmem:[%s191 + $0x48] sm:$0xff]
      %v216 = vld [vmem:[%s191 + $0x50] sm:$0xff]
      %v217 = vld [vmem:[%s191 + $0x58] sm:$0xff]
      %v218 = vld [vmem:[%s191 + $0x60] sm:$0xff]
      %v219 = vld [vmem:[%s191 + $0x68] sm:$0xff]
      %v220 = vld [vmem:[%s191 + $0x70] sm:$0xff]
      %v221 = vld [vmem:[%s191 + $0x78] sm:$0xff]
      %v222 = vld [vmem:[%s191 + $0x80] sm:$0xff]
      %v223 = vld [vmem:[%s191 + $0x88] sm:$0xff]
      %v224 = vld [vmem:[%s191 + $0x90] sm:$0xff]
      %v225 = vld [vmem:[%s191 + $0x98] sm:$0xff]
      %v226 = vld [vmem:[%s191 + $0xa0] sm:$0xff]
      %v227 = vld [vmem:[%s191 + $0xa8] sm:$0xff]
      %v228 = vld [vmem:[%s191 + $0xb0] sm:$0xff]
      %v229 = vld [vmem:[%s191 + $0xb8] sm:$0xff]
      %v230 = vld [vmem:[%s191 + $0xc0] sm:$0xff]
      %v231 = vld [vmem:[%s191 + $0xc8] sm:$0xff]
      %v232 = vld [vmem:[%s191 + $0xd0] sm:$0xff]
      %v233 = vld [vmem:[%s191 + $0xd8] sm:$0xff]
      %v234 = vld [vmem:[%s191 + $0xe0] sm:$0xff]
      %v235 = vld [vmem:[%s191 + $0xe8] sm:$0xff]
      %v236 = vld [vmem:[%s191 + $0xf0] sm:$0xff]
      %v237 = vld [vmem:[%s191 + $0xf8] sm:$0xff]
      %v238 = vld [vmem:[%s191 + $0x100] sm:$0xff]
      %v239 = vld [vmem:[%s191 + $0x108] sm:$0xff]
      %v240 = vld [vmem:[%s191 + $0x110] sm:$0xff]
      %v241 = vld [vmem:[%s191 + $0x118] sm:$0xff]
      %v242 = vld [vmem:[%s191 + $0x120] sm:$0xff]
      %v243 = vld [vmem:[%s191 + $0x128] sm:$0xff]
      %v244 = vld [vmem:[%s191 + $0x130] sm:$0xff]
      %v245 = vld [vmem:[%s191 + $0x138] sm:$0xff]
      %v246 = vld [vmem:[%s191 + $0x140] sm:$0x11]
      %v247 = vld [vmem:[%s191 + $0x148] sm:$0x11]
      %v248 = vld [vmem:[%s196] sm:$0xff]
      %v249 = vld [vmem:[%s196 + $0x8] sm:$0xff]
      %v250 = vld [vmem:[%s196 + $0x10] sm:$0xff]
      %v251 = vld [vmem:[%s196 + $0x18] sm:$0xff]
      %v252 = vld [vmem:[%s196 + $0x20] sm:$0xff]
      %v253 = vld [vmem:[%s196 + $0x28] sm:$0xff]
      %v254 = vld [vmem:[%s196 + $0x30] sm:$0xff]
      %v255 = vld [vmem:[%s196 + $0x38] sm:$0xff]
      %v256 = vld [vmem:[%s196 + $0x40] sm:$0xff]
      %v257 = vld [vmem:[%s196 + $0x48] sm:$0xff]
      %v258 = vld [vmem:[%s196 + $0x50] sm:$0xff]
      %v259 = vld [vmem:[%s196 + $0x58] sm:$0xff]
      %v260 = vld [vmem:[%s196 + $0x60] sm:$0xff]
      %v261 = vld [vmem:[%s196 + $0x68] sm:$0xff]
      %v262 = vld [vmem:[%s196 + $0x70] sm:$0xff]
      %v263 = vld [vmem:[%s196 + $0x78] sm:$0xff]
      %v264 = vld [vmem:[%s199] sm:$0x1]
      %v266 = vlaneseq
      %v267 = vshrl.u32 %v266, 7
      %v268 = vsub.s32 0, %v267
      %v269 = vrot.slane %v264, %v268
      %v313 = vunpack.c.l.b16 %v206
      %v314 = vunpack.c.h.b16 %v206
      %v315 = vunpack.c.l.b16 %v207
      %v316 = vunpack.c.h.b16 %v207
      %v317 = vunpack.c.l.b16 %v208
      %v318 = vunpack.c.h.b16 %v208
      %v319 = vunpack.c.l.b16 %v209
      %v320 = vunpack.c.h.b16 %v209
      %v321 = vunpack.c.l.b16 %v210
      %v322 = vunpack.c.h.b16 %v210
      %v323 = vunpack.c.l.b16 %v211
      %v324 = vunpack.c.h.b16 %v211
      %v325 = vunpack.c.l.b16 %v212
      %v326 = vunpack.c.h.b16 %v212
      %v327 = vunpack.c.l.b16 %v213
      %v328 = vunpack.c.h.b16 %v213
      %v329 = vunpack.c.l.b16 %v214
      %v330 = vunpack.c.h.b16 %v214
      %v331 = vunpack.c.l.b16 %v215
      %v332 = vunpack.c.h.b16 %v215
      %v333 = vunpack.c.l.b16 %v216
      %v334 = vunpack.c.h.b16 %v216
      %v335 = vunpack.c.l.b16 %v217
      %v336 = vunpack.c.h.b16 %v217
      %v337 = vunpack.c.l.b16 %v218
      %v338 = vunpack.c.h.b16 %v218
      %v339 = vunpack.c.l.b16 %v219
      %v340 = vunpack.c.h.b16 %v219
      %v341 = vunpack.c.l.b16 %v220
      %v342 = vunpack.c.h.b16 %v220
      %v343 = vunpack.c.l.b16 %v221
      %v344 = vunpack.c.h.b16 %v221
      %v345 = vunpack.c.l.b16 %v222
      %v346 = vunpack.c.h.b16 %v222
      %v347 = vunpack.c.l.b16 %v223
      %v348 = vunpack.c.h.b16 %v223
      %v349 = vunpack.c.l.b16 %v224
      %v350 = vunpack.c.h.b16 %v224
      %v351 = vunpack.c.l.b16 %v225
      %v352 = vunpack.c.h.b16 %v225
      %v353 = vunpack.c.l.b16 %v226
      %v354 = vunpack.c.h.b16 %v226
      %v355 = vunpack.c.l.b16 %v227
      %v356 = vunpack.c.h.b16 %v227
      %v357 = vunpack.c.l.b16 %v228
      %v358 = vunpack.c.h.b16 %v228
      %v359 = vunpack.c.l.b16 %v229
      %v360 = vunpack.c.h.b16 %v229
      %v361 = vunpack.c.l.b16 %v230
      %v362 = vunpack.c.h.b16 %v230
      %v363 = vunpack.c.l.b16 %v231
      %v364 = vunpack.c.h.b16 %v231
      %v365 = vunpack.c.l.b16 %v232
      %v366 = vunpack.c.h.b16 %v232
      %v367 = vunpack.c.l.b16 %v233
      %v368 = vunpack.c.h.b16 %v233
      %v369 = vunpack.c.l.b16 %v234
      %v370 = vunpack.c.h.b16 %v234
      %v371 = vunpack.c.l.b16 %v235
      %v372 = vunpack.c.h.b16 %v235
      %v373 = vunpack.c.l.b16 %v236
      %v374 = vunpack.c.h.b16 %v236
      %v375 = vunpack.c.l.b16 %v237
      %v376 = vunpack.c.h.b16 %v237
      %v377 = vunpack.c.l.b16 %v238
      %v378 = vunpack.c.h.b16 %v238
      %v379 = vunpack.c.l.b16 %v239
      %v380 = vunpack.c.h.b16 %v239
      %v381 = vunpack.c.l.b16 %v240
      %v382 = vunpack.c.h.b16 %v240
      %v383 = vunpack.c.l.b16 %v241
      %v384 = vunpack.c.h.b16 %v241
      %v385 = vunpack.c.l.b16 %v242
      %v386 = vunpack.c.h.b16 %v242
      %v387 = vunpack.c.l.b16 %v243
      %v388 = vunpack.c.h.b16 %v243
      %v389 = vunpack.c.l.b16 %v244
      %v390 = vunpack.c.h.b16 %v244
      %v391 = vunpack.c.l.b16 %v245
      %v392 = vunpack.c.h.b16 %v245
      %v393 = vunpack.c.l.b16 %v246
      %v394 = vunpack.c.h.b16 %v246
      %v395 = vunpack.c.l.b16 %v247
      %v396 = vunpack.c.h.b16 %v247
      %v397 = vpack.c.b16 %v317, %v313
      %v398 = vpack.c.b16 %v318, %v314
      %v399 = vpack.c.b16 %v319, %v315
      %v400 = vpack.c.b16 %v320, %v316
      %v401 = vpack.c.b16 %v325, %v321
      %v402 = vpack.c.b16 %v326, %v322
      %v403 = vpack.c.b16 %v327, %v323
      %v404 = vpack.c.b16 %v328, %v324
      %v405 = vpack.c.b16 %v333, %v329
      %v406 = vpack.c.b16 %v334, %v330
      %v407 = vpack.c.b16 %v335, %v331
      %v408 = vpack.c.b16 %v336, %v332
      %v409 = vpack.c.b16 %v341, %v337
      %v410 = vpack.c.b16 %v342, %v338
      %v411 = vpack.c.b16 %v343, %v339
      %v412 = vpack.c.b16 %v344, %v340
      %v413 = vpack.c.b16 %v349, %v345
      %v414 = vpack.c.b16 %v350, %v346
      %v415 = vpack.c.b16 %v351, %v347
      %v416 = vpack.c.b16 %v352, %v348
      %v417 = vpack.c.b16 %v357, %v353
      %v418 = vpack.c.b16 %v358, %v354
      %v419 = vpack.c.b16 %v359, %v355
      %v420 = vpack.c.b16 %v360, %v356
      %v421 = vpack.c.b16 %v365, %v361
      %v422 = vpack.c.b16 %v366, %v362
      %v423 = vpack.c.b16 %v367, %v363
      %v424 = vpack.c.b16 %v368, %v364
      %v425 = vpack.c.b16 %v373, %v369
      %v426 = vpack.c.b16 %v374, %v370
      %v427 = vpack.c.b16 %v375, %v371
      %v428 = vpack.c.b16 %v376, %v372
      %v429 = vpack.c.b16 %v381, %v377
      %v430 = vpack.c.b16 %v382, %v378
      %v431 = vpack.c.b16 %v383, %v379
      %v432 = vpack.c.b16 %v384, %v380
      %v433 = vpack.c.b16 %v389, %v385
      %v434 = vpack.c.b16 %v390, %v386
      %v435 = vpack.c.b16 %v391, %v387
      %v436 = vpack.c.b16 %v392, %v388
      %v437 = vpack.c.b16 %v393, %v393
      %v438 = vpack.c.b16 %v394, %v394
      %v439 = vpack.c.b16 %v395, %v395
      %v440 = vpack.c.b16 %v396, %v396
      %v501 = vunpack.c.l.b16 %v248
      %v502 = vunpack.c.h.b16 %v248
      %v503 = vunpack.c.l.b16 %v249
      %v504 = vunpack.c.h.b16 %v249
      %v505 = vunpack.c.l.b16 %v250
      %v506 = vunpack.c.h.b16 %v250
      %v507 = vunpack.c.l.b16 %v251
      %v508 = vunpack.c.h.b16 %v251
      %v509 = vunpack.c.l.b16 %v252
      %v510 = vunpack.c.h.b16 %v252
      %v511 = vunpack.c.l.b16 %v253
      %v512 = vunpack.c.h.b16 %v253
      %v513 = vunpack.c.l.b16 %v254
      %v514 = vunpack.c.h.b16 %v254
      %v515 = vunpack.c.l.b16 %v255
      %v516 = vunpack.c.h.b16 %v255
      %v517 = vunpack.c.l.b16 %v256
      %v518 = vunpack.c.h.b16 %v256
      %v519 = vunpack.c.l.b16 %v257
      %v520 = vunpack.c.h.b16 %v257
      %v521 = vunpack.c.l.b16 %v258
      %v522 = vunpack.c.h.b16 %v258
      %v523 = vunpack.c.l.b16 %v259
      %v524 = vunpack.c.h.b16 %v259
      %v525 = vunpack.c.l.b16 %v260
      %v526 = vunpack.c.h.b16 %v260
      %v527 = vunpack.c.l.b16 %v261
      %v528 = vunpack.c.h.b16 %v261
      %v529 = vunpack.c.l.b16 %v262
      %v530 = vunpack.c.h.b16 %v262
      %v531 = vunpack.c.l.b16 %v263
      %v532 = vunpack.c.h.b16 %v263
      %v533 = vpack.c.b16 %v505, %v501
      %v534 = vpack.c.b16 %v506, %v502
      %v535 = vpack.c.b16 %v507, %v503
      %v536 = vpack.c.b16 %v508, %v504
      %v537 = vpack.c.b16 %v513, %v509
      %v538 = vpack.c.b16 %v514, %v510
      %v539 = vpack.c.b16 %v515, %v511
      %v540 = vpack.c.b16 %v516, %v512
      %v541 = vpack.c.b16 %v521, %v517
      %v542 = vpack.c.b16 %v522, %v518
      %v543 = vpack.c.b16 %v523, %v519
      %v544 = vpack.c.b16 %v524, %v520
      %v545 = vpack.c.b16 %v529, %v525
      %v546 = vpack.c.b16 %v530, %v526
      %v547 = vpack.c.b16 %v531, %v527
      %v548 = vpack.c.b16 %v532, %v528
      %565 = vmatprep.subr.bf16.mxu0 %v534
      %566 = vmatpush1.bf16.xpose.msra.mxu0 %v533
      %567 = vmatprep.subr.bf16.mxu0 %v538
      %568 = vmatpush1.bf16.xpose.msra.mxu0 %v537
      %569 = vmatprep.subr.bf16.mxu0 %v542
      %570 = vmatpush1.bf16.xpose.msra.mxu0 %v541
      %571 = vmatprep.subr.bf16.mxu0 %v546
      %572 = vmatpush1.bf16.xpose.msra.mxu0 %v545
      %573 = vmatprep.subr.bf16.mxu0 0
      %574 = vmatpush1.bf16.xpose.msra.mxu0 0
      %575 = vmatprep.subr.bf16.mxu0 0
      %576 = vmatpush1.bf16.xpose.msra.mxu0 0
      %577 = vmatprep.subr.bf16.mxu0 0
      %578 = vmatpush1.bf16.xpose.msra.mxu0 0
      %579 = vmatprep.subr.bf16.mxu0 0
      %580 = vmatpush1.bf16.xpose.msra.mxu0 0
      %581 = vmatprep.subr.bf16.mxu0 0
      %582 = vmatpush1.bf16.xpose.msra.mxu0 0
      %583 = vmatprep.subr.bf16.mxu0 0
      %584 = vmatpush1.bf16.xpose.msra.mxu0 0
      %585 = vmatprep.subr.bf16.mxu0 0
      %586 = vmatpush1.bf16.xpose.msra.mxu0 0
      %587 = vmatprep.subr.bf16.mxu0 0
      %588 = vmatpush1.bf16.xpose.msra.mxu0 0
      %589 = vmatprep.subr.bf16.mxu0 0
      %590 = vmatpush1.bf16.xpose.msra.mxu0 0
      %591 = vmatprep.subr.bf16.mxu0 0
      %592 = vmatpush1.bf16.xpose.msra.mxu0 0
      %593 = vmatprep.subr.bf16.mxu0 0
      %594 = vmatpush1.bf16.xpose.msra.mxu0 0
      %595 = vmatprep.subr.bf16.mxu0 0
      %596 = vmatpush1.bf16.xpose.msra.mxu0 0
      %597 = vmatprep.mubr.bf16.mxu0 %v398
      %598 = vmatmul.mubr.bf16.gmra.mrb[0].mxu0 %v397
      %v599 = vpop.f32.mrb[0].mxu0
      %v600 = vadd.f32 %v269, %v599
      %v601 = vpop.f32.mrb[0].mxu0
      %v602 = vpop.f32.mrb[0].mxu0
      %v603 = vadd.f32 %v269, %v602
      %v604 = vpop.f32.mrb[0].mxu0
      %605 = vmatprep.mubr.bf16.mxu0 %v402
      %606 = vmatmul.mubr.bf16.gmra.mrb[0].mxu0 %v401
      %v607 = vpop.f32.mrb[0].mxu0
      %v608 = vadd.f32 %v269, %v607
      %v609 = vpop.f32.mrb[0].mxu0
      %v610 = vpop.f32.mrb[0].mxu0
      %v611 = vadd.f32 %v269, %v610
      %v612 = vpop.f32.mrb[0].mxu0
      %613 = vmatprep.mubr.bf16.mxu0 %v406
      %614 = vmatmul.mubr.bf16.gmra.mrb[0].mxu0 %v405
      %v615 = vpop.f32.mrb[0].mxu0
      %v616 = vadd.f32 %v269, %v615
      %v617 = vpop.f32.mrb[0].mxu0
      %v618 = vpop.f32.mrb[0].mxu0
      %v619 = vadd.f32 %v269, %v618
      %v620 = vpop.f32.mrb[0].mxu0
      %621 = vmatprep.mubr.bf16.mxu0 %v410
      %622 = vmatmul.mubr.bf16.gmra.mrb[0].mxu0 %v409
      %v623 = vpop.f32.mrb[0].mxu0
      %v624 = vadd.f32 %v269, %v623
      %v625 = vpop.f32.mrb[0].mxu0
      %v626 = vpop.f32.mrb[0].mxu0
      %v627 = vadd.f32 %v269, %v626
      %v628 = vpop.f32.mrb[0].mxu0
      %629 = vmatprep.mubr.bf16.mxu0 %v414
      %630 = vmatmul.mubr.bf16.gmra.mrb[0].mxu0 %v413
      %v631 = vpop.f32.mrb[0].mxu0
      %v632 = vadd.f32 %v269, %v631
      %v633 = vpop.f32.mrb[0].mxu0
      %v634 = vpop.f32.mrb[0].mxu0
      %v635 = vadd.f32 %v269, %v634
      %v636 = vpop.f32.mrb[0].mxu0
      %637 = vmatprep.mubr.bf16.mxu0 %v418
      %638 = vmatmul.mubr.bf16.gmra.mrb[0].mxu0 %v417
      %v639 = vpop.f32.mrb[0].mxu0
      %v640 = vadd.f32 %v269, %v639
      %v641 = vpop.f32.mrb[0].mxu0
      %v642 = vpop.f32.mrb[0].mxu0
      %v643 = vadd.f32 %v269, %v642
      %v644 = vpop.f32.mrb[0].mxu0
      %645 = vmatprep.mubr.bf16.mxu0 %v422
      %646 = vmatmul.mubr.bf16.gmra.mrb[0].mxu0 %v421
      %v647 = vpop.f32.mrb[0].mxu0
      %v648 = vadd.f32 %v269, %v647
      %v649 = vpop.f32.mrb[0].mxu0
      %v650 = vpop.f32.mrb[0].mxu0
      %v651 = vadd.f32 %v269, %v650
      %v652 = vpop.f32.mrb[0].mxu0
      %653 = vmatprep.mubr.bf16.mxu0 %v426
      %654 = vmatmul.mubr.bf16.gmra.mrb[0].mxu0 %v425
      %v655 = vpop.f32.mrb[0].mxu0
      %v656 = vadd.f32 %v269, %v655
      %v657 = vpop.f32.mrb[0].mxu0
      %v658 = vpop.f32.mrb[0].mxu0
      %v659 = vadd.f32 %v269, %v658
      %v660 = vpop.f32.mrb[0].mxu0
      %661 = vmatprep.mubr.bf16.mxu0 %v430
      %662 = vmatmul.mubr.bf16.gmra.mrb[0].mxu0 %v429
      %v663 = vpop.f32.mrb[0].mxu0
      %v664 = vadd.f32 %v269, %v663
      %v665 = vpop.f32.mrb[0].mxu0
      %v666 = vpop.f32.mrb[0].mxu0
      %v667 = vadd.f32 %v269, %v666
      %v668 = vpop.f32.mrb[0].mxu0
      %669 = vmatprep.mubr.bf16.mxu0 %v434
      %670 = vmatmul.mubr.bf16.gmra.mrb[0].mxu0 %v433
      %v671 = vpop.f32.mrb[0].mxu0
      %v672 = vadd.f32 %v269, %v671
      %v673 = vpop.f32.mrb[0].mxu0
      %v674 = vpop.f32.mrb[0].mxu0
      %v675 = vadd.f32 %v269, %v674
      %v676 = vpop.f32.mrb[0].mxu0
      %677 = vmatprep.mubr.bf16.mxu0 %v438
      %678 = vmatmul.mubr.bf16.gmra.mrb[0].mxu0 %v437
      %v679 = vpop.f32.mrb[0].mxu0
      %v680 = vadd.f32 %v269, %v679
      %v681 = vpop.f32.mrb[0].mxu0
      %v682 = vpop.f32.mrb[0].mxu0
      %v683 = vpop.f32.mrb[0].mxu0
      %684 = vdwg.mxu0
      %685 = vmatprep.subr.bf16.mxu0 %v536
      %686 = vmatpush1.bf16.xpose.msra.mxu0 %v535
      %687 = vmatprep.subr.bf16.mxu0 %v540
      %688 = vmatpush1.bf16.xpose.msra.mxu0 %v539
      %689 = vmatprep.subr.bf16.mxu0 %v544
      %690 = vmatpush1.bf16.xpose.msra.mxu0 %v543
      %691 = vmatprep.subr.bf16.mxu0 %v548
      %692 = vmatpush1.bf16.xpose.msra.mxu0 %v547
      %693 = vmatprep.subr.bf16.mxu0 0
      %694 = vmatpush1.bf16.xpose.msra.mxu0 0
      %695 = vmatprep.subr.bf16.mxu0 0
      %696 = vmatpush1.bf16.xpose.msra.mxu0 0
      %697 = vmatprep.subr.bf16.mxu0 0
      %698 = vmatpush1.bf16.xpose.msra.mxu0 0
      %699 = vmatprep.subr.bf16.mxu0 0
      %700 = vmatpush1.bf16.xpose.msra.mxu0 0
      %701 = vmatprep.subr.bf16.mxu0 0
      %702 = vmatpush1.bf16.xpose.msra.mxu0 0
      %703 = vmatprep.subr.bf16.mxu0 0
      %704 = vmatpush1.bf16.xpose.msra.mxu0 0
      %705 = vmatprep.subr.bf16.mxu0 0
      %706 = vmatpush1.bf16.xpose.msra.mxu0 0
      %707 = vmatprep.subr.bf16.mxu0 0
      %708 = vmatpush1.bf16.xpose.msra.mxu0 0
      %709 = vmatprep.subr.bf16.mxu0 0
      %710 = vmatpush1.bf16.xpose.msra.mxu0 0
      %711 = vmatprep.subr.bf16.mxu0 0
      %712 = vmatpush1.bf16.xpose.msra.mxu0 0
      %713 = vmatprep.subr.bf16.mxu0 0
      %714 = vmatpush1.bf16.xpose.msra.mxu0 0
      %715 = vmatprep.subr.bf16.mxu0 0
      %716 = vmatpush1.bf16.xpose.msra.mxu0 0
      %717 = vmatprep.mubr.bf16.mxu0 %v400
      %718 = vmatmul.mubr.bf16.gmra.mrb[0].mxu0 %v399
      %v719 = vpop.f32.mrb[0].mxu0
      %v720 = vadd.f32 %v600, %v719
      %v721 = vpop.f32.mrb[0].mxu0
      %v722 = vpop.f32.mrb[0].mxu0
      %v723 = vadd.f32 %v603, %v722
      %v724 = vpop.f32.mrb[0].mxu0
      %725 = vmatprep.mubr.bf16.mxu0 %v404
      %726 = vmatmul.mubr.bf16.gmra.mrb[0].mxu0 %v403
      %v727 = vpop.f32.mrb[0].mxu0
      %v728 = vadd.f32 %v608, %v727
      %v729 = vpop.f32.mrb[0].mxu0
      %v730 = vpop.f32.mrb[0].mxu0
      %v731 = vadd.f32 %v611, %v730
      %v732 = vpop.f32.mrb[0].mxu0
      %733 = vmatprep.mubr.bf16.mxu0 %v408
      %734 = vmatmul.mubr.bf16.gmra.mrb[0].mxu0 %v407
      %v735 = vpop.f32.mrb[0].mxu0
      %v736 = vadd.f32 %v616, %v735
      %v737 = vpop.f32.mrb[0].mxu0
      %v738 = vpop.f32.mrb[0].mxu0
      %v739 = vadd.f32 %v619, %v738
      %v740 = vpop.f32.mrb[0].mxu0
      %741 = vmatprep.mubr.bf16.mxu0 %v412
      %742 = vmatmul.mubr.bf16.gmra.mrb[0].mxu0 %v411
      %v743 = vpop.f32.mrb[0].mxu0
      %v744 = vadd.f32 %v624, %v743
      %v745 = vpop.f32.mrb[0].mxu0
      %v746 = vpop.f32.mrb[0].mxu0
      %v747 = vadd.f32 %v627, %v746
      %v748 = vpop.f32.mrb[0].mxu0
      %749 = vmatprep.mubr.bf16.mxu0 %v416
      %750 = vmatmul.mubr.bf16.gmra.mrb[0].mxu0 %v415
      %v751 = vpop.f32.mrb[0].mxu0
      %v752 = vadd.f32 %v632, %v751
      %v753 = vpop.f32.mrb[0].mxu0
      %v754 = vpop.f32.mrb[0].mxu0
      %v755 = vadd.f32 %v635, %v754
      %v756 = vpop.f32.mrb[0].mxu0
      %757 = vmatprep.mubr.bf16.mxu0 %v420
      %758 = vmatmul.mubr.bf16.gmra.mrb[0].mxu0 %v419
      %v759 = vpop.f32.mrb[0].mxu0
      %v760 = vadd.f32 %v640, %v759
      %v761 = vpop.f32.mrb[0].mxu0
      %v762 = vpop.f32.mrb[0].mxu0
      %v763 = vadd.f32 %v643, %v762
      %v764 = vpop.f32.mrb[0].mxu0
      %765 = vmatprep.mubr.bf16.mxu0 %v424
      %766 = vmatmul.mubr.bf16.gmra.mrb[0].mxu0 %v423
      %v767 = vpop.f32.mrb[0].mxu0
      %v768 = vadd.f32 %v648, %v767
      %v769 = vpop.f32.mrb[0].mxu0
      %v770 = vpop.f32.mrb[0].mxu0
      %v771 = vadd.f32 %v651, %v770
      %v772 = vpop.f32.mrb[0].mxu0
      %773 = vmatprep.mubr.bf16.mxu0 %v428
      %774 = vmatmul.mubr.bf16.gmra.mrb[0].mxu0 %v427
      %v775 = vpop.f32.mrb[0].mxu0
      %v776 = vadd.f32 %v656, %v775
      %v777 = vpop.f32.mrb[0].mxu0
      %v778 = vpop.f32.mrb[0].mxu0
      %v779 = vadd.f32 %v659, %v778
      %v780 = vpop.f32.mrb[0].mxu0
      %781 = vmatprep.mubr.bf16.mxu0 %v432
      %782 = vmatmul.mubr.bf16.gmra.mrb[0].mxu0 %v431
      %v783 = vpop.f32.mrb[0].mxu0
      %v784 = vadd.f32 %v664, %v783
      %v785 = vpop.f32.mrb[0].mxu0
      %v786 = vpop.f32.mrb[0].mxu0
      %v787 = vadd.f32 %v667, %v786
      %v788 = vpop.f32.mrb[0].mxu0
      %789 = vmatprep.mubr.bf16.mxu0 %v436
      %790 = vmatmul.mubr.bf16.gmra.mrb[0].mxu0 %v435
      %v791 = vpop.f32.mrb[0].mxu0
      %v792 = vadd.f32 %v672, %v791
      %v793 = vpop.f32.mrb[0].mxu0
      %v794 = vpop.f32.mrb[0].mxu0
      %v795 = vadd.f32 %v675, %v794
      %v796 = vpop.f32.mrb[0].mxu0
      %797 = vmatprep.mubr.bf16.mxu0 %v440
      %798 = vmatmul.mubr.bf16.gmra.mrb[0].mxu0 %v439
      %v799 = vpop.f32.mrb[0].mxu0
      %v800 = vadd.f32 %v680, %v799
      %v801 = vpop.f32.mrb[0].mxu0
      %v802 = vpop.f32.mrb[0].mxu0
      %v803 = vpop.f32.mrb[0].mxu0
      %804 = vdwg.mxu0
      %v805 = vmax.f32 %v720, 0.0
      %v806 = vmax.f32 %v723, 0.0
      %v807 = vmax.f32 %v728, 0.0
      %v808 = vmax.f32 %v731, 0.0
      %v809 = vmax.f32 %v736, 0.0
      %v810 = vmax.f32 %v739, 0.0
      %v811 = vmax.f32 %v744, 0.0
      %v812 = vmax.f32 %v747, 0.0
      %v813 = vmax.f32 %v752, 0.0
      %v814 = vmax.f32 %v755, 0.0
      %v815 = vmax.f32 %v760, 0.0
      %v816 = vmax.f32 %v763, 0.0
      %v817 = vmax.f32 %v768, 0.0
      %v818 = vmax.f32 %v771, 0.0
      %v819 = vmax.f32 %v776, 0.0
      %v820 = vmax.f32 %v779, 0.0
      %v821 = vmax.f32 %v784, 0.0
      %v822 = vmax.f32 %v787, 0.0
      %v823 = vmax.f32 %v792, 0.0
      %v824 = vmax.f32 %v795, 0.0
      %v825 = vmax.f32 %v800, 0.0
      %v826 = vpack.c.bf16 %v806, %v805
      %v827 = vpack.c.bf16 %v808, %v807
      %v828 = vpack.c.bf16 %v810, %v809
      %v829 = vpack.c.bf16 %v812, %v811
      %v830 = vpack.c.bf16 %v814, %v813
      %v831 = vpack.c.bf16 %v816, %v815
      %v832 = vpack.c.bf16 %v818, %v817
      %v833 = vpack.c.bf16 %v820, %v819
      %v834 = vpack.c.bf16 %v822, %v821
      %v835 = vpack.c.bf16 %v824, %v823
      %v836 = vpack.c.bf16 %v825, %v825
      %v848 = vunpack.c.l.b16 %v826
      %v849 = vunpack.c.h.b16 %v826
      %v850 = vunpack.c.l.b16 %v827
      %v851 = vunpack.c.h.b16 %v827
      %v852 = vunpack.c.l.b16 %v828
      %v853 = vunpack.c.h.b16 %v828
      %v854 = vunpack.c.l.b16 %v829
      %v855 = vunpack.c.h.b16 %v829
      %v856 = vunpack.c.l.b16 %v830
      %v857 = vunpack.c.h.b16 %v830
      %v858 = vunpack.c.l.b16 %v831
      %v859 = vunpack.c.h.b16 %v831
      %v860 = vunpack.c.l.b16 %v832
      %v861 = vunpack.c.h.b16 %v832
      %v862 = vunpack.c.l.b16 %v833
      %v863 = vunpack.c.h.b16 %v833
      %v864 = vunpack.c.l.b16 %v834
      %v865 = vunpack.c.h.b16 %v834
      %v866 = vunpack.c.l.b16 %v835
      %v867 = vunpack.c.h.b16 %v835
      %v868 = vunpack.c.l.b16 %v836
      %v869 = vpack.c.b16 %v848, %v848
      %v870 = vpack.c.b16 %v849, %v849
      %v871 = vpack.c.b16 %v850, %v850
      %v872 = vpack.c.b16 %v851, %v851
      %v873 = vpack.c.b16 %v852, %v852
      %v874 = vpack.c.b16 %v853, %v853
      %v875 = vpack.c.b16 %v854, %v854
      %v876 = vpack.c.b16 %v855, %v855
      %v877 = vpack.c.b16 %v856, %v856
      %v878 = vpack.c.b16 %v857, %v857
      %v879 = vpack.c.b16 %v858, %v858
      %v880 = vpack.c.b16 %v859, %v859
      %v881 = vpack.c.b16 %v860, %v860
      %v882 = vpack.c.b16 %v861, %v861
      %v883 = vpack.c.b16 %v862, %v862
      %v884 = vpack.c.b16 %v863, %v863
      %v885 = vpack.c.b16 %v864, %v864
      %v886 = vpack.c.b16 %v865, %v865
      %v887 = vpack.c.b16 %v866, %v866
      %v888 = vpack.c.b16 %v867, %v867
      %v889 = vpack.c.b16 %v868, %v868
      %vm911 = vcmask 519168
      %912 = vst.msk [vmem:[%s204] sm:$0xf] %vm911, %v869
      %913 = vst.msk [vmem:[%s204 + $0x4] sm:$0xf] %vm911, %v870
      %914 = vst.msk [vmem:[%s204 + $0x8] sm:$0xf] %vm911, %v871
      %915 = vst.msk [vmem:[%s204 + $0xc] sm:$0xf] %vm911, %v872
      %916 = vst.msk [vmem:[%s204 + $0x10] sm:$0xf] %vm911, %v873
      %917 = vst.msk [vmem:[%s204 + $0x14] sm:$0xf] %vm911, %v874
      %918 = vst.msk [vmem:[%s204 + $0x18] sm:$0xf] %vm911, %v875
      %919 = vst.msk [vmem:[%s204 + $0x1c] sm:$0xf] %vm911, %v876
      %920 = vst.msk [vmem:[%s204 + $0x20] sm:$0xf] %vm911, %v877
      %921 = vst.msk [vmem:[%s204 + $0x24] sm:$0xf] %vm911, %v878
      %922 = vst.msk [vmem:[%s204 + $0x28] sm:$0xf] %vm911, %v879
      %923 = vst.msk [vmem:[%s204 + $0x2c] sm:$0xf] %vm911, %v880
      %924 = vst.msk [vmem:[%s204 + $0x30] sm:$0xf] %vm911, %v881
      %925 = vst.msk [vmem:[%s204 + $0x34] sm:$0xf] %vm911, %v882
      %926 = vst.msk [vmem:[%s204 + $0x38] sm:$0xf] %vm911, %v883
      %927 = vst.msk [vmem:[%s204 + $0x3c] sm:$0xf] %vm911, %v884
      %928 = vst.msk [vmem:[%s204 + $0x40] sm:$0xf] %vm911, %v885
      %929 = vst.msk [vmem:[%s204 + $0x44] sm:$0xf] %vm911, %v886
      %930 = vst.msk [vmem:[%s204 + $0x48] sm:$0xf] %vm911, %v887
      %931 = vst.msk [vmem:[%s204 + $0x4c] sm:$0xf] %vm911, %v888
      %vm932 = vcmask 516096
      %933 = vst.msk [vmem:[%s204 + $0x50] sm:$0x1] %vm932, %v889
      %p934 = scmp.lt.s32.totalorder %s14, 1
      %s935 = scalar_select %p934, %s14, 1
      %s936 = smul.addr %s935, 21
      %s937 = smul.addr %s936, 4
      %s938 = scalar_lea.vmem %s3, %s937
      // Predicated region
      $region33: #{rnd_forward.5} parent=31 // pred_check
        %p939 = pneg %p110
      $region34: #{rnd_forward.5} parent=31 // pred_check_branch
        %941 = sbr.rel (%p939) target = $region36
      $region35: #{rnd_forward.5} parent=31 // pred_region
        _
      $region36: #{rnd_forward.5} parent=31 // pred_fallthru
        _
    $region32: #{rnd_forward.5} parent=5 // pred_fallthru
      _
    %p942 = scmp.le.s32.totalorder 2, %s9
    // Predicated region
    $region37: #{rnd_forward.5} parent=5 // pred_check
      %p943 = pneg %p942
    $region38: #{rnd_forward.5} parent=5 // pred_check_branch
      %945 = sbr.rel (%p943) target = $region40
    $region39: #{rnd_forward.5} parent=5 // pred_region
      %s946 = ssub.s32 %s9, 2
      // Predicated region
      $region41: #{rnd_forward.5} parent=39 // pred_check
        %p947 = pneg %p116
      $region42: #{rnd_forward.5} parent=39 // pred_check_branch
        %949 = sbr.rel (%p947) target = $region44
      $region43: #{rnd_forward.5} parent=39 // pred_region
        %p950 = scmp.lt.s32.totalorder %s15, 1
        %s951 = scalar_select %p950, %s15, 1
        %s952 = smul.addr %s951, 21
        %s953 = smul.addr %s952, 4
        %s954 = scalar_lea.vmem %s3, %s953
      $region44: #{rnd_forward.5} parent=39 // pred_fallthru
        _
    $region40: #{rnd_forward.5} parent=5 // pred_fallthru
      _
  $region6: #{rnd_forward.5} parent=0 // loop_footer
    %s13 = sadd.s32 1, %s9
  $region7: #{rnd_forward.5} parent=0 // loop_footer_branch
    %8 = sbr.rel target = $region3
  $region8: #{rnd_forward.5} parent=0 // loop_exit
    _

// kernel: rnd_forward.6
$region0: #{rnd_forward.6}
  #allocation0 [shape = 'u32[]', space=smem, size = 0x4, offset = 0x4, fixed_abs, tag = 'smem constant byte address 0x4 - core index']
  #allocation1 [shape = 'u32[144,128]{1,0:T(1,128)}', space=vmem, size = 0x12000, scoped, tag = 'internal scratch']
  %s0 = inlined_call_operand.vmem [shape: bf16[2,98,576], index: 0, kind: input, shape index: {}]
  %s1 = inlined_call_operand.vmem [shape: bf16[2,64,576], index: 1, kind: input, shape index: {}]
  %s2 = inlined_call_operand.vmem [shape: f32[2,1,64], index: 2, kind: input, shape index: {}]
  %s3 = inlined_call_operand.vmem [shape: bf16[2,98,64], index: 3, kind: output, shape index: {}]
  %s4 = sld [smem:[#allocation0]]
  $region45: #{rnd_forward.6} parent=0
    _
  %s6 = ssub.s32 1, %s4
  %s7 = scalar_select 0, %s6, %s4
  loop: start=0, step=1, limit=4
  $region2: #{rnd_forward.6} parent=0 // loop_pre_header
    _
  $region3: #{rnd_forward.6} parent=0 // loop_header
    %s9 = sphi 0, %s13
    %p10 = scmp.ge.s32.totalorder %s9, 4
    %s19 = sphi 0, %s21
    %s22 = sphi 0, %s19
    %s23 = sphi 0, %s22
    %s39 = sphi 0, %s23
    %s45 = sphi 0, %s47
    %s48 = sphi 0, %s45
    %s49 = sphi 0, %s48
    %s65 = sphi 0, %s49
    %s71 = sphi 0, %s73
    %s74 = sphi 0, %s71
    %s75 = sphi 0, %s74
    %s91 = sphi 0, %s75
    %s97 = sphi 0, %s99
    %s100 = sphi 0, %s97
    %s101 = sphi 0, %s100
    %s117 = sphi 0, %s101
  $region4: #{rnd_forward.6} parent=0 // loop_header_branch
    %12 = sbr.rel (%p10) target = $region8
  $region5: #{rnd_forward.6} parent=0 // loop_body
    %s14 = ssub.s32 %s9, 1
    %s15 = ssub.s32 %s9, 2
    %s16 = sadd.s32 %s9, 1
    %s17 = ssub.s32 %s9, %s16
    %p18 = scmp.eq.s32.totalorder %s17, 0
    %s20 = sadd.s32 %s19, 1
    %s21 = scalar_select %p18, %s19, %s20
    %p24 = pneg %p18
    %p25 = scmp.eq.s32.totalorder %s9, 1
    %p26 = por %p24, %p25
    %p27 = scmp.ne.s32.totalorder %s19, %s22
    %p28 = scmp.eq.s32.totalorder %s9, 0
    %p29 = por %p27, %p28
    %p30 = scmp.ne.s32.totalorder %s19, %s22
    %p31 = scmp.eq.s32.totalorder %s14, 1
    %p32 = por %p30, %p31
    %p33 = scmp.ne.s32.totalorder %s22, %s23
    %p34 = scmp.eq.s32.totalorder %s14, 0
    %p35 = por %p33, %p34
    %p36 = scmp.ne.s32.totalorder %s22, %s23
    %p37 = scmp.eq.s32.totalorder %s15, 1
    %p38 = por %p36, %p37
    %p40 = scmp.ne.s32.totalorder %s23, %s39
    %p41 = scmp.eq.s32.totalorder %s15, 0
    %p42 = por %p40, %p41
    %s43 = ssub.s32 %s9, %s16
    %p44 = scmp.eq.s32.totalorder %s43, 0
    %s46 = sadd.s32 %s45, 1
    %s47 = scalar_select %p44, %s45, %s46
    %p50 = pneg %p44
    %p51 = scmp.eq.s32.totalorder %s9, 1
    %p52 = por %p50, %p51
    %p53 = scmp.ne.s32.totalorder %s45, %s48
    %p54 = scmp.eq.s32.totalorder %s9, 0
    %p55 = por %p53, %p54
    %p56 = scmp.ne.s32.totalorder %s45, %s48
    %p57 = scmp.eq.s32.totalorder %s14, 1
    %p58 = por %p56, %p57
    %p59 = scmp.ne.s32.totalorder %s48, %s49
    %p60 = scmp.eq.s32.totalorder %s14, 0
    %p61 = por %p59, %p60
    %p62 = scmp.ne.s32.totalorder %s48, %s49
    %p63 = scmp.eq.s32.totalorder %s15, 1
    %p64 = por %p62, %p63
    %p66 = scmp.ne.s32.totalorder %s49, %s65
    %p67 = scmp.eq.s32.totalorder %s15, 0
    %p68 = por %p66, %p67
    %s69 = ssub.s32 %s9, %s16
    %p70 = scmp.eq.s32.totalorder %s69, 0
    %s72 = sadd.s32 %s71, 1
    %s73 = scalar_select %p70, %s71, %s72
    %p76 = pneg %p70
    %p77 = scmp.eq.s32.totalorder %s9, 1
    %p78 = por %p76, %p77
    %p79 = scmp.ne.s32.totalorder %s71, %s74
    %p80 = scmp.eq.s32.totalorder %s9, 0
    %p81 = por %p79, %p80
    %p82 = scmp.ne.s32.totalorder %s71, %s74
    %p83 = scmp.eq.s32.totalorder %s14, 1
    %p84 = por %p82, %p83
    %p85 = scmp.ne.s32.totalorder %s74, %s75
    %p86 = scmp.eq.s32.totalorder %s14, 0
    %p87 = por %p85, %p86
    %p88 = scmp.ne.s32.totalorder %s74, %s75
    %p89 = scmp.eq.s32.totalorder %s15, 1
    %p90 = por %p88, %p89
    %p92 = scmp.ne.s32.totalorder %s75, %s91
    %p93 = scmp.eq.s32.totalorder %s15, 0
    %p94 = por %p92, %p93
    %s95 = ssub.s32 %s9, %s16
    %p96 = scmp.eq.s32.totalorder %s95, 0
    %s98 = sadd.s32 %s97, 1
    %s99 = scalar_select %p96, %s97, %s98
    %p102 = pneg %p96
    %p103 = scmp.eq.s32.totalorder %s9, 1
    %p104 = por %p102, %p103
    %p105 = scmp.ne.s32.totalorder %s97, %s100
    %p106 = scmp.eq.s32.totalorder %s9, 0
    %p107 = por %p105, %p106
    %p108 = scmp.ne.s32.totalorder %s97, %s100
    %p109 = scmp.eq.s32.totalorder %s14, 1
    %p110 = por %p108, %p109
    %p111 = scmp.ne.s32.totalorder %s100, %s101
    %p112 = scmp.eq.s32.totalorder %s14, 0
    %p113 = por %p111, %p112
    %p114 = scmp.ne.s32.totalorder %s100, %s101
    %p115 = scmp.eq.s32.totalorder %s15, 1
    %p116 = por %p114, %p115
    %p118 = scmp.ne.s32.totalorder %s101, %s117
    %p119 = scmp.eq.s32.totalorder %s15, 0
    %p120 = por %p118, %p119
    %p121 = scmp.le.s32.totalorder 1, %s9
    %p122 = scmp.lt.s32.totalorder %s9, 3
    %p123 = pnand %p121, %p122
    %p124 = pneg %p123
    // Predicated region
    $region9: #{rnd_forward.6} parent=5 // pred_check
      _
    $region10: #{rnd_forward.6} parent=5 // pred_check_branch
      %126 = sbr.rel (%p123) target = $region12
    $region11: #{rnd_forward.6} parent=5 // pred_region
      %s127 = ssub.s32 %s9, 1
    $region12: #{rnd_forward.6} parent=5 // pred_fallthru
      _
    %p128 = scmp.lt.s32.totalorder %s9, 2
    // Predicated region
    $region13: #{rnd_forward.6} parent=5 // pred_check
      %p129 = pneg %p128
    $region14: #{rnd_forward.6} parent=5 // pred_check_branch
      %131 = sbr.rel (%p129) target = $region16
    $region15: #{rnd_forward.6} parent=5 // pred_region
      // Predicated region
      $region17: #{rnd_forward.6} parent=15 // pred_check
        %p132 = pneg %p29
      $region18: #{rnd_forward.6} parent=15 // pred_check_branch
        %134 = sbr.rel (%p132) target = $region20
      $region19: #{rnd_forward.6} parent=15 // pred_region
        %p135 = scmp.lt.s32.totalorder %s9, 1
        %s136 = scalar_select %p135, %s9, 1
        %s137 = smul.addr %s136, 65
        %s138 = smul.addr %s137, 4
        %s139 = scalar_lea.vmem %s0, %s138
      $region20: #{rnd_forward.6} parent=15 // pred_fallthru
        _
      // Predicated region
      $region21: #{rnd_forward.6} parent=15 // pred_check
        %p140 = pneg %p55
      $region22: #{rnd_forward.6} parent=15 // pred_check_branch
        %142 = sbr.rel (%p140) target = $region24
      $region23: #{rnd_forward.6} parent=15 // pred_region
        %p143 = scmp.lt.s32.totalorder %s9, 1
        %s144 = scalar_select %p143, %s9, 1
        %s145 = smul.addr %s144, 40
        %s146 = smul.addr %s145, 4
        %s147 = scalar_lea.vmem %s1, %s146
      $region24: #{rnd_forward.6} parent=15 // pred_fallthru
        _
      // Predicated region
      $region25: #{rnd_forward.6} parent=15 // pred_check
        %p148 = pneg %p81
      $region26: #{rnd_forward.6} parent=15 // pred_check_branch
        %150 = sbr.rel (%p148) target = $region28
      $region27: #{rnd_forward.6} parent=15 // pred_region
        %p151 = scmp.lt.s32.totalorder %s9, 1
        %s152 = scalar_select %p151, %s9, 1
        %s153 = scalar_lea.vmem %s2, %s152
      $region28: #{rnd_forward.6} parent=15 // pred_fallthru
        _
    $region16: #{rnd_forward.6} parent=5 // pred_fallthru
      _
    %p154 = scmp.le.s32.totalorder 1, %s9
    %p155 = scmp.lt.s32.totalorder %s9, 3
    %p156 = pnand %p154, %p155
    %p157 = pneg %p156
    // Predicated region
    $region29: #{rnd_forward.6} parent=5 // pred_check
      _
    $region30: #{rnd_forward.6} parent=5 // pred_check_branch
      %159 = sbr.rel (%p156) target = $region32
    $region31: #{rnd_forward.6} parent=5 // pred_region
      %s160 = ssub.s32 %s9, 1
      %p161 = scmp.lt.s32.totalorder %s14, 1
      %s162 = scalar_select %p161, %s14, 1
      %s163 = smul.addr %s162, 65
      %s164 = smul.addr %s163, 4
      %s165 = scalar_lea.vmem %s0, %s164
      %p166 = pneg %p35
      %p167 = pneg %p32
      %p168 = scmp.lt.s32.totalorder %s14, 1
      %s169 = scalar_select %p168, %s14, 1
      %s170 = smul.addr %s169, 40
      %s171 = smul.addr %s170, 4
      %s172 = scalar_lea.vmem %s1, %s171
      %p173 = pneg %p61
      %p174 = pneg %p58
      %p175 = scmp.lt.s32.totalorder %s14, 1
      %s176 = scalar_select %p175, %s14, 1
      %s177 = scalar_lea.vmem %s2, %s176
      %p178 = pneg %p87
      %p179 = pneg %p84
      %p180 = pneg %p113
      %p181 = pneg %p110
      %p182 = scmp.lt.s32.totalorder %s14, 1
      %s183 = scalar_select %p182, %s14, 1
      %s184 = smul.addr %s183, 13
      %s185 = smul.addr %s184, 4
      %s186 = scalar_lea.vmem %s3, %s185
      %p187 = scmp.lt.s32.totalorder %s14, 1
      %s188 = scalar_select %p187, %s14, 1
      %s189 = smul.addr %s188, 65
      %s190 = smul.addr %s189, 4
      %s191 = scalar_lea.vmem %s0, %s190
      %p192 = scmp.lt.s32.totalorder %s14, 1
      %s193 = scalar_select %p192, %s14, 1
      %s194 = smul.addr %s193, 40
      %s195 = smul.addr %s194, 4
      %s196 = scalar_lea.vmem %s1, %s195
      %p197 = scmp.lt.s32.totalorder %s14, 1
      %s198 = scalar_select %p197, %s14, 1
      %s199 = scalar_lea.vmem %s2, %s198
      %p200 = scmp.lt.s32.totalorder %s14, 1
      %s201 = scalar_select %p200, %s14, 1
      %s202 = smul.addr %s201, 13
      %s203 = smul.addr %s202, 4
      %s204 = scalar_lea.vmem %s3, %s203
      %v206 = vld [vmem:[%s191] sm:$0xff]
      %v207 = vld [vmem:[%s191 + $0x8] sm:$0xff]
      %v208 = vld [vmem:[%s191 + $0x10] sm:$0xf]
      %v209 = vld [vmem:[%s191 + $0x14] sm:$0xff]
      %v210 = vld [vmem:[%s191 + $0x1c] sm:$0xff]
      %v211 = vld [vmem:[%s191 + $0x24] sm:$0xf]
      %v212 = vld [vmem:[%s191 + $0x28] sm:$0xff]
      %v213 = vld [vmem:[%s191 + $0x30] sm:$0xff]
      %v214 = vld [vmem:[%s191 + $0x38] sm:$0xf]
      %v215 = vld [vmem:[%s191 + $0x3c] sm:$0xff]
      %v216 = vld [vmem:[%s191 + $0x44] sm:$0xff]
      %v217 = vld [vmem:[%s191 + $0x4c] sm:$0xf]
      %v218 = vld [vmem:[%s191 + $0x50] sm:$0xff]
      %v219 = vld [vmem:[%s191 + $0x58] sm:$0xff]
      %v220 = vld [vmem:[%s191 + $0x60] sm:$0xf]
      %v221 = vld [vmem:[%s191 + $0x64] sm:$0xff]
      %v222 = vld [vmem:[%s191 + $0x6c] sm:$0xff]
      %v223 = vld [vmem:[%s191 + $0x74] sm:$0xf]
      %v224 = vld [vmem:[%s191 + $0x78] sm:$0xff]
      %v225 = vld [vmem:[%s191 + $0x80] sm:$0xff]
      %v226 = vld [vmem:[%s191 + $0x88] sm:$0xf]
      %v227 = vld [vmem:[%s191 + $0x8c] sm:$0xff]
      %v228 = vld [vmem:[%s191 + $0x94] sm:$0xff]
      %v229 = vld [vmem:[%s191 + $0x9c] sm:$0xf]
      %v230 = vld [vmem:[%s191 + $0xa0] sm:$0xff]
      %v231 = vld [vmem:[%s191 + $0xa8] sm:$0xff]
      %v232 = vld [vmem:[%s191 + $0xb0] sm:$0xf]
      %v233 = vld [vmem:[%s191 + $0xb4] sm:$0xff]
      %v234 = vld [vmem:[%s191 + $0xbc] sm:$0xff]
      %v235 = vld [vmem:[%s191 + $0xc4] sm:$0xf]
      %v236 = vld [vmem:[%s191 + $0xc8] sm:$0xff]
      %v237 = vld [vmem:[%s191 + $0xd0] sm:$0xff]
      %v238 = vld [vmem:[%s191 + $0xd8] sm:$0xf]
      %v239 = vld [vmem:[%s191 + $0xdc] sm:$0xff]
      %v240 = vld [vmem:[%s191 + $0xe4] sm:$0xff]
      %v241 = vld [vmem:[%s191 + $0xec] sm:$0xf]
      %v242 = vld [vmem:[%s191 + $0xf0] sm:$0x11]
      %v243 = vld [vmem:[%s191 + $0xf8] sm:$0x11]
      %v244 = vld [vmem:[%s191 + $0x100] sm:$0x1]
      %v245 = vld [vmem:[%s196] sm:$0xff]
      %v246 = vld [vmem:[%s196 + $0x8] sm:$0xff]
      %v247 = vld [vmem:[%s196 + $0x10] sm:$0xf]
      %v248 = vld [vmem:[%s196 + $0x14] sm:$0xff]
      %v249 = vld [vmem:[%s196 + $0x1c] sm:$0xff]
      %v250 = vld [vmem:[%s196 + $0x24] sm:$0xf]
      %v251 = vld [vmem:[%s196 + $0x28] sm:$0xff]
      %v252 = vld [vmem:[%s196 + $0x30] sm:$0xff]
      %v253 = vld [vmem:[%s196 + $0x38] sm:$0xf]
      %v254 = vld [vmem:[%s196 + $0x3c] sm:$0xff]
      %v255 = vld [vmem:[%s196 + $0x44] sm:$0xff]
      %v256 = vld [vmem:[%s196 + $0x4c] sm:$0xf]
      %v257 = vld [vmem:[%s196 + $0x50] sm:$0xff]
      %v258 = vld [vmem:[%s196 + $0x58] sm:$0xff]
      %v259 = vld [vmem:[%s196 + $0x60] sm:$0xf]
      %v260 = vld [vmem:[%s196 + $0x64] sm:$0xff]
      %v261 = vld [vmem:[%s196 + $0x6c] sm:$0xff]
      %v262 = vld [vmem:[%s196 + $0x74] sm:$0xf]
      %v263 = vld [vmem:[%s196 + $0x78] sm:$0xff]
      %v264 = vld [vmem:[%s196 + $0x80] sm:$0xff]
      %v265 = vld [vmem:[%s196 + $0x88] sm:$0xf]
      %v266 = vld [vmem:[%s196 + $0x8c] sm:$0xff]
      %v267 = vld [vmem:[%s196 + $0x94] sm:$0xff]
      %v268 = vld [vmem:[%s196 + $0x9c] sm:$0xf]
      %v269 = vld [vmem:[%s199] sm:$0x1]
      %v271 = vlaneseq
      %v272 = vshrl.u32 %v271, 7
      %v273 = vsub.s32 0, %v272
      %v274 = vrot.slane %v269, %v273
      %v315 = vunpack.c.l.b16 %v206
      %v316 = vunpack.c.h.b16 %v206
      %v317 = vunpack.c.l.b16 %v207
      %v318 = vunpack.c.h.b16 %v207
      %v319 = vunpack.c.l.b16 %v208
      %v320 = vunpack.c.l.b16 %v209
      %v321 = vunpack.c.h.b16 %v209
      %v322 = vunpack.c.l.b16 %v210
      %v323 = vunpack.c.h.b16 %v210
      %v324 = vunpack.c.l.b16 %v211
      %v325 = vunpack.c.l.b16 %v212
      %v326 = vunpack.c.h.b16 %v212
      %v327 = vunpack.c.l.b16 %v213
      %v328 = vunpack.c.h.b16 %v213
      %v329 = vunpack.c.l.b16 %v214
      %v330 = vunpack.c.l.b16 %v215
      %v331 = vunpack.c.h.b16 %v215
      %v332 = vunpack.c.l.b16 %v216
      %v333 = vunpack.c.h.b16 %v216
      %v334 = vunpack.c.l.b16 %v217
      %v335 = vunpack.c.l.b16 %v218
      %v336 = vunpack.c.h.b16 %v218
      %v337 = vunpack.c.l.b16 %v219
      %v338 = vunpack.c.h.b16 %v219
      %v339 = vunpack.c.l.b16 %v220
      %v340 = vunpack.c.l.b16 %v221
      %v341 = vunpack.c.h.b16 %v221
      %v342 = vunpack.c.l.b16 %v222
      %v343 = vunpack.c.h.b16 %v222
      %v344 = vunpack.c.l.b16 %v223
      %v345 = vunpack.c.l.b16 %v224
      %v346 = vunpack.c.h.b16 %v224
      %v347 = vunpack.c.l.b16 %v225
      %v348 = vunpack.c.h.b16 %v225
      %v349 = vunpack.c.l.b16 %v226
      %v350 = vunpack.c.l.b16 %v227
      %v351 = vunpack.c.h.b16 %v227
      %v352 = vunpack.c.l.b16 %v228
      %v353 = vunpack.c.h.b16 %v228
      %v354 = vunpack.c.l.b16 %v229
      %v355 = vunpack.c.l.b16 %v230
      %v356 = vunpack.c.h.b16 %v230
      %v357 = vunpack.c.l.b16 %v231
      %v358 = vunpack.c.h.b16 %v231
      %v359 = vunpack.c.l.b16 %v232
      %v360 = vunpack.c.l.b16 %v233
      %v361 = vunpack.c.h.b16 %v233
      %v362 = vunpack.c.l.b16 %v234
      %v363 = vunpack.c.h.b16 %v234
      %v364 = vunpack.c.l.b16 %v235
      %v365 = vunpack.c.l.b16 %v236
      %v366 = vunpack.c.h.b16 %v236
      %v367 = vunpack.c.l.b16 %v237
      %v368 = vunpack.c.h.b16 %v237
      %v369 = vunpack.c.l.b16 %v238
      %v370 = vunpack.c.l.b16 %v239
      %v371 = vunpack.c.h.b16 %v239
      %v372 = vunpack.c.l.b16 %v240
      %v373 = vunpack.c.h.b16 %v240
      %v374 = vunpack.c.l.b16 %v241
      %v375 = vunpack.c.l.b16 %v242
      %v376 = vunpack.c.h.b16 %v242
      %v377 = vunpack.c.l.b16 %v243
      %v378 = vunpack.c.h.b16 %v243
      %v379 = vunpack.c.l.b16 %v244
      %v380 = vpack.c.b16 %v320, %v315
      %v381 = vpack.c.b16 %v321, %v316
      %v382 = vpack.c.b16 %v322, %v317
      %v383 = vpack.c.b16 %v323, %v318
      %v384 = vpack.c.b16 %v324, %v319
      %v385 = vpack.c.b16 %v330, %v325
      %v386 = vpack.c.b16 %v331, %v326
      %v387 = vpack.c.b16 %v332, %v327
      %v388 = vpack.c.b16 %v333, %v328
      %v389 = vpack.c.b16 %v334, %v329
      %v390 = vpack.c.b16 %v340, %v335
      %v391 = vpack.c.b16 %v341, %v336
      %v392 = vpack.c.b16 %v342, %v337
      %v393 = vpack.c.b16 %v343, %v338
      %v394 = vpack.c.b16 %v344, %v339
      %v395 = vpack.c.b16 %v350, %v345
      %v396 = vpack.c.b16 %v351, %v346
      %v397 = vpack.c.b16 %v352, %v347
      %v398 = vpack.c.b16 %v353, %v348
      %v399 = vpack.c.b16 %v354, %v349
      %v400 = vpack.c.b16 %v360, %v355
      %v401 = vpack.c.b16 %v361, %v356
      %v402 = vpack.c.b16 %v362, %v357
      %v403 = vpack.c.b16 %v363, %v358
      %v404 = vpack.c.b16 %v364, %v359
      %v405 = vpack.c.b16 %v370, %v365
      %v406 = vpack.c.b16 %v371, %v366
      %v407 = vpack.c.b16 %v372, %v367
      %v408 = vpack.c.b16 %v373, %v368
      %v409 = vpack.c.b16 %v374, %v369
      %v410 = vpack.c.b16 %v375, %v375
      %v411 = vpack.c.b16 %v376, %v376
      %v412 = vpack.c.b16 %v377, %v377
      %v413 = vpack.c.b16 %v378, %v378
      %v414 = vpack.c.b16 %v379, %v379
      %v467 = vunpack.c.l.b16 %v245
      %v468 = vunpack.c.h.b16 %v245
      %v469 = vunpack.c.l.b16 %v246
      %v470 = vunpack.c.h.b16 %v246
      %v471 = vunpack.c.l.b16 %v247
      %v472 = vunpack.c.l.b16 %v248
      %v473 = vunpack.c.h.b16 %v248
      %v474 = vunpack.c.l.b16 %v249
      %v475 = vunpack.c.h.b16 %v249
      %v476 = vunpack.c.l.b16 %v250
      %v477 = vunpack.c.l.b16 %v251
      %v478 = vunpack.c.h.b16 %v251
      %v479 = vunpack.c.l.b16 %v252
      %v480 = vunpack.c.h.b16 %v252
      %v481 = vunpack.c.l.b16 %v253
      %v482 = vunpack.c.l.b16 %v254
      %v483 = vunpack.c.h.b16 %v254
      %v484 = vunpack.c.l.b16 %v255
      %v485 = vunpack.c.h.b16 %v255
      %v486 = vunpack.c.l.b16 %v256
      %v487 = vunpack.c.l.b16 %v257
      %v488 = vunpack.c.h.b16 %v257
      %v489 = vunpack.c.l.b16 %v258
      %v490 = vunpack.c.h.b16 %v258
      %v491 = vunpack.c.l.b16 %v259
      %v492 = vunpack.c.l.b16 %v260
      %v493 = vunpack.c.h.b16 %v260
      %v494 = vunpack.c.l.b16 %v261
      %v495 = vunpack.c.h.b16 %v261
      %v496 = vunpack.c.l.b16 %v262
      %v497 = vunpack.c.l.b16 %v263
      %v498 = vunpack.c.h.b16 %v263
      %v499 = vunpack.c.l.b16 %v264
      %v500 = vunpack.c.h.b16 %v264
      %v501 = vunpack.c.l.b16 %v265
      %v502 = vunpack.c.l.b16 %v266
      %v503 = vunpack.c.h.b16 %v266
      %v504 = vunpack.c.l.b16 %v267
      %v505 = vunpack.c.h.b16 %v267
      %v506 = vunpack.c.l.b16 %v268
      %v507 = vpack.c.b16 %v472, %v467
      %v508 = vpack.c.b16 %v473, %v468
      %v509 = vpack.c.b16 %v474, %v469
      %v510 = vpack.c.b16 %v475, %v470
      %v511 = vpack.c.b16 %v476, %v471
      %v512 = vpack.c.b16 %v482, %v477
      %v513 = vpack.c.b16 %v483, %v478
      %v514 = vpack.c.b16 %v484, %v479
      %v515 = vpack.c.b16 %v485, %v480
      %v516 = vpack.c.b16 %v486, %v481
      %v517 = vpack.c.b16 %v492, %v487
      %v518 = vpack.c.b16 %v493, %v488
      %v519 = vpack.c.b16 %v494, %v489
      %v520 = vpack.c.b16 %v495, %v490
      %v521 = vpack.c.b16 %v496, %v491
      %v522 = vpack.c.b16 %v502, %v497
      %v523 = vpack.c.b16 %v503, %v498
      %v524 = vpack.c.b16 %v504, %v499
      %v525 = vpack.c.b16 %v505, %v500
      %v526 = vpack.c.b16 %v506, %v501
      %vm543 = vcmask 523264
      %v545 = vsel %vm543, %v384, 0
      %v548 = vsel %vm543, %v389, 0
      %v551 = vsel %vm543, %v394, 0
      %v554 = vsel %vm543, %v399, 0
      %v557 = vsel %vm543, %v404, 0
      %v560 = vsel %vm543, %v409, 0
      %v563 = vsel %vm543, %v414, 0
      %v566 = vsel %vm543, %v511, 0
      %v569 = vsel %vm543, %v516, 0
      %v572 = vsel %vm543, %v521, 0
      %v575 = vsel %vm543, %v526, 0
      %577 = vmatprep.subr.bf16.mxu0 %v508
      %578 = vmatpush1.bf16.xpose.msra.mxu0 %v507
      %579 = vmatprep.subr.bf16.mxu0 %v513
      %580 = vmatpush1.bf16.xpose.msra.mxu0 %v512
      %581 = vmatprep.subr.bf16.mxu0 %v518
      %582 = vmatpush1.bf16.xpose.msra.mxu0 %v517
      %583 = vmatprep.subr.bf16.mxu0 %v523
      %584 = vmatpush1.bf16.xpose.msra.mxu0 %v522
      %585 = vmatprep.subr.bf16.mxu0 0
      %586 = vmatpush1.bf16.xpose.msra.mxu0 0
      %587 = vmatprep.subr.bf16.mxu0 0
      %588 = vmatpush1.bf16.xpose.msra.mxu0 0
      %589 = vmatprep.subr.bf16.mxu0 0
      %590 = vmatpush1.bf16.xpose.msra.mxu0 0
      %591 = vmatprep.subr.bf16.mxu0 0
      %592 = vmatpush1.bf16.xpose.msra.mxu0 0
      %593 = vmatprep.subr.bf16.mxu0 0
      %594 = vmatpush1.bf16.xpose.msra.mxu0 0
      %595 = vmatprep.subr.bf16.mxu0 0
      %596 = vmatpush1.bf16.xpose.msra.mxu0 0
      %597 = vmatprep.subr.bf16.mxu0 0
      %598 = vmatpush1.bf16.xpose.msra.mxu0 0
      %599 = vmatprep.subr.bf16.mxu0 0
      %600 = vmatpush1.bf16.xpose.msra.mxu0 0
      %601 = vmatprep.subr.bf16.mxu0 0
      %602 = vmatpush1.bf16.xpose.msra.mxu0 0
      %603 = vmatprep.subr.bf16.mxu0 0
      %604 = vmatpush1.bf16.xpose.msra.mxu0 0
      %605 = vmatprep.subr.bf16.mxu0 0
      %606 = vmatpush1.bf16.xpose.msra.mxu0 0
      %607 = vmatprep.subr.bf16.mxu0 0
      %608 = vmatpush1.bf16.xpose.msra.mxu0 0
      %609 = vmatprep.mubr.bf16.mxu0 %v381
      %610 = vmatmul.mubr.bf16.gmra.mrb[0].mxu0 %v380
      %v611 = vpop.f32.mrb[0].mxu0
      %v612 = vadd.f32 %v274, %v611
      %v613 = vpop.f32.mrb[0].mxu0
      %v614 = vpop.f32.mrb[0].mxu0
      %v615 = vadd.f32 %v274, %v614
      %v616 = vpop.f32.mrb[0].mxu0
      %617 = vmatprep.mubr.bf16.mxu0 %v386
      %618 = vmatmul.mubr.bf16.gmra.mrb[0].mxu0 %v385
      %v619 = vpop.f32.mrb[0].mxu0
      %v620 = vadd.f32 %v274, %v619
      %v621 = vpop.f32.mrb[0].mxu0
      %v622 = vpop.f32.mrb[0].mxu0
      %v623 = vadd.f32 %v274, %v622
      %v624 = vpop.f32.mrb[0].mxu0
      %625 = vmatprep.mubr.bf16.mxu0 %v391
      %626 = vmatmul.mubr.bf16.gmra.mrb[0].mxu0 %v390
      %v627 = vpop.f32.mrb[0].mxu0
      %v628 = vadd.f32 %v274, %v627
      %v629 = vpop.f32.mrb[0].mxu0
      %v630 = vpop.f32.mrb[0].mxu0
      %v631 = vadd.f32 %v274, %v630
      %v632 = vpop.f32.mrb[0].mxu0
      %633 = vmatprep.mubr.bf16.mxu0 %v396
      %634 = vmatmul.mubr.bf16.gmra.mrb[0].mxu0 %v395
      %v635 = vpop.f32.mrb[0].mxu0
      %v636 = vadd.f32 %v274, %v635
      %v637 = vpop.f32.mrb[0].mxu0
      %v638 = vpop.f32.mrb[0].mxu0
      %v639 = vadd.f32 %v274, %v638
      %v640 = vpop.f32.mrb[0].mxu0
      %641 = vmatprep.mubr.bf16.mxu0 %v401
      %642 = vmatmul.mubr.bf16.gmra.mrb[0].mxu0 %v400
      %v643 = vpop.f32.mrb[0].mxu0
      %v644 = vadd.f32 %v274, %v643
      %v645 = vpop.f32.mrb[0].mxu0
      %v646 = vpop.f32.mrb[0].mxu0
      %v647 = vadd.f32 %v274, %v646
      %v648 = vpop.f32.mrb[0].mxu0
      %649 = vmatprep.mubr.bf16.mxu0 %v406
      %650 = vmatmul.mubr.bf16.gmra.mrb[0].mxu0 %v405
      %v651 = vpop.f32.mrb[0].mxu0
      %v652 = vadd.f32 %v274, %v651
      %v653 = vpop.f32.mrb[0].mxu0
      %v654 = vpop.f32.mrb[0].mxu0
      %v655 = vadd.f32 %v274, %v654
      %v656 = vpop.f32.mrb[0].mxu0
      %657 = vmatprep.mubr.bf16.mxu0 %v411
      %658 = vmatmul.mubr.bf16.gmra.mrb[0].mxu0 %v410
      %v659 = vpop.f32.mrb[0].mxu0
      %v660 = vadd.f32 %v274, %v659
      %v661 = vpop.f32.mrb[0].mxu0
      %v662 = vpop.f32.mrb[0].mxu0
      %v663 = vpop.f32.mrb[0].mxu0
      %664 = vdwg.mxu0
      %665 = vmatprep.subr.bf16.mxu0 %v510
      %666 = vmatpush1.bf16.xpose.msra.mxu0 %v509
      %667 = vmatprep.subr.bf16.mxu0 %v515
      %668 = vmatpush1.bf16.xpose.msra.mxu0 %v514
      %669 = vmatprep.subr.bf16.mxu0 %v520
      %670 = vmatpush1.bf16.xpose.msra.mxu0 %v519
      %671 = vmatprep.subr.bf16.mxu0 %v525
      %672 = vmatpush1.bf16.xpose.msra.mxu0 %v524
      %673 = vmatprep.subr.bf16.mxu0 0
      %674 = vmatpush1.bf16.xpose.msra.mxu0 0
      %675 = vmatprep.subr.bf16.mxu0 0
      %676 = vmatpush1.bf16.xpose.msra.mxu0 0
      %677 = vmatprep.subr.bf16.mxu0 0
      %678 = vmatpush1.bf16.xpose.msra.mxu0 0
      %679 = vmatprep.subr.bf16.mxu0 0
      %680 = vmatpush1.bf16.xpose.msra.mxu0 0
      %681 = vmatprep.subr.bf16.mxu0 0
      %682 = vmatpush1.bf16.xpose.msra.mxu0 0
      %683 = vmatprep.subr.bf16.mxu0 0
      %684 = vmatpush1.bf16.xpose.msra.mxu0 0
      %685 = vmatprep.subr.bf16.mxu0 0
      %686 = vmatpush1.bf16.xpose.msra.mxu0 0
      %687 = vmatprep.subr.bf16.mxu0 0
      %688 = vmatpush1.bf16.xpose.msra.mxu0 0
      %689 = vmatprep.subr.bf16.mxu0 0
      %690 = vmatpush1.bf16.xpose.msra.mxu0 0
      %691 = vmatprep.subr.bf16.mxu0 0
      %692 = vmatpush1.bf16.xpose.msra.mxu0 0
      %693 = vmatprep.subr.bf16.mxu0 0
      %694 = vmatpush1.bf16.xpose.msra.mxu0 0
      %695 = vmatprep.subr.bf16.mxu0 0
      %696 = vmatpush1.bf16.xpose.msra.mxu0 0
      %697 = vmatprep.mubr.bf16.mxu0 %v383
      %698 = vmatmul.mubr.bf16.gmra.mrb[0].mxu0 %v382
      %v699 = vpop.f32.mrb[0].mxu0
      %v700 = vadd.f32 %v612, %v699
      %v701 = vpop.f32.mrb[0].mxu0
      %v702 = vpop.f32.mrb[0].mxu0
      %v703 = vadd.f32 %v615, %v702
      %v704 = vpop.f32.mrb[0].mxu0
      %705 = vmatprep.mubr.bf16.mxu0 %v388
      %706 = vmatmul.mubr.bf16.gmra.mrb[0].mxu0 %v387
      %v707 = vpop.f32.mrb[0].mxu0
      %v708 = vadd.f32 %v620, %v707
      %v709 = vpop.f32.mrb[0].mxu0
      %v710 = vpop.f32.mrb[0].mxu0
      %v711 = vadd.f32 %v623, %v710
      %v712 = vpop.f32.mrb[0].mxu0
      %713 = vmatprep.mubr.bf16.mxu0 %v393
      %714 = vmatmul.mubr.bf16.gmra.mrb[0].mxu0 %v392
      %v715 = vpop.f32.mrb[0].mxu0
      %v716 = vadd.f32 %v628, %v715
      %v717 = vpop.f32.mrb[0].mxu0
      %v718 = vpop.f32.mrb[0].mxu0
      %v719 = vadd.f32 %v631, %v718
      %v720 = vpop.f32.mrb[0].mxu0
      %721 = vmatprep.mubr.bf16.mxu0 %v398
      %722 = vmatmul.mubr.bf16.gmra.mrb[0].mxu0 %v397
      %v723 = vpop.f32.mrb[0].mxu0
      %v724 = vadd.f32 %v636, %v723
      %v725 = vpop.f32.mrb[0].mxu0
      %v726 = vpop.f32.mrb[0].mxu0
      %v727 = vadd.f32 %v639, %v726
      %v728 = vpop.f32.mrb[0].mxu0
      %729 = vmatprep.mubr.bf16.mxu0 %v403
      %730 = vmatmul.mubr.bf16.gmra.mrb[0].mxu0 %v402
      %v731 = vpop.f32.mrb[0].mxu0
      %v732 = vadd.f32 %v644, %v731
      %v733 = vpop.f32.mrb[0].mxu0
      %v734 = vpop.f32.mrb[0].mxu0
      %v735 = vadd.f32 %v647, %v734
      %v736 = vpop.f32.mrb[0].mxu0
      %737 = vmatprep.mubr.bf16.mxu0 %v408
      %738 = vmatmul.mubr.bf16.gmra.mrb[0].mxu0 %v407
      %v739 = vpop.f32.mrb[0].mxu0
      %v740 = vadd.f32 %v652, %v739
      %v741 = vpop.f32.mrb[0].mxu0
      %v742 = vpop.f32.mrb[0].mxu0
      %v743 = vadd.f32 %v655, %v742
      %v744 = vpop.f32.mrb[0].mxu0
      %745 = vmatprep.mubr.bf16.mxu0 %v413
      %746 = vmatmul.mubr.bf16.gmra.mrb[0].mxu0 %v412
      %v747 = vpop.f32.mrb[0].mxu0
      %v748 = vadd.f32 %v660, %v747
      %v749 = vpop.f32.mrb[0].mxu0
      %v750 = vpop.f32.mrb[0].mxu0
      %v751 = vpop.f32.mrb[0].mxu0
      %752 = vdwg.mxu0
      %753 = vmatprep.subr.bf16.mxu0 0
      %754 = vmatpush1.bf16.xpose.msra.mxu0 %v566
      %755 = vmatprep.subr.bf16.mxu0 0
      %756 = vmatpush1.bf16.xpose.msra.mxu0 %v569
      %757 = vmatprep.subr.bf16.mxu0 0
      %758 = vmatpush1.bf16.xpose.msra.mxu0 %v572
      %759 = vmatprep.subr.bf16.mxu0 0
      %760 = vmatpush1.bf16.xpose.msra.mxu0 %v575
      %761 = vmatprep.subr.bf16.mxu0 0
      %762 = vmatpush1.bf16.xpose.msra.mxu0 0
      %763 = vmatprep.subr.bf16.mxu0 0
      %764 = vmatpush1.bf16.xpose.msra.mxu0 0
      %765 = vmatprep.subr.bf16.mxu0 0
      %766 = vmatpush1.bf16.xpose.msra.mxu0 0
      %767 = vmatprep.subr.bf16.mxu0 0
      %768 = vmatpush1.bf16.xpose.msra.mxu0 0
      %769 = vmatprep.subr.bf16.mxu0 0
      %770 = vmatpush1.bf16.xpose.msra.mxu0 0
      %771 = vmatprep.subr.bf16.mxu0 0
      %772 = vmatpush1.bf16.xpose.msra.mxu0 0
      %773 = vmatprep.subr.bf16.mxu0 0
      %774 = vmatpush1.bf16.xpose.msra.mxu0 0
      %775 = vmatprep.subr.bf16.mxu0 0
      %776 = vmatpush1.bf16.xpose.msra.mxu0 0
      %777 = vmatprep.subr.bf16.mxu0 0
      %778 = vmatpush1.bf16.xpose.msra.mxu0 0
      %779 = vmatprep.subr.bf16.mxu0 0
      %780 = vmatpush1.bf16.xpose.msra.mxu0 0
      %781 = vmatprep.subr.bf16.mxu0 0
      %782 = vmatpush1.bf16.xpose.msra.mxu0 0
      %783 = vmatprep.subr.bf16.mxu0 0
      %784 = vmatpush1.bf16.xpose.msra.mxu0 0
      %785 = vmatprep.mubr.bf16.mxu0 0
      %786 = vmatmul.mubr.bf16.gmra.mrb[0].mxu0 %v545
      %v787 = vpop.f32.mrb[0].mxu0
      %v788 = vadd.f32 %v700, %v787
      %v789 = vpop.f32.mrb[0].mxu0
      %v790 = vpop.f32.mrb[0].mxu0
      %v791 = vadd.f32 %v703, %v790
      %v792 = vpop.f32.mrb[0].mxu0
      %793 = vmatprep.mubr.bf16.mxu0 0
      %794 = vmatmul.mubr.bf16.gmra.mrb[0].mxu0 %v548
      %v795 = vpop.f32.mrb[0].mxu0
      %v796 = vadd.f32 %v708, %v795
      %v797 = vpop.f32.mrb[0].mxu0
      %v798 = vpop.f32.mrb[0].mxu0
      %v799 = vadd.f32 %v711, %v798
      %v800 = vpop.f32.mrb[0].mxu0
      %801 = vmatprep.mubr.bf16.mxu0 0
      %802 = vmatmul.mubr.bf16.gmra.mrb[0].mxu0 %v551
      %v803 = vpop.f32.mrb[0].mxu0
      %v804 = vadd.f32 %v716, %v803
      %v805 = vpop.f32.mrb[0].mxu0
      %v806 = vpop.f32.mrb[0].mxu0
      %v807 = vadd.f32 %v719, %v806
      %v808 = vpop.f32.mrb[0].mxu0
      %809 = vmatprep.mubr.bf16.mxu0 0
      %810 = vmatmul.mubr.bf16.gmra.mrb[0].mxu0 %v554
      %v811 = vpop.f32.mrb[0].mxu0
      %v812 = vadd.f32 %v724, %v811
      %v813 = vpop.f32.mrb[0].mxu0
      %v814 = vpop.f32.mrb[0].mxu0
      %v815 = vadd.f32 %v727, %v814
      %v816 = vpop.f32.mrb[0].mxu0
      %817 = vmatprep.mubr.bf16.mxu0 0
      %818 = vmatmul.mubr.bf16.gmra.mrb[0].mxu0 %v557
      %v819 = vpop.f32.mrb[0].mxu0
      %v820 = vadd.f32 %v732, %v819
      %v821 = vpop.f32.mrb[0].mxu0
      %v822 = vpop.f32.mrb[0].mxu0
      %v823 = vadd.f32 %v735, %v822
      %v824 = vpop.f32.mrb[0].mxu0
      %825 = vmatprep.mubr.bf16.mxu0 0
      %826 = vmatmul.mubr.bf16.gmra.mrb[0].mxu0 %v560
      %v827 = vpop.f32.mrb[0].mxu0
      %v828 = vadd.f32 %v740, %v827
      %v829 = vpop.f32.mrb[0].mxu0
      %v830 = vpop.f32.mrb[0].mxu0
      %v831 = vadd.f32 %v743, %v830
      %v832 = vpop.f32.mrb[0].mxu0
      %833 = vmatprep.mubr.bf16.mxu0 0
      %834 = vmatmul.mubr.bf16.gmra.mrb[0].mxu0 %v563
      %v835 = vpop.f32.mrb[0].mxu0
      %v836 = vadd.f32 %v748, %v835
      %v837 = vpop.f32.mrb[0].mxu0
      %v838 = vpop.f32.mrb[0].mxu0
      %v839 = vpop.f32.mrb[0].mxu0
      %840 = vdwg.mxu0
      %v841 = vmax.f32 %v788, 0.0
      %v842 = vmax.f32 %v791, 0.0
      %v843 = vmax.f32 %v796, 0.0
      %v844 = vmax.f32 %v799, 0.0
      %v845 = vmax.f32 %v804, 0.0
      %v846 = vmax.f32 %v807, 0.0
      %v847 = vmax.f32 %v812, 0.0
      %v848 = vmax.f32 %v815, 0.0
      %v849 = vmax.f32 %v820, 0.0
      %v850 = vmax.f32 %v823, 0.0
      %v851 = vmax.f32 %v828, 0.0
      %v852 = vmax.f32 %v831, 0.0
      %v853 = vmax.f32 %v836, 0.0
      %v854 = vpack.c.bf16 %v842, %v841
      %v855 = vpack.c.bf16 %v844, %v843
      %v856 = vpack.c.bf16 %v846, %v845
      %v857 = vpack.c.bf16 %v848, %v847
      %v858 = vpack.c.bf16 %v850, %v849
      %v859 = vpack.c.bf16 %v852, %v851
      %v860 = vpack.c.bf16 %v853, %v853
      %v868 = vunpack.c.l.b16 %v854
      %v869 = vunpack.c.h.b16 %v854
      %v870 = vunpack.c.l.b16 %v855
      %v871 = vunpack.c.h.b16 %v855
      %v872 = vunpack.c.l.b16 %v856
      %v873 = vunpack.c.h.b16 %v856
      %v874 = vunpack.c.l.b16 %v857
      %v875 = vunpack.c.h.b16 %v857
      %v876 = vunpack.c.l.b16 %v858
      %v877 = vunpack.c.h.b16 %v858
      %v878 = vunpack.c.l.b16 %v859
      %v879 = vunpack.c.h.b16 %v859
      %v880 = vunpack.c.l.b16 %v860
      %v881 = vpack.c.b16 %v868, %v868
      %v882 = vpack.c.b16 %v869, %v869
      %v883 = vpack.c.b16 %v870, %v870
      %v884 = vpack.c.b16 %v871, %v871
      %v885 = vpack.c.b16 %v872, %v872
      %v886 = vpack.c.b16 %v873, %v873
      %v887 = vpack.c.b16 %v874, %v874
      %v888 = vpack.c.b16 %v875, %v875
      %v889 = vpack.c.b16 %v876, %v876
      %v890 = vpack.c.b16 %v877, %v877
      %v891 = vpack.c.b16 %v878, %v878
      %v892 = vpack.c.b16 %v879, %v879
      %v893 = vpack.c.b16 %v880, %v880
      %vm907 = vcmask 519168
      %908 = vst.msk [vmem:[%s204] sm:$0xf] %vm907, %v881
      %909 = vst.msk [vmem:[%s204 + $0x4] sm:$0xf] %vm907, %v882
      %910 = vst.msk [vmem:[%s204 + $0x8] sm:$0xf] %vm907, %v883
      %911 = vst.msk [vmem:[%s204 + $0xc] sm:$0xf] %vm907, %v884
      %912 = vst.msk [vmem:[%s204 + $0x10] sm:$0xf] %vm907, %v885
      %913 = vst.msk [vmem:[%s204 + $0x14] sm:$0xf] %vm907, %v886
      %914 = vst.msk [vmem:[%s204 + $0x18] sm:$0xf] %vm907, %v887
      %915 = vst.msk [vmem:[%s204 + $0x1c] sm:$0xf] %vm907, %v888
      %916 = vst.msk [vmem:[%s204 + $0x20] sm:$0xf] %vm907, %v889
      %917 = vst.msk [vmem:[%s204 + $0x24] sm:$0xf] %vm907, %v890
      %918 = vst.msk [vmem:[%s204 + $0x28] sm:$0xf] %vm907, %v891
      %919 = vst.msk [vmem:[%s204 + $0x2c] sm:$0xf] %vm907, %v892
      %vm920 = vcmask 516096
      %921 = vst.msk [vmem:[%s204 + $0x30] sm:$0x1] %vm920, %v893
      %p922 = scmp.lt.s32.totalorder %s14, 1
      %s923 = scalar_select %p922, %s14, 1
      %s924 = smul.addr %s923, 13
      %s925 = smul.addr %s924, 4
      %s926 = scalar_lea.vmem %s3, %s925
      // Predicated region
      $region33: #{rnd_forward.6} parent=31 // pred_check
        %p927 = pneg %p110
      $region34: #{rnd_forward.6} parent=31 // pred_check_branch
        %929 = sbr.rel (%p927) target = $region36
      $region35: #{rnd_forward.6} parent=31 // pred_region
        _
      $region36: #{rnd_forward.6} parent=31 // pred_fallthru
        _
    $region32: #{rnd_forward.6} parent=5 // pred_fallthru
      _
    %p930 = scmp.le.s32.totalorder 2, %s9
    // Predicated region
    $region37: #{rnd_forward.6} parent=5 // pred_check
      %p931 = pneg %p930
    $region38: #{rnd_forward.6} parent=5 // pred_check_branch
      %933 = sbr.rel (%p931) target = $region40
    $region39: #{rnd_forward.6} parent=5 // pred_region
      %s934 = ssub.s32 %s9, 2
      // Predicated region
      $region41: #{rnd_forward.6} parent=39 // pred_check
        %p935 = pneg %p116
      $region42: #{rnd_forward.6} parent=39 // pred_check_branch
        %937 = sbr.rel (%p935) target = $region44
      $region43: #{rnd_forward.6} parent=39 // pred_region
        %p938 = scmp.lt.s32.totalorder %s15, 1
        %s939 = scalar_select %p938, %s15, 1
        %s940 = smul.addr %s939, 13
        %s941 = smul.addr %s940, 4
        %s942 = scalar_lea.vmem %s3, %s941
      $region44: #{rnd_forward.6} parent=39 // pred_fallthru
        _
    $region40: #{rnd_forward.6} parent=5 // pred_fallthru
      _
  $region6: #{rnd_forward.6} parent=0 // loop_footer
    %s13 = sadd.s32 1, %s9
  $region7: #{rnd_forward.6} parent=0 // loop_footer_branch
    %8 = sbr.rel target = $region3
  $region8: #{rnd_forward.6} parent=0 // loop_exit
    _

// kernel: rnd_forward.7
$region0: #{rnd_forward.7}
  #allocation0 [shape = 'u32[]', space=smem, size = 0x4, offset = 0x4, fixed_abs, tag = 'smem constant byte address 0x4 - core index']
  #allocation1 [shape = 'u32[144,128]{1,0:T(1,128)}', space=vmem, size = 0x12000, scoped, tag = 'internal scratch']
  %s0 = inlined_call_operand.vmem [shape: bf16[2,2,3136], index: 0, kind: input, shape index: {}]
  %s1 = inlined_call_operand.vmem [shape: bf16[2,64,3136], index: 1, kind: input, shape index: {}]
  %s2 = inlined_call_operand.vmem [shape: f32[2,1,64], index: 2, kind: input, shape index: {}]
  %s3 = inlined_call_operand.vmem [shape: f32[2,2,64], index: 3, kind: output, shape index: {}]
  %s4 = sld [smem:[#allocation0]]
  $region45: #{rnd_forward.7} parent=0
    _
  %s6 = ssub.s32 1, %s4
  %s7 = scalar_select 0, %s6, %s4
  loop: start=0, step=1, limit=4
  $region2: #{rnd_forward.7} parent=0 // loop_pre_header
    _
  $region3: #{rnd_forward.7} parent=0 // loop_header
    %s9 = sphi 0, %s13
    %p10 = scmp.ge.s32.totalorder %s9, 4
    %s19 = sphi 0, %s21
    %s22 = sphi 0, %s19
    %s23 = sphi 0, %s22
    %s39 = sphi 0, %s23
    %s45 = sphi 0, %s47
    %s48 = sphi 0, %s45
    %s49 = sphi 0, %s48
    %s65 = sphi 0, %s49
    %s71 = sphi 0, %s73
    %s74 = sphi 0, %s71
    %s75 = sphi 0, %s74
    %s91 = sphi 0, %s75
    %s97 = sphi 0, %s99
    %s100 = sphi 0, %s97
    %s101 = sphi 0, %s100
    %s117 = sphi 0, %s101
  $region4: #{rnd_forward.7} parent=0 // loop_header_branch
    %12 = sbr.rel (%p10) target = $region8
  $region5: #{rnd_forward.7} parent=0 // loop_body
    %s14 = ssub.s32 %s9, 1
    %s15 = ssub.s32 %s9, 2
    %s16 = sadd.s32 %s9, 1
    %s17 = ssub.s32 %s9, %s16
    %p18 = scmp.eq.s32.totalorder %s17, 0
    %s20 = sadd.s32 %s19, 1
    %s21 = scalar_select %p18, %s19, %s20
    %p24 = pneg %p18
    %p25 = scmp.eq.s32.totalorder %s9, 1
    %p26 = por %p24, %p25
    %p27 = scmp.ne.s32.totalorder %s19, %s22
    %p28 = scmp.eq.s32.totalorder %s9, 0
    %p29 = por %p27, %p28
    %p30 = scmp.ne.s32.totalorder %s19, %s22
    %p31 = scmp.eq.s32.totalorder %s14, 1
    %p32 = por %p30, %p31
    %p33 = scmp.ne.s32.totalorder %s22, %s23
    %p34 = scmp.eq.s32.totalorder %s14, 0
    %p35 = por %p33, %p34
    %p36 = scmp.ne.s32.totalorder %s22, %s23
    %p37 = scmp.eq.s32.totalorder %s15, 1
    %p38 = por %p36, %p37
    %p40 = scmp.ne.s32.totalorder %s23, %s39
    %p41 = scmp.eq.s32.totalorder %s15, 0
    %p42 = por %p40, %p41
    %s43 = ssub.s32 %s9, %s16
    %p44 = scmp.eq.s32.totalorder %s43, 0
    %s46 = sadd.s32 %s45, 1
    %s47 = scalar_select %p44, %s45, %s46
    %p50 = pneg %p44
    %p51 = scmp.eq.s32.totalorder %s9, 1
    %p52 = por %p50, %p51
    %p53 = scmp.ne.s32.totalorder %s45, %s48
    %p54 = scmp.eq.s32.totalorder %s9, 0
    %p55 = por %p53, %p54
    %p56 = scmp.ne.s32.totalorder %s45, %s48
    %p57 = scmp.eq.s32.totalorder %s14, 1
    %p58 = por %p56, %p57
    %p59 = scmp.ne.s32.totalorder %s48, %s49
    %p60 = scmp.eq.s32.totalorder %s14, 0
    %p61 = por %p59, %p60
    %p62 = scmp.ne.s32.totalorder %s48, %s49
    %p63 = scmp.eq.s32.totalorder %s15, 1
    %p64 = por %p62, %p63
    %p66 = scmp.ne.s32.totalorder %s49, %s65
    %p67 = scmp.eq.s32.totalorder %s15, 0
    %p68 = por %p66, %p67
    %s69 = ssub.s32 %s9, %s16
    %p70 = scmp.eq.s32.totalorder %s69, 0
    %s72 = sadd.s32 %s71, 1
    %s73 = scalar_select %p70, %s71, %s72
    %p76 = pneg %p70
    %p77 = scmp.eq.s32.totalorder %s9, 1
    %p78 = por %p76, %p77
    %p79 = scmp.ne.s32.totalorder %s71, %s74
    %p80 = scmp.eq.s32.totalorder %s9, 0
    %p81 = por %p79, %p80
    %p82 = scmp.ne.s32.totalorder %s71, %s74
    %p83 = scmp.eq.s32.totalorder %s14, 1
    %p84 = por %p82, %p83
    %p85 = scmp.ne.s32.totalorder %s74, %s75
    %p86 = scmp.eq.s32.totalorder %s14, 0
    %p87 = por %p85, %p86
    %p88 = scmp.ne.s32.totalorder %s74, %s75
    %p89 = scmp.eq.s32.totalorder %s15, 1
    %p90 = por %p88, %p89
    %p92 = scmp.ne.s32.totalorder %s75, %s91
    %p93 = scmp.eq.s32.totalorder %s15, 0
    %p94 = por %p92, %p93
    %s95 = ssub.s32 %s9, %s16
    %p96 = scmp.eq.s32.totalorder %s95, 0
    %s98 = sadd.s32 %s97, 1
    %s99 = scalar_select %p96, %s97, %s98
    %p102 = pneg %p96
    %p103 = scmp.eq.s32.totalorder %s9, 1
    %p104 = por %p102, %p103
    %p105 = scmp.ne.s32.totalorder %s97, %s100
    %p106 = scmp.eq.s32.totalorder %s9, 0
    %p107 = por %p105, %p106
    %p108 = scmp.ne.s32.totalorder %s97, %s100
    %p109 = scmp.eq.s32.totalorder %s14, 1
    %p110 = por %p108, %p109
    %p111 = scmp.ne.s32.totalorder %s100, %s101
    %p112 = scmp.eq.s32.totalorder %s14, 0
    %p113 = por %p111, %p112
    %p114 = scmp.ne.s32.totalorder %s100, %s101
    %p115 = scmp.eq.s32.totalorder %s15, 1
    %p116 = por %p114, %p115
    %p118 = scmp.ne.s32.totalorder %s101, %s117
    %p119 = scmp.eq.s32.totalorder %s15, 0
    %p120 = por %p118, %p119
    %p121 = scmp.le.s32.totalorder 1, %s9
    %p122 = scmp.lt.s32.totalorder %s9, 3
    %p123 = pnand %p121, %p122
    %p124 = pneg %p123
    // Predicated region
    $region9: #{rnd_forward.7} parent=5 // pred_check
      _
    $region10: #{rnd_forward.7} parent=5 // pred_check_branch
      %126 = sbr.rel (%p123) target = $region12
    $region11: #{rnd_forward.7} parent=5 // pred_region
      %s127 = ssub.s32 %s9, 1
    $region12: #{rnd_forward.7} parent=5 // pred_fallthru
      _
    %p128 = scmp.lt.s32.totalorder %s9, 2
    // Predicated region
    $region13: #{rnd_forward.7} parent=5 // pred_check
      %p129 = pneg %p128
    $region14: #{rnd_forward.7} parent=5 // pred_check_branch
      %131 = sbr.rel (%p129) target = $region16
    $region15: #{rnd_forward.7} parent=5 // pred_region
      // Predicated region
      $region17: #{rnd_forward.7} parent=15 // pred_check
        %p132 = pneg %p29
      $region18: #{rnd_forward.7} parent=15 // pred_check_branch
        %134 = sbr.rel (%p132) target = $region20
      $region19: #{rnd_forward.7} parent=15 // pred_region
        %p135 = scmp.lt.s32.totalorder %s9, 1
        %s136 = scalar_select %p135, %s9, 1
        %s137 = smul.addr %s136, 25
        %s138 = scalar_lea.vmem %s0, %s137
      $region20: #{rnd_forward.7} parent=15 // pred_fallthru
        _
      // Predicated region
      $region21: #{rnd_forward.7} parent=15 // pred_check
        %p139 = pneg %p55
      $region22: #{rnd_forward.7} parent=15 // pred_check_branch
        %141 = sbr.rel (%p139) target = $region24
      $region23: #{rnd_forward.7} parent=15 // pred_region
        %p142 = scmp.lt.s32.totalorder %s9, 1
        %s143 = scalar_select %p142, %s9, 1
        %s144 = smul.addr %s143, 200
        %s145 = smul.addr %s144, 4
        %s146 = scalar_lea.vmem %s1, %s145
      $region24: #{rnd_forward.7} parent=15 // pred_fallthru
        _
      // Predicated region
      $region25: #{rnd_forward.7} parent=15 // pred_check
        %p147 = pneg %p81
      $region26: #{rnd_forward.7} parent=15 // pred_check_branch
        %149 = sbr.rel (%p147) target = $region28
      $region27: #{rnd_forward.7} parent=15 // pred_region
        %p150 = scmp.lt.s32.totalorder %s9, 1
        %s151 = scalar_select %p150, %s9, 1
        %s152 = scalar_lea.vmem %s2, %s151
      $region28: #{rnd_forward.7} parent=15 // pred_fallthru
        _
    $region16: #{rnd_forward.7} parent=5 // pred_fallthru
      _
    %p153 = scmp.le.s32.totalorder 1, %s9
    %p154 = scmp.lt.s32.totalorder %s9, 3
    %p155 = pnand %p153, %p154
    %p156 = pneg %p155
    // Predicated region
    $region29: #{rnd_forward.7} parent=5 // pred_check
      _
    $region30: #{rnd_forward.7} parent=5 // pred_check_branch
      %158 = sbr.rel (%p155) target = $region32
    $region31: #{rnd_forward.7} parent=5 // pred_region
      %s159 = ssub.s32 %s9, 1
      %p160 = scmp.lt.s32.totalorder %s14, 1
      %s161 = scalar_select %p160, %s14, 1
      %s162 = smul.addr %s161, 25
      %s163 = scalar_lea.vmem %s0, %s162
      %p164 = pneg %p35
      %p165 = pneg %p32
      %p166 = scmp.lt.s32.totalorder %s14, 1
      %s167 = scalar_select %p166, %s14, 1
      %s168 = smul.addr %s167, 200
      %s169 = smul.addr %s168, 4
      %s170 = scalar_lea.vmem %s1, %s169
      %p171 = pneg %p61
      %p172 = pneg %p58
      %p173 = scmp.lt.s32.totalorder %s14, 1
      %s174 = scalar_select %p173, %s14, 1
      %s175 = scalar_lea.vmem %s2, %s174
      %p176 = pneg %p87
      %p177 = pneg %p84
      %p178 = pneg %p113
      %p179 = pneg %p110
      %p180 = scmp.lt.s32.totalorder %s14, 1
      %s181 = scalar_select %p180, %s14, 1
      %s182 = smul.addr %s181, 2
      %s183 = scalar_lea.vmem %s3, %s182
      %p184 = scmp.lt.s32.totalorder %s14, 1
      %s185 = scalar_select %p184, %s14, 1
      %s186 = smul.addr %s185, 25
      %s187 = scalar_lea.vmem %s0, %s186
      %p188 = scmp.lt.s32.totalorder %s14, 1
      %s189 = scalar_select %p188, %s14, 1
      %s190 = smul.addr %s189, 200
      %s191 = smul.addr %s190, 4
      %s192 = scalar_lea.vmem %s1, %s191
      %p193 = scmp.lt.s32.totalorder %s14, 1
      %s194 = scalar_select %p193, %s14, 1
      %s195 = scalar_lea.vmem %s2, %s194
      %p196 = scmp.lt.s32.totalorder %s14, 1
      %s197 = scalar_select %p196, %s14, 1
      %s198 = smul.addr %s197, 2
      %s199 = scalar_lea.vmem %s3, %s198
      %v201 = vld [vmem:[%s187] sm:$0xff]
      %v202 = vld [vmem:[%s187 + $0x8] sm:$0xff]
      %v203 = vld [vmem:[%s187 + $0x10] sm:$0xff]
      %v204 = vld [vmem:[%s187 + $0x18] sm:$0x1]
      %v205 = vld [vmem:[%s192] sm:$0xff]
      %v206 = vld [vmem:[%s192 + $0x8] sm:$0xff]
      %v207 = vld [vmem:[%s192 + $0x10] sm:$0xff]
      %v208 = vld [vmem:[%s192 + $0x18] sm:$0xff]
      %v209 = vld [vmem:[%s192 + $0x20] sm:$0xff]
      %v210 = vld [vmem:[%s192 + $0x28] sm:$0xff]
      %v211 = vld [vmem:[%s192 + $0x30] sm:$0xff]
      %v212 = vld [vmem:[%s192 + $0x38] sm:$0xff]
      %v213 = vld [vmem:[%s192 + $0x40] sm:$0xff]
      %v214 = vld [vmem:[%s192 + $0x48] sm:$0xff]
      %v215 = vld [vmem:[%s192 + $0x50] sm:$0xff]
      %v216 = vld [vmem:[%s192 + $0x58] sm:$0xff]
      %v217 = vld [vmem:[%s192 + $0x60] sm:$0xf]
      %v218 = vld [vmem:[%s192 + $0x64] sm:$0xff]
      %v219 = vld [vmem:[%s192 + $0x6c] sm:$0xff]
      %v220 = vld [vmem:[%s192 + $0x74] sm:$0xff]
      %v221 = vld [vmem:[%s192 + $0x7c] sm:$0xff]
      %v222 = vld [vmem:[%s192 + $0x84] sm:$0xff]
      %v223 = vld [vmem:[%s192 + $0x8c] sm:$0xff]
      %v224 = vld [vmem:[%s192 + $0x94] sm:$0xff]
      %v225 = vld [vmem:[%s192 + $0x9c] sm:$0xff]
      %v226 = vld [vmem:[%s192 + $0xa4] sm:$0xff]
      %v227 = vld [vmem:[%s192 + $0xac] sm:$0xff]
      %v228 = vld [vmem:[%s192 + $0xb4] sm:$0xff]
      %v229 = vld [vmem:[%s192 + $0xbc] sm:$0xff]
      %v230 = vld [vmem:[%s192 + $0xc4] sm:$0xf]
      %v231 = vld [vmem:[%s192 + $0xc8] sm:$0xff]
      %v232 = vld [vmem:[%s192 + $0xd0] sm:$0xff]
      %v233 = vld [vmem:[%s192 + $0xd8] sm:$0xff]
      %v234 = vld [vmem:[%s192 + $0xe0] sm:$0xff]
      %v235 = vld [vmem:[%s192 + $0xe8] sm:$0xff]
      %v236 = vld [vmem:[%s192 + $0xf0] sm:$0xff]
      %v237 = vld [vmem:[%s192 + $0xf8] sm:$0xff]
      %v238 = vld [vmem:[%s192 + $0x100] sm:$0xff]
      %v239 = vld [vmem:[%s192 + $0x108] sm:$0xff]
      %v240 = vld [vmem:[%s192 + $0x110] sm:$0xff]
      %v241 = vld [vmem:[%s192 + $0x118] sm:$0xff]
      %v242 = vld [vmem:[%s192 + $0x120] sm:$0xff]
      %v243 = vld [vmem:[%s192 + $0x128] sm:$0xf]
      %v244 = vld [vmem:[%s192 + $0x12c] sm:$0xff]
      %v245 = vld [vmem:[%s192 + $0x134] sm:$0xff]
      %v246 = vld [vmem:[%s192 + $0x13c] sm:$0xff]
      %v247 = vld [vmem:[%s192 + $0x144] sm:$0xff]
      %v248 = vld [vmem:[%s192 + $0x14c] sm:$0xff]
      %v249 = vld [vmem:[%s192 + $0x154] sm:$0xff]
      %v250 = vld [vmem:[%s192 + $0x15c] sm:$0xff]
      %v251 = vld [vmem:[%s192 + $0x164] sm:$0xff]
      %v252 = vld [vmem:[%s192 + $0x16c] sm:$0xff]
      %v253 = vld [vmem:[%s192 + $0x174] sm:$0xff]
      %v254 = vld [vmem:[%s192 + $0x17c] sm:$0xff]
      %v255 = vld [vmem:[%s192 + $0x184] sm:$0xff]
      %v256 = vld [vmem:[%s192 + $0x18c] sm:$0xf]
      %v257 = vld [vmem:[%s192 + $0x190] sm:$0xff]
      %v258 = vld [vmem:[%s192 + $0x198] sm:$0xff]
      %v259 = vld [vmem:[%s192 + $0x1a0] sm:$0xff]
      %v260 = vld [vmem:[%s192 + $0x1a8] sm:$0xff]
      %v261 = vld [vmem:[%s192 + $0x1b0] sm:$0xff]
      %v262 = vld [vmem:[%s192 + $0x1b8] sm:$0xff]
      %v263 = vld [vmem:[%s192 + $0x1c0] sm:$0xff]
      %v264 = vld [vmem:[%s192 + $0x1c8] sm:$0xff]
      %v265 = vld [vmem:[%s192 + $0x1d0] sm:$0xff]
      %v266 = vld [vmem:[%s192 + $0x1d8] sm:$0xff]
      %v267 = vld [vmem:[%s192 + $0x1e0] sm:$0xff]
      %v268 = vld [vmem:[%s192 + $0x1e8] sm:$0xff]
      %v269 = vld [vmem:[%s192 + $0x1f0] sm:$0xf]
      %v270 = vld [vmem:[%s192 + $0x1f4] sm:$0xff]
      %v271 = vld [vmem:[%s192 + $0x1fc] sm:$0xff]
      %v272 = vld [vmem:[%s192 + $0x204] sm:$0xff]
      %v273 = vld [vmem:[%s192 + $0x20c] sm:$0xff]
      %v274 = vld [vmem:[%s192 + $0x214] sm:$0xff]
      %v275 = vld [vmem:[%s192 + $0x21c] sm:$0xff]
      %v276 = vld [vmem:[%s192 + $0x224] sm:$0xff]
      %v277 = vld [vmem:[%s192 + $0x22c] sm:$0xff]
      %v278 = vld [vmem:[%s192 + $0x234] sm:$0xff]
      %v279 = vld [vmem:[%s192 + $0x23c] sm:$0xff]
      %v280 = vld [vmem:[%s192 + $0x244] sm:$0xff]
      %v281 = vld [vmem:[%s192 + $0x24c] sm:$0xff]
      %v282 = vld [vmem:[%s192 + $0x254] sm:$0xf]
      %v283 = vld [vmem:[%s192 + $0x258] sm:$0xff]
      %v284 = vld [vmem:[%s192 + $0x260] sm:$0xff]
      %v285 = vld [vmem:[%s192 + $0x268] sm:$0xff]
      %v286 = vld [vmem:[%s192 + $0x270] sm:$0xff]
      %v287 = vld [vmem:[%s192 + $0x278] sm:$0xff]
      %v288 = vld [vmem:[%s192 + $0x280] sm:$0xff]
      %v289 = vld [vmem:[%s192 + $0x288] sm:$0xff]
      %v290 = vld [vmem:[%s192 + $0x290] sm:$0xff]
      %v291 = vld [vmem:[%s192 + $0x298] sm:$0xff]
      %v292 = vld [vmem:[%s192 + $0x2a0] sm:$0xff]
      %v293 = vld [vmem:[%s192 + $0x2a8] sm:$0xff]
      %v294 = vld [vmem:[%s192 + $0x2b0] sm:$0xff]
      %v295 = vld [vmem:[%s192 + $0x2b8] sm:$0xf]
      %v296 = vld [vmem:[%s192 + $0x2bc] sm:$0xff]
      %v297 = vld [vmem:[%s192 + $0x2c4] sm:$0xff]
      %v298 = vld [vmem:[%s192 + $0x2cc] sm:$0xff]
      %v299 = vld [vmem:[%s192 + $0x2d4] sm:$0xff]
      %v300 = vld [vmem:[%s192 + $0x2dc] sm:$0xff]
      %v301 = vld [vmem:[%s192 + $0x2e4] sm:$0xff]
      %v302 = vld [vmem:[%s192 + $0x2ec] sm:$0xff]
      %v303 = vld [vmem:[%s192 + $0x2f4] sm:$0xff]
      %v304 = vld [vmem:[%s192 + $0x2fc] sm:$0xff]
      %v305 = vld [vmem:[%s192 + $0x304] sm:$0xff]
      %v306 = vld [vmem:[%s192 + $0x30c] sm:$0xff]
      %v307 = vld [vmem:[%s192 + $0x314] sm:$0xff]
      %v308 = vld [vmem:[%s192 + $0x31c] sm:$0xf]
      %v309 = vld [vmem:[%s195] sm:$0x1]
      %v311 = vlaneseq
      %v312 = vshrl.u32 %v311, 7
      %v313 = vsub.s32 0, %v312
      %v314 = vrot.slane %v309, %v313
      %v320 = vcombine.high %v201, %v201
      %v322 = vunpack.c.l.s4 1966171168
      %v323 = vunpack.c.0.s8 %v322
      %v324 = vlaneseq
      %v325 = vshrl.u32 %v324, 7
      %v326 = vsub.s32 %v323, %v325
      %v327 = vrot.slane %v201, %v326
      %v329 = vunpack.c.l.s4 1966171168
      %v330 = vunpack.c.0.s8 %v329
      %v331 = vlaneseq
      %v332 = vshrl.u32 %v331, 7
      %v333 = vsub.s32 %v330, %v332
      %v334 = vrot.slane %v320, %v333
      %v335 = vcombine.high %v327, %v327
      %v336 = vcombine.high %v334, %v334
      %v338 = vunpack.c.l.s4 1966171168
      %v339 = vunpack.c.0.s8 %v338
      %v340 = vlaneseq
      %v341 = vshrl.u32 %v340, 7
      %v342 = vsub.s32 %v339, %v341
      %v343 = vrot.slane %v327, %v342
      %v345 = vunpack.c.l.s4 1966171168
      %v346 = vunpack.c.0.s8 %v345
      %v347 = vlaneseq
      %v348 = vshrl.u32 %v347, 7
      %v349 = vsub.s32 %v346, %v348
      %v350 = vrot.slane %v334, %v349
      %v352 = vunpack.c.l.s4 1966171168
      %v353 = vunpack.c.0.s8 %v352
      %v354 = vlaneseq
      %v355 = vshrl.u32 %v354, 7
      %v356 = vsub.s32 %v353, %v355
      %v357 = vrot.slane %v335, %v356
      %v359 = vunpack.c.l.s4 1966171168
      %v360 = vunpack.c.0.s8 %v359
      %v361 = vlaneseq
      %v362 = vshrl.u32 %v361, 7
      %v363 = vsub.s32 %v360, %v362
      %v364 = vrot.slane %v336, %v363
      %v365 = vcombine.high %v343, %v343
      %v366 = vcombine.high %v350, %v350
      %v367 = vcombine.high %v357, %v357
      %v368 = vcombine.high %v364, %v364
      %v369 = vcombine.high %v202, %v202
      %v371 = vunpack.c.l.s4 1966171168
      %v372 = vunpack.c.0.s8 %v371
      %v373 = vlaneseq
      %v374 = vshrl.u32 %v373, 7
      %v375 = vsub.s32 %v372, %v374
      %v376 = vrot.slane %v202, %v375
      %v378 = vunpack.c.l.s4 1966171168
      %v379 = vunpack.c.0.s8 %v378
      %v380 = vlaneseq
      %v381 = vshrl.u32 %v380, 7
      %v382 = vsub.s32 %v379, %v381
      %v383 = vrot.slane %v369, %v382
      %v384 = vcombine.high %v376, %v376
      %v385 = vcombine.high %v383, %v383
      %v387 = vunpack.c.l.s4 1966171168
      %v388 = vunpack.c.0.s8 %v387
      %v389 = vlaneseq
      %v390 = vshrl.u32 %v389, 7
      %v391 = vsub.s32 %v388, %v390
      %v392 = vrot.slane %v376, %v391
      %v394 = vunpack.c.l.s4 1966171168
      %v395 = vunpack.c.0.s8 %v394
      %v396 = vlaneseq
      %v397 = vshrl.u32 %v396, 7
      %v398 = vsub.s32 %v395, %v397
      %v399 = vrot.slane %v383, %v398
      %v401 = vunpack.c.l.s4 1966171168
      %v402 = vunpack.c.0.s8 %v401
      %v403 = vlaneseq
      %v404 = vshrl.u32 %v403, 7
      %v405 = vsub.s32 %v402, %v404
      %v406 = vrot.slane %v384, %v405
      %v408 = vunpack.c.l.s4 1966171168
      %v409 = vunpack.c.0.s8 %v408
      %v410 = vlaneseq
      %v411 = vshrl.u32 %v410, 7
      %v412 = vsub.s32 %v409, %v411
      %v413 = vrot.slane %v385, %v412
      %v414 = vcombine.high %v392, %v392
      %v415 = vcombine.high %v399, %v399
      %v416 = vcombine.high %v406, %v406
      %v417 = vcombine.high %v413, %v413
      %v418 = vcombine.high %v203, %v203
      %v420 = vunpack.c.l.s4 1966171168
      %v421 = vunpack.c.0.s8 %v420
      %v422 = vlaneseq
      %v423 = vshrl.u32 %v422, 7
      %v424 = vsub.s32 %v421, %v423
      %v425 = vrot.slane %v203, %v424
      %v427 = vunpack.c.l.s4 1966171168
      %v428 = vunpack.c.0.s8 %v427
      %v429 = vlaneseq
      %v430 = vshrl.u32 %v429, 7
      %v431 = vsub.s32 %v428, %v430
      %v432 = vrot.slane %v418, %v431
      %v433 = vcombine.high %v425, %v425
      %v434 = vcombine.high %v432, %v432
      %v436 = vunpack.c.l.s4 1966171168
      %v437 = vunpack.c.0.s8 %v436
      %v438 = vlaneseq
      %v439 = vshrl.u32 %v438, 7
      %v440 = vsub.s32 %v437, %v439
      %v441 = vrot.slane %v425, %v440
      %v443 = vunpack.c.l.s4 1966171168
      %v444 = vunpack.c.0.s8 %v443
      %v445 = vlaneseq
      %v446 = vshrl.u32 %v445, 7
      %v447 = vsub.s32 %v444, %v446
      %v448 = vrot.slane %v432, %v447
      %v450 = vunpack.c.l.s4 1966171168
      %v451 = vunpack.c.0.s8 %v450
      %v452 = vlaneseq
      %v453 = vshrl.u32 %v452, 7
      %v454 = vsub.s32 %v451, %v453
      %v455 = vrot.slane %v433, %v454
      %v457 = vunpack.c.l.s4 1966171168
      %v458 = vunpack.c.0.s8 %v457
      %v459 = vlaneseq
      %v460 = vshrl.u32 %v459, 7
      %v461 = vsub.s32 %v458, %v460
      %v462 = vrot.slane %v434, %v461
      %v463 = vcombine.high %v441, %v441
      %v464 = vcombine.high %v448, %v448
      %v465 = vcombine.high %v455, %v455
      %v466 = vcombine.high %v462, %v462
      %v468 = vunpack.c.l.s4 1966171168
      %v469 = vunpack.c.0.s8 %v468
      %v470 = vlaneseq
      %v471 = vshrl.u32 %v470, 7
      %v472 = vsub.s32 %v469, %v471
      %v473 = vrot.slane %v204, %v472
      %v475 = vunpack.c.l.s4 1966171168
      %v476 = vunpack.c.0.s8 %v475
      %v477 = vlaneseq
      %v478 = vshrl.u32 %v477, 7
      %v479 = vsub.s32 %v476, %v478
      %v480 = vrot.slane %v473, %v479
      %v609 = vunpack.c.l.b16 %v205
      %v610 = vunpack.c.h.b16 %v205
      %v611 = vunpack.c.l.b16 %v206
      %v612 = vunpack.c.h.b16 %v206
      %v613 = vunpack.c.l.b16 %v207
      %v614 = vunpack.c.h.b16 %v207
      %v615 = vunpack.c.l.b16 %v208
      %v616 = vunpack.c.h.b16 %v208
      %v617 = vunpack.c.l.b16 %v209
      %v618 = vunpack.c.h.b16 %v209
      %v619 = vunpack.c.l.b16 %v210
      %v620 = vunpack.c.h.b16 %v210
      %v621 = vunpack.c.l.b16 %v211
      %v622 = vunpack.c.h.b16 %v211
      %v623 = vunpack.c.l.b16 %v212
      %v624 = vunpack.c.h.b16 %v212
      %v625 = vunpack.c.l.b16 %v213
      %v626 = vunpack.c.h.b16 %v213
      %v627 = vunpack.c.l.b16 %v214
      %v628 = vunpack.c.h.b16 %v214
      %v629 = vunpack.c.l.b16 %v215
      %v630 = vunpack.c.h.b16 %v215
      %v631 = vunpack.c.l.b16 %v216
      %v632 = vunpack.c.h.b16 %v216
      %v633 = vunpack.c.l.b16 %v217
      %v634 = vunpack.c.l.b16 %v218
      %v635 = vunpack.c.h.b16 %v218
      %v636 = vunpack.c.l.b16 %v219
      %v637 = vunpack.c.h.b16 %v219
      %v638 = vunpack.c.l.b16 %v220
      %v639 = vunpack.c.h.b16 %v220
      %v640 = vunpack.c.l.b16 %v221
      %v641 = vunpack.c.h.b16 %v221
      %v642 = vunpack.c.l.b16 %v222
      %v643 = vunpack.c.h.b16 %v222
      %v644 = vunpack.c.l.b16 %v223
      %v645 = vunpack.c.h.b16 %v223
      %v646 = vunpack.c.l.b16 %v224
      %v647 = vunpack.c.h.b16 %v224
      %v648 = vunpack.c.l.b16 %v225
      %v649 = vunpack.c.h.b16 %v225
      %v650 = vunpack.c.l.b16 %v226
      %v651 = vunpack.c.h.b16 %v226
      %v652 = vunpack.c.l.b16 %v227
      %v653 = vunpack.c.h.b16 %v227
      %v654 = vunpack.c.l.b16 %v228
      %v655 = vunpack.c.h.b16 %v228
      %v656 = vunpack.c.l.b16 %v229
      %v657 = vunpack.c.h.b16 %v229
      %v658 = vunpack.c.l.b16 %v230
      %v659 = vunpack.c.l.b16 %v231
      %v660 = vunpack.c.h.b16 %v231
      %v661 = vunpack.c.l.b16 %v232
      %v662 = vunpack.c.h.b16 %v232
      %v663 = vunpack.c.l.b16 %v233
      %v664 = vunpack.c.h.b16 %v233
      %v665 = vunpack.c.l.b16 %v234
      %v666 = vunpack.c.h.b16 %v234
      %v667 = vunpack.c.l.b16 %v235
      %v668 = vunpack.c.h.b16 %v235
      %v669 = vunpack.c.l.b16 %v236
      %v670 = vunpack.c.h.b16 %v236
      %v671 = vunpack.c.l.b16 %v237
      %v672 = vunpack.c.h.b16 %v237
      %v673 = vunpack.c.l.b16 %v238
      %v674 = vunpack.c.h.b16 %v238
      %v675 = vunpack.c.l.b16 %v239
      %v676 = vunpack.c.h.b16 %v239
      %v677 = vunpack.c.l.b16 %v240
      %v678 = vunpack.c.h.b16 %v240
      %v679 = vunpack.c.l.b16 %v241
      %v680 = vunpack.c.h.b16 %v241
      %v681 = vunpack.c.l.b16 %v242
      %v682 = vunpack.c.h.b16 %v242
      %v683 = vunpack.c.l.b16 %v243
      %v684 = vunpack.c.l.b16 %v244
      %v685 = vunpack.c.h.b16 %v244
      %v686 = vunpack.c.l.b16 %v245
      %v687 = vunpack.c.h.b16 %v245
      %v688 = vunpack.c.l.b16 %v246
      %v689 = vunpack.c.h.b16 %v246
      %v690 = vunpack.c.l.b16 %v247
      %v691 = vunpack.c.h.b16 %v247
      %v692 = vunpack.c.l.b16 %v248
      %v693 = vunpack.c.h.b16 %v248
      %v694 = vunpack.c.l.b16 %v249
      %v695 = vunpack.c.h.b16 %v249
      %v696 = vunpack.c.l.b16 %v250
      %v697 = vunpack.c.h.b16 %v250
      %v698 = vunpack.c.l.b16 %v251
      %v699 = vunpack.c.h.b16 %v251
      %v700 = vunpack.c.l.b16 %v252
      %v701 = vunpack.c.h.b16 %v252
      %v702 = vunpack.c.l.b16 %v253
      %v703 = vunpack.c.h.b16 %v253
      %v704 = vunpack.c.l.b16 %v254
      %v705 = vunpack.c.h.b16 %v254
      %v706 = vunpack.c.l.b16 %v255
      %v707 = vunpack.c.h.b16 %v255
      %v708 = vunpack.c.l.b16 %v256
      %v709 = vunpack.c.l.b16 %v257
      %v710 = vunpack.c.h.b16 %v257
      %v711 = vunpack.c.l.b16 %v258
      %v712 = vunpack.c.h.b16 %v258
      %v713 = vunpack.c.l.b16 %v259
      %v714 = vunpack.c.h.b16 %v259
      %v715 = vunpack.c.l.b16 %v260
      %v716 = vunpack.c.h.b16 %v260
      %v717 = vunpack.c.l.b16 %v261
      %v718 = vunpack.c.h.b16 %v261
      %v719 = vunpack.c.l.b16 %v262
      %v720 = vunpack.c.h.b16 %v262
      %v721 = vunpack.c.l.b16 %v263
      %v722 = vunpack.c.h.b16 %v263
      %v723 = vunpack.c.l.b16 %v264
      %v724 = vunpack.c.h.b16 %v264
      %v725 = vunpack.c.l.b16 %v265
      %v726 = vunpack.c.h.b16 %v265
      %v727 = vunpack.c.l.b16 %v266
      %v728 = vunpack.c.h.b16 %v266
      %v729 = vunpack.c.l.b16 %v267
      %v730 = vunpack.c.h.b16 %v267
      %v731 = vunpack.c.l.b16 %v268
      %v732 = vunpack.c.h.b16 %v268
      %v733 = vunpack.c.l.b16 %v269
      %v734 = vunpack.c.l.b16 %v270
      %v735 = vunpack.c.h.b16 %v270
      %v736 = vunpack.c.l.b16 %v271
      %v737 = vunpack.c.h.b16 %v271
      %v738 = vunpack.c.l.b16 %v272
      %v739 = vunpack.c.h.b16 %v272
      %v740 = vunpack.c.l.b16 %v273
      %v741 = vunpack.c.h.b16 %v273
      %v742 = vunpack.c.l.b16 %v274
      %v743 = vunpack.c.h.b16 %v274
      %v744 = vunpack.c.l.b16 %v275
      %v745 = vunpack.c.h.b16 %v275
      %v746 = vunpack.c.l.b16 %v276
      %v747 = vunpack.c.h.b16 %v276
      %v748 = vunpack.c.l.b16 %v277
      %v749 = vunpack.c.h.b16 %v277
      %v750 = vunpack.c.l.b16 %v278
      %v751 = vunpack.c.h.b16 %v278
      %v752 = vunpack.c.l.b16 %v279
      %v753 = vunpack.c.h.b16 %v279
      %v754 = vunpack.c.l.b16 %v280
      %v755 = vunpack.c.h.b16 %v280
      %v756 = vunpack.c.l.b16 %v281
      %v757 = vunpack.c.h.b16 %v281
      %v758 = vunpack.c.l.b16 %v282
      %v759 = vunpack.c.l.b16 %v283
      %v760 = vunpack.c.h.b16 %v283
      %v761 = vunpack.c.l.b16 %v284
      %v762 = vunpack.c.h.b16 %v284
      %v763 = vunpack.c.l.b16 %v285
      %v764 = vunpack.c.h.b16 %v285
      %v765 = vunpack.c.l.b16 %v286
      %v766 = vunpack.c.h.b16 %v286
      %v767 = vunpack.c.l.b16 %v287
      %v768 = vunpack.c.h.b16 %v287
      %v769 = vunpack.c.l.b16 %v288
      %v770 = vunpack.c.h.b16 %v288
      %v771 = vunpack.c.l.b16 %v289
      %v772 = vunpack.c.h.b16 %v289
      %v773 = vunpack.c.l.b16 %v290
      %v774 = vunpack.c.h.b16 %v290
      %v775 = vunpack.c.l.b16 %v291
      %v776 = vunpack.c.h.b16 %v291
      %v777 = vunpack.c.l.b16 %v292
      %v778 = vunpack.c.h.b16 %v292
      %v779 = vunpack.c.l.b16 %v293
      %v780 = vunpack.c.h.b16 %v293
      %v781 = vunpack.c.l.b16 %v294
      %v782 = vunpack.c.h.b16 %v294
      %v783 = vunpack.c.l.b16 %v295
      %v784 = vunpack.c.l.b16 %v296
      %v785 = vunpack.c.h.b16 %v296
      %v786 = vunpack.c.l.b16 %v297
      %v787 = vunpack.c.h.b16 %v297
      %v788 = vunpack.c.l.b16 %v298
      %v789 = vunpack.c.h.b16 %v298
      %v790 = vunpack.c.l.b16 %v299
      %v791 = vunpack.c.h.b16 %v299
      %v792 = vunpack.c.l.b16 %v300
      %v793 = vunpack.c.h.b16 %v300
      %v794 = vunpack.c.l.b16 %v301
      %v795 = vunpack.c.h.b16 %v301
      %v796 = vunpack.c.l.b16 %v302
      %v797 = vunpack.c.h.b16 %v302
      %v798 = vunpack.c.l.b16 %v303
      %v799 = vunpack.c.h.b16 %v303
      %v800 = vunpack.c.l.b16 %v304
      %v801 = vunpack.c.h.b16 %v304
      %v802 = vunpack.c.l.b16 %v305
      %v803 = vunpack.c.h.b16 %v305
      %v804 = vunpack.c.l.b16 %v306
      %v805 = vunpack.c.h.b16 %v306
      %v806 = vunpack.c.l.b16 %v307
      %v807 = vunpack.c.h.b16 %v307
      %v808 = vunpack.c.l.b16 %v308
      %v809 = vpack.c.b16 %v634, %v609
      %v810 = vpack.c.b16 %v635, %v610
      %v811 = vpack.c.b16 %v636, %v611
      %v812 = vpack.c.b16 %v637, %v612
      %v813 = vpack.c.b16 %v638, %v613
      %v814 = vpack.c.b16 %v639, %v614
      %v815 = vpack.c.b16 %v640, %v615
      %v816 = vpack.c.b16 %v641, %v616
      %v817 = vpack.c.b16 %v642, %v617
      %v818 = vpack.c.b16 %v643, %v618
      %v819 = vpack.c.b16 %v644, %v619
      %v820 = vpack.c.b16 %v645, %v620
      %v821 = vpack.c.b16 %v646, %v621
      %v822 = vpack.c.b16 %v647, %v622
      %v823 = vpack.c.b16 %v648, %v623
      %v824 = vpack.c.b16 %v649, %v624
      %v825 = vpack.c.b16 %v650, %v625
      %v826 = vpack.c.b16 %v651, %v626
      %v827 = vpack.c.b16 %v652, %v627
      %v828 = vpack.c.b16 %v653, %v628
      %v829 = vpack.c.b16 %v654, %v629
      %v830 = vpack.c.b16 %v655, %v630
      %v831 = vpack.c.b16 %v656, %v631
      %v832 = vpack.c.b16 %v657, %v632
      %v833 = vpack.c.b16 %v658, %v633
      %v834 = vpack.c.b16 %v684, %v659
      %v835 = vpack.c.b16 %v685, %v660
      %v836 = vpack.c.b16 %v686, %v661
      %v837 = vpack.c.b16 %v687, %v662
      %v838 = vpack.c.b16 %v688, %v663
      %v839 = vpack.c.b16 %v689, %v664
      %v840 = vpack.c.b16 %v690, %v665
      %v841 = vpack.c.b16 %v691, %v666
      %v842 = vpack.c.b16 %v692, %v667
      %v843 = vpack.c.b16 %v693, %v668
      %v844 = vpack.c.b16 %v694, %v669
      %v845 = vpack.c.b16 %v695, %v670
      %v846 = vpack.c.b16 %v696, %v671
      %v847 = vpack.c.b16 %v697, %v672
      %v848 = vpack.c.b16 %v698, %v673
      %v849 = vpack.c.b16 %v699, %v674
      %v850 = vpack.c.b16 %v700, %v675
      %v851 = vpack.c.b16 %v701, %v676
      %v852 = vpack.c.b16 %v702, %v677
      %v853 = vpack.c.b16 %v703, %v678
      %v854 = vpack.c.b16 %v704, %v679
      %v855 = vpack.c.b16 %v705, %v680
      %v856 = vpack.c.b16 %v706, %v681
      %v857 = vpack.c.b16 %v707, %v682
      %v858 = vpack.c.b16 %v708, %v683
      %v859 = vpack.c.b16 %v734, %v709
      %v860 = vpack.c.b16 %v735, %v710
      %v861 = vpack.c.b16 %v736, %v711
      %v862 = vpack.c.b16 %v737, %v712
      %v863 = vpack.c.b16 %v738, %v713
      %v864 = vpack.c.b16 %v739, %v714
      %v865 = vpack.c.b16 %v740, %v715
      %v866 = vpack.c.b16 %v741, %v716
      %v867 = vpack.c.b16 %v742, %v717
      %v868 = vpack.c.b16 %v743, %v718
      %v869 = vpack.c.b16 %v744, %v719
      %v870 = vpack.c.b16 %v745, %v720
      %v871 = vpack.c.b16 %v746, %v721
      %v872 = vpack.c.b16 %v747, %v722
      %v873 = vpack.c.b16 %v748, %v723
      %v874 = vpack.c.b16 %v749, %v724
      %v875 = vpack.c.b16 %v750, %v725
      %v876 = vpack.c.b16 %v751, %v726
      %v877 = vpack.c.b16 %v752, %v727
      %v878 = vpack.c.b16 %v753, %v728
      %v879 = vpack.c.b16 %v754, %v729
      %v880 = vpack.c.b16 %v755, %v730
      %v881 = vpack.c.b16 %v756, %v731
      %v882 = vpack.c.b16 %v757, %v732
      %v883 = vpack.c.b16 %v758, %v733
      %v884 = vpack.c.b16 %v784, %v759
      %v885 = vpack.c.b16 %v785, %v760
      %v886 = vpack.c.b16 %v786, %v761
      %v887 = vpack.c.b16 %v787, %v762
      %v888 = vpack.c.b16 %v788, %v763
      %v889 = vpack.c.b16 %v789, %v764
      %v890 = vpack.c.b16 %v790, %v765
      %v891 = vpack.c.b16 %v791, %v766
      %v892 = vpack.c.b16 %v792, %v767
      %v893 = vpack.c.b16 %v793, %v768
      %v894 = vpack.c.b16 %v794, %v769
      %v895 = vpack.c.b16 %v795, %v770
      %v896 = vpack.c.b16 %v796, %v771
      %v897 = vpack.c.b16 %v797, %v772
      %v898 = vpack.c.b16 %v798, %v773
      %v899 = vpack.c.b16 %v799, %v774
      %v900 = vpack.c.b16 %v800, %v775
      %v901 = vpack.c.b16 %v801, %v776
      %v902 = vpack.c.b16 %v802, %v777
      %v903 = vpack.c.b16 %v803, %v778
      %v904 = vpack.c.b16 %v804, %v779
      %v905 = vpack.c.b16 %v805, %v780
      %v906 = vpack.c.b16 %v806, %v781
      %v907 = vpack.c.b16 %v807, %v782
      %v908 = vpack.c.b16 %v808, %v783
      %vm1005 = vcmask 523264
      %v1007 = vsel %vm1005, %v480, 0
      %v1010 = vsel %vm1005, %v833, 0
      %v1013 = vsel %vm1005, %v858, 0
      %v1016 = vsel %vm1005, %v883, 0
      %v1019 = vsel %vm1005, %v908, 0
      %1021 = vmatprep.subr.bf16.mxu0 %v810
      %1022 = vmatpush1.bf16.xpose.msra.mxu0 %v809
      %1023 = vmatprep.subr.bf16.mxu0 %v835
      %1024 = vmatpush1.bf16.xpose.msra.mxu0 %v834
      %1025 = vmatprep.subr.bf16.mxu0 %v860
      %1026 = vmatpush1.bf16.xpose.msra.mxu0 %v859
      %1027 = vmatprep.subr.bf16.mxu0 %v885
      %1028 = vmatpush1.bf16.xpose.msra.mxu0 %v884
      %1029 = vmatprep.subr.bf16.mxu0 0
      %1030 = vmatpush1.bf16.xpose.msra.mxu0 0
      %1031 = vmatprep.subr.bf16.mxu0 0
      %1032 = vmatpush1.bf16.xpose.msra.mxu0 0
      %1033 = vmatprep.subr.bf16.mxu0 0
      %1034 = vmatpush1.bf16.xpose.msra.mxu0 0
      %1035 = vmatprep.subr.bf16.mxu0 0
      %1036 = vmatpush1.bf16.xpose.msra.mxu0 0
      %1037 = vmatprep.subr.bf16.mxu0 0
      %1038 = vmatpush1.bf16.xpose.msra.mxu0 0
      %1039 = vmatprep.subr.bf16.mxu0 0
      %1040 = vmatpush1.bf16.xpose.msra.mxu0 0
      %1041 = vmatprep.subr.bf16.mxu0 0
      %1042 = vmatpush1.bf16.xpose.msra.mxu0 0
      %1043 = vmatprep.subr.bf16.mxu0 0
      %1044 = vmatpush1.bf16.xpose.msra.mxu0 0
      %1045 = vmatprep.subr.bf16.mxu0 0
      %1046 = vmatpush1.bf16.xpose.msra.mxu0 0
      %1047 = vmatprep.subr.bf16.mxu0 0
      %1048 = vmatpush1.bf16.xpose.msra.mxu0 0
      %1049 = vmatprep.subr.bf16.mxu0 0
      %1050 = vmatpush1.bf16.xpose.msra.mxu0 0
      %1051 = vmatprep.subr.bf16.mxu0 0
      %1052 = vmatpush1.bf16.xpose.msra.mxu0 0
      %1053 = vmatprep.mubr.bf16.mxu0 %v357
      %1054 = vmatmul.mubr.bf16.gmra.mrb[0].mxu0 %v343
      %v1055 = vpop.f32.mrb[0].mxu0
      %v1056 = vadd.f32 %v314, %v1055
      %v1057 = vpop.f32.mrb[0].mxu0
      %v1058 = vpop.f32.mrb[0].mxu0
      %v1059 = vpop.f32.mrb[0].mxu0
      %1060 = vdwg.mxu0
      %1061 = vmatprep.subr.bf16.mxu0 %v812
      %1062 = vmatpush1.bf16.xpose.msra.mxu0 %v811
      %1063 = vmatprep.subr.bf16.mxu0 %v837
      %1064 = vmatpush1.bf16.xpose.msra.mxu0 %v836
      %1065 = vmatprep.subr.bf16.mxu0 %v862
      %1066 = vmatpush1.bf16.xpose.msra.mxu0 %v861
      %1067 = vmatprep.subr.bf16.mxu0 %v887
      %1068 = vmatpush1.bf16.xpose.msra.mxu0 %v886
      %1069 = vmatprep.subr.bf16.mxu0 0
      %1070 = vmatpush1.bf16.xpose.msra.mxu0 0
      %1071 = vmatprep.subr.bf16.mxu0 0
      %1072 = vmatpush1.bf16.xpose.msra.mxu0 0
      %1073 = vmatprep.subr.bf16.mxu0 0
      %1074 = vmatpush1.bf16.xpose.msra.mxu0 0
      %1075 = vmatprep.subr.bf16.mxu0 0
      %1076 = vmatpush1.bf16.xpose.msra.mxu0 0
      %1077 = vmatprep.subr.bf16.mxu0 0
      %1078 = vmatpush1.bf16.xpose.msra.mxu0 0
      %1079 = vmatprep.subr.bf16.mxu0 0
      %1080 = vmatpush1.bf16.xpose.msra.mxu0 0
      %1081 = vmatprep.subr.bf16.mxu0 0
      %1082 = vmatpush1.bf16.xpose.msra.mxu0 0
      %1083 = vmatprep.subr.bf16.mxu0 0
      %1084 = vmatpush1.bf16.xpose.msra.mxu0 0
      %1085 = vmatprep.subr.bf16.mxu0 0
      %1086 = vmatpush1.bf16.xpose.msra.mxu0 0
      %1087 = vmatprep.subr.bf16.mxu0 0
      %1088 = vmatpush1.bf16.xpose.msra.mxu0 0
      %1089 = vmatprep.subr.bf16.mxu0 0
      %1090 = vmatpush1.bf16.xpose.msra.mxu0 0
      %1091 = vmatprep.subr.bf16.mxu0 0
      %1092 = vmatpush1.bf16.xpose.msra.mxu0 0
      %1093 = vmatprep.mubr.bf16.mxu0 %v367
      %1094 = vmatmul.mubr.bf16.gmra.mrb[0].mxu0 %v365
      %v1095 = vpop.f32.mrb[0].mxu0
      %v1096 = vadd.f32 %v1056, %v1095
      %v1097 = vpop.f32.mrb[0].mxu0
      %v1098 = vpop.f32.mrb[0].mxu0
      %v1099 = vpop.f32.mrb[0].mxu0
      %1100 = vdwg.mxu0
      %1101 = vmatprep.subr.bf16.mxu0 %v814
      %1102 = vmatpush1.bf16.xpose.msra.mxu0 %v813
      %1103 = vmatprep.subr.bf16.mxu0 %v839
      %1104 = vmatpush1.bf16.xpose.msra.mxu0 %v838
      %1105 = vmatprep.subr.bf16.mxu0 %v864
      %1106 = vmatpush1.bf16.xpose.msra.mxu0 %v863
      %1107 = vmatprep.subr.bf16.mxu0 %v889
      %1108 = vmatpush1.bf16.xpose.msra.mxu0 %v888
      %1109 = vmatprep.subr.bf16.mxu0 0
      %1110 = vmatpush1.bf16.xpose.msra.mxu0 0
      %1111 = vmatprep.subr.bf16.mxu0 0
      %1112 = vmatpush1.bf16.xpose.msra.mxu0 0
      %1113 = vmatprep.subr.bf16.mxu0 0
      %1114 = vmatpush1.bf16.xpose.msra.mxu0 0
      %1115 = vmatprep.subr.bf16.mxu0 0
      %1116 = vmatpush1.bf16.xpose.msra.mxu0 0
      %1117 = vmatprep.subr.bf16.mxu0 0
      %1118 = vmatpush1.bf16.xpose.msra.mxu0 0
      %1119 = vmatprep.subr.bf16.mxu0 0
      %1120 = vmatpush1.bf16.xpose.msra.mxu0 0
      %1121 = vmatprep.subr.bf16.mxu0 0
      %1122 = vmatpush1.bf16.xpose.msra.mxu0 0
      %1123 = vmatprep.subr.bf16.mxu0 0
      %1124 = vmatpush1.bf16.xpose.msra.mxu0 0
      %1125 = vmatprep.subr.bf16.mxu0 0
      %1126 = vmatpush1.bf16.xpose.msra.mxu0 0
      %1127 = vmatprep.subr.bf16.mxu0 0
      %1128 = vmatpush1.bf16.xpose.msra.mxu0 0
      %1129 = vmatprep.subr.bf16.mxu0 0
      %1130 = vmatpush1.bf16.xpose.msra.mxu0 0
      %1131 = vmatprep.subr.bf16.mxu0 0
      %1132 = vmatpush1.bf16.xpose.msra.mxu0 0
      %1133 = vmatprep.mubr.bf16.mxu0 %v364
      %1134 = vmatmul.mubr.bf16.gmra.mrb[0].mxu0 %v350
      %v1135 = vpop.f32.mrb[0].mxu0
      %v1136 = vadd.f32 %v1096, %v1135
      %v1137 = vpop.f32.mrb[0].mxu0
      %v1138 = vpop.f32.mrb[0].mxu0
      %v1139 = vpop.f32.mrb[0].mxu0
      %1140 = vdwg.mxu0
      %1141 = vmatprep.subr.bf16.mxu0 %v816
      %1142 = vmatpush1.bf16.xpose.msra.mxu0 %v815
      %1143 = vmatprep.subr.bf16.mxu0 %v841
      %1144 = vmatpush1.bf16.xpose.msra.mxu0 %v840
      %1145 = vmatprep.subr.bf16.mxu0 %v866
      %1146 = vmatpush1.bf16.xpose.msra.mxu0 %v865
      %1147 = vmatprep.subr.bf16.mxu0 %v891
      %1148 = vmatpush1.bf16.xpose.msra.mxu0 %v890
      %1149 = vmatprep.subr.bf16.mxu0 0
      %1150 = vmatpush1.bf16.xpose.msra.mxu0 0
      %1151 = vmatprep.subr.bf16.mxu0 0
      %1152 = vmatpush1.bf16.xpose.msra.mxu0 0
      %1153 = vmatprep.subr.bf16.mxu0 0
      %1154 = vmatpush1.bf16.xpose.msra.mxu0 0
      %1155 = vmatprep.subr.bf16.mxu0 0
      %1156 = vmatpush1.bf16.xpose.msra.mxu0 0
      %1157 = vmatprep.subr.bf16.mxu0 0
      %1158 = vmatpush1.bf16.xpose.msra.mxu0 0
      %1159 = vmatprep.subr.bf16.mxu0 0
      %1160 = vmatpush1.bf16.xpose.msra.mxu0 0
      %1161 = vmatprep.subr.bf16.mxu0 0
      %1162 = vmatpush1.bf16.xpose.msra.mxu0 0
      %1163 = vmatprep.subr.bf16.mxu0 0
      %1164 = vmatpush1.bf16.xpose.msra.mxu0 0
      %1165 = vmatprep.subr.bf16.mxu0 0
      %1166 = vmatpush1.bf16.xpose.msra.mxu0 0
      %1167 = vmatprep.subr.bf16.mxu0 0
      %1168 = vmatpush1.bf16.xpose.msra.mxu0 0
      %1169 = vmatprep.subr.bf16.mxu0 0
      %1170 = vmatpush1.bf16.xpose.msra.mxu0 0
      %1171 = vmatprep.subr.bf16.mxu0 0
      %1172 = vmatpush1.bf16.xpose.msra.mxu0 0
      %1173 = vmatprep.mubr.bf16.mxu0 %v368
      %1174 = vmatmul.mubr.bf16.gmra.mrb[0].mxu0 %v366
      %v1175 = vpop.f32.mrb[0].mxu0
      %v1176 = vadd.f32 %v1136, %v1175
      %v1177 = vpop.f32.mrb[0].mxu0
      %v1178 = vpop.f32.mrb[0].mxu0
      %v1179 = vpop.f32.mrb[0].mxu0
      %1180 = vdwg.mxu0
      %1181 = vmatprep.subr.bf16.mxu0 %v818
      %1182 = vmatpush1.bf16.xpose.msra.mxu0 %v817
      %1183 = vmatprep.subr.bf16.mxu0 %v843
      %1184 = vmatpush1.bf16.xpose.msra.mxu0 %v842
      %1185 = vmatprep.subr.bf16.mxu0 %v868
      %1186 = vmatpush1.bf16.xpose.msra.mxu0 %v867
      %1187 = vmatprep.subr.bf16.mxu0 %v893
      %1188 = vmatpush1.bf16.xpose.msra.mxu0 %v892
      %1189 = vmatprep.subr.bf16.mxu0 0
      %1190 = vmatpush1.bf16.xpose.msra.mxu0 0
      %1191 = vmatprep.subr.bf16.mxu0 0
      %1192 = vmatpush1.bf16.xpose.msra.mxu0 0
      %1193 = vmatprep.subr.bf16.mxu0 0
      %1194 = vmatpush1.bf16.xpose.msra.mxu0 0
      %1195 = vmatprep.subr.bf16.mxu0 0
      %1196 = vmatpush1.bf16.xpose.msra.mxu0 0
      %1197 = vmatprep.subr.bf16.mxu0 0
      %1198 = vmatpush1.bf16.xpose.msra.mxu0 0
      %1199 = vmatprep.subr.bf16.mxu0 0
      %1200 = vmatpush1.bf16.xpose.msra.mxu0 0
      %1201 = vmatprep.subr.bf16.mxu0 0
      %1202 = vmatpush1.bf16.xpose.msra.mxu0 0
      %1203 = vmatprep.subr.bf16.mxu0 0
      %1204 = vmatpush1.bf16.xpose.msra.mxu0 0
      %1205 = vmatprep.subr.bf16.mxu0 0
      %1206 = vmatpush1.bf16.xpose.msra.mxu0 0
      %1207 = vmatprep.subr.bf16.mxu0 0
      %1208 = vmatpush1.bf16.xpose.msra.mxu0 0
      %1209 = vmatprep.subr.bf16.mxu0 0
      %1210 = vmatpush1.bf16.xpose.msra.mxu0 0
      %1211 = vmatprep.subr.bf16.mxu0 0
      %1212 = vmatpush1.bf16.xpose.msra.mxu0 0
      %1213 = vmatprep.mubr.bf16.mxu0 %v406
      %1214 = vmatmul.mubr.bf16.gmra.mrb[0].mxu0 %v392
      %v1215 = vpop.f32.mrb[0].mxu0
      %v1216 = vadd.f32 %v1176, %v1215
      %v1217 = vpop.f32.mrb[0].mxu0
      %v1218 = vpop.f32.mrb[0].mxu0
      %v1219 = vpop.f32.mrb[0].mxu0
      %1220 = vdwg.mxu0
      %1221 = vmatprep.subr.bf16.mxu0 %v820
      %1222 = vmatpush1.bf16.xpose.msra.mxu0 %v819
      %1223 = vmatprep.subr.bf16.mxu0 %v845
      %1224 = vmatpush1.bf16.xpose.msra.mxu0 %v844
      %1225 = vmatprep.subr.bf16.mxu0 %v870
      %1226 = vmatpush1.bf16.xpose.msra.mxu0 %v869
      %1227 = vmatprep.subr.bf16.mxu0 %v895
      %1228 = vmatpush1.bf16.xpose.msra.mxu0 %v894
      %1229 = vmatprep.subr.bf16.mxu0 0
      %1230 = vmatpush1.bf16.xpose.msra.mxu0 0
      %1231 = vmatprep.subr.bf16.mxu0 0
      %1232 = vmatpush1.bf16.xpose.msra.mxu0 0
      %1233 = vmatprep.subr.bf16.mxu0 0
      %1234 = vmatpush1.bf16.xpose.msra.mxu0 0
      %1235 = vmatprep.subr.bf16.mxu0 0
      %1236 = vmatpush1.bf16.xpose.msra.mxu0 0
      %1237 = vmatprep.subr.bf16.mxu0 0
      %1238 = vmatpush1.bf16.xpose.msra.mxu0 0
      %1239 = vmatprep.subr.bf16.mxu0 0
      %1240 = vmatpush1.bf16.xpose.msra.mxu0 0
      %1241 = vmatprep.subr.bf16.mxu0 0
      %1242 = vmatpush1.bf16.xpose.msra.mxu0 0
      %1243 = vmatprep.subr.bf16.mxu0 0
      %1244 = vmatpush1.bf16.xpose.msra.mxu0 0
      %1245 = vmatprep.subr.bf16.mxu0 0
      %1246 = vmatpush1.bf16.xpose.msra.mxu0 0
      %1247 = vmatprep.subr.bf16.mxu0 0
      %1248 = vmatpush1.bf16.xpose.msra.mxu0 0
      %1249 = vmatprep.subr.bf16.mxu0 0
      %1250 = vmatpush1.bf16.xpose.msra.mxu0 0
      %1251 = vmatprep.subr.bf16.mxu0 0
      %1252 = vmatpush1.bf16.xpose.msra.mxu0 0
      %1253 = vmatprep.mubr.bf16.mxu0 %v416
      %1254 = vmatmul.mubr.bf16.gmra.mrb[0].mxu0 %v414
      %v1255 = vpop.f32.mrb[0].mxu0
      %v1256 = vadd.f32 %v1216, %v1255
      %v1257 = vpop.f32.mrb[0].mxu0
      %v1258 = vpop.f32.mrb[0].mxu0
      %v1259 = vpop.f32.mrb[0].mxu0
      %1260 = vdwg.mxu0
      %1261 = vmatprep.subr.bf16.mxu0 %v822
      %1262 = vmatpush1.bf16.xpose.msra.mxu0 %v821
      %1263 = vmatprep.subr.bf16.mxu0 %v847
      %1264 = vmatpush1.bf16.xpose.msra.mxu0 %v846
      %1265 = vmatprep.subr.bf16.mxu0 %v872
      %1266 = vmatpush1.bf16.xpose.msra.mxu0 %v871
      %1267 = vmatprep.subr.bf16.mxu0 %v897
      %1268 = vmatpush1.bf16.xpose.msra.mxu0 %v896
      %1269 = vmatprep.subr.bf16.mxu0 0
      %1270 = vmatpush1.bf16.xpose.msra.mxu0 0
      %1271 = vmatprep.subr.bf16.mxu0 0
      %1272 = vmatpush1.bf16.xpose.msra.mxu0 0
      %1273 = vmatprep.subr.bf16.mxu0 0
      %1274 = vmatpush1.bf16.xpose.msra.mxu0 0
      %1275 = vmatprep.subr.bf16.mxu0 0
      %1276 = vmatpush1.bf16.xpose.msra.mxu0 0
      %1277 = vmatprep.subr.bf16.mxu0 0
      %1278 = vmatpush1.bf16.xpose.msra.mxu0 0
      %1279 = vmatprep.subr.bf16.mxu0 0
      %1280 = vmatpush1.bf16.xpose.msra.mxu0 0
      %1281 = vmatprep.subr.bf16.mxu0 0
      %1282 = vmatpush1.bf16.xpose.msra.mxu0 0
      %1283 = vmatprep.subr.bf16.mxu0 0
      %1284 = vmatpush1.bf16.xpose.msra.mxu0 0
      %1285 = vmatprep.subr.bf16.mxu0 0
      %1286 = vmatpush1.bf16.xpose.msra.mxu0 0
      %1287 = vmatprep.subr.bf16.mxu0 0
      %1288 = vmatpush1.bf16.xpose.msra.mxu0 0
      %1289 = vmatprep.subr.bf16.mxu0 0
      %1290 = vmatpush1.bf16.xpose.msra.mxu0 0
      %1291 = vmatprep.subr.bf16.mxu0 0
      %1292 = vmatpush1.bf16.xpose.msra.mxu0 0
      %1293 = vmatprep.mubr.bf16.mxu0 %v413
      %1294 = vmatmul.mubr.bf16.gmra.mrb[0].mxu0 %v399
      %v1295 = vpop.f32.mrb[0].mxu0
      %v1296 = vadd.f32 %v1256, %v1295
      %v1297 = vpop.f32.mrb[0].mxu0
      %v1298 = vpop.f32.mrb[0].mxu0
      %v1299 = vpop.f32.mrb[0].mxu0
      %1300 = vdwg.mxu0
      %1301 = vmatprep.subr.bf16.mxu0 %v824
      %1302 = vmatpush1.bf16.xpose.msra.mxu0 %v823
      %1303 = vmatprep.subr.bf16.mxu0 %v849
      %1304 = vmatpush1.bf16.xpose.msra.mxu0 %v848
      %1305 = vmatprep.subr.bf16.mxu0 %v874
      %1306 = vmatpush1.bf16.xpose.msra.mxu0 %v873
      %1307 = vmatprep.subr.bf16.mxu0 %v899
      %1308 = vmatpush1.bf16.xpose.msra.mxu0 %v898
      %1309 = vmatprep.subr.bf16.mxu0 0
      %1310 = vmatpush1.bf16.xpose.msra.mxu0 0
      %1311 = vmatprep.subr.bf16.mxu0 0
      %1312 = vmatpush1.bf16.xpose.msra.mxu0 0
      %1313 = vmatprep.subr.bf16.mxu0 0
      %1314 = vmatpush1.bf16.xpose.msra.mxu0 0
      %1315 = vmatprep.subr.bf16.mxu0 0
      %1316 = vmatpush1.bf16.xpose.msra.mxu0 0
      %1317 = vmatprep.subr.bf16.mxu0 0
      %1318 = vmatpush1.bf16.xpose.msra.mxu0 0
      %1319 = vmatprep.subr.bf16.mxu0 0
      %1320 = vmatpush1.bf16.xpose.msra.mxu0 0
      %1321 = vmatprep.subr.bf16.mxu0 0
      %1322 = vmatpush1.bf16.xpose.msra.mxu0 0
      %1323 = vmatprep.subr.bf16.mxu0 0
      %1324 = vmatpush1.bf16.xpose.msra.mxu0 0
      %1325 = vmatprep.subr.bf16.mxu0 0
      %1326 = vmatpush1.bf16.xpose.msra.mxu0 0
      %1327 = vmatprep.subr.bf16.mxu0 0
      %1328 = vmatpush1.bf16.xpose.msra.mxu0 0
      %1329 = vmatprep.subr.bf16.mxu0 0
      %1330 = vmatpush1.bf16.xpose.msra.mxu0 0
      %1331 = vmatprep.subr.bf16.mxu0 0
      %1332 = vmatpush1.bf16.xpose.msra.mxu0 0
      %1333 = vmatprep.mubr.bf16.mxu0 %v417
      %1334 = vmatmul.mubr.bf16.gmra.mrb[0].mxu0 %v415
      %v1335 = vpop.f32.mrb[0].mxu0
      %v1336 = vadd.f32 %v1296, %v1335
      %v1337 = vpop.f32.mrb[0].mxu0
      %v1338 = vpop.f32.mrb[0].mxu0
      %v1339 = vpop.f32.mrb[0].mxu0
      %1340 = vdwg.mxu0
      %1341 = vmatprep.subr.bf16.mxu0 %v826
      %1342 = vmatpush1.bf16.xpose.msra.mxu0 %v825
      %1343 = vmatprep.subr.bf16.mxu0 %v851
      %1344 = vmatpush1.bf16.xpose.msra.mxu0 %v850
      %1345 = vmatprep.subr.bf16.mxu0 %v876
      %1346 = vmatpush1.bf16.xpose.msra.mxu0 %v875
      %1347 = vmatprep.subr.bf16.mxu0 %v901
      %1348 = vmatpush1.bf16.xpose.msra.mxu0 %v900
      %1349 = vmatprep.subr.bf16.mxu0 0
      %1350 = vmatpush1.bf16.xpose.msra.mxu0 0
      %1351 = vmatprep.subr.bf16.mxu0 0
      %1352 = vmatpush1.bf16.xpose.msra.mxu0 0
      %1353 = vmatprep.subr.bf16.mxu0 0
      %1354 = vmatpush1.bf16.xpose.msra.mxu0 0
      %1355 = vmatprep.subr.bf16.mxu0 0
      %1356 = vmatpush1.bf16.xpose.msra.mxu0 0
      %1357 = vmatprep.subr.bf16.mxu0 0
      %1358 = vmatpush1.bf16.xpose.msra.mxu0 0
      %1359 = vmatprep.subr.bf16.mxu0 0
      %1360 = vmatpush1.bf16.xpose.msra.mxu0 0
      %1361 = vmatprep.subr.bf16.mxu0 0
      %1362 = vmatpush1.bf16.xpose.msra.mxu0 0
      %1363 = vmatprep.subr.bf16.mxu0 0
      %1364 = vmatpush1.bf16.xpose.msra.mxu0 0
      %1365 = vmatprep.subr.bf16.mxu0 0
      %1366 = vmatpush1.bf16.xpose.msra.mxu0 0
      %1367 = vmatprep.subr.bf16.mxu0 0
      %1368 = vmatpush1.bf16.xpose.msra.mxu0 0
      %1369 = vmatprep.subr.bf16.mxu0 0
      %1370 = vmatpush1.bf16.xpose.msra.mxu0 0
      %1371 = vmatprep.subr.bf16.mxu0 0
      %1372 = vmatpush1.bf16.xpose.msra.mxu0 0
      %1373 = vmatprep.mubr.bf16.mxu0 %v455
      %1374 = vmatmul.mubr.bf16.gmra.mrb[0].mxu0 %v441
      %v1375 = vpop.f32.mrb[0].mxu0
      %v1376 = vadd.f32 %v1336, %v1375
      %v1377 = vpop.f32.mrb[0].mxu0
      %v1378 = vpop.f32.mrb[0].mxu0
      %v1379 = vpop.f32.mrb[0].mxu0
      %1380 = vdwg.mxu0
      %1381 = vmatprep.subr.bf16.mxu0 %v828
      %1382 = vmatpush1.bf16.xpose.msra.mxu0 %v827
      %1383 = vmatprep.subr.bf16.mxu0 %v853
      %1384 = vmatpush1.bf16.xpose.msra.mxu0 %v852
      %1385 = vmatprep.subr.bf16.mxu0 %v878
      %1386 = vmatpush1.bf16.xpose.msra.mxu0 %v877
      %1387 = vmatprep.subr.bf16.mxu0 %v903
      %1388 = vmatpush1.bf16.xpose.msra.mxu0 %v902
      %1389 = vmatprep.subr.bf16.mxu0 0
      %1390 = vmatpush1.bf16.xpose.msra.mxu0 0
      %1391 = vmatprep.subr.bf16.mxu0 0
      %1392 = vmatpush1.bf16.xpose.msra.mxu0 0
      %1393 = vmatprep.subr.bf16.mxu0 0
      %1394 = vmatpush1.bf16.xpose.msra.mxu0 0
      %1395 = vmatprep.subr.bf16.mxu0 0
      %1396 = vmatpush1.bf16.xpose.msra.mxu0 0
      %1397 = vmatprep.subr.bf16.mxu0 0
      %1398 = vmatpush1.bf16.xpose.msra.mxu0 0
      %1399 = vmatprep.subr.bf16.mxu0 0
      %1400 = vmatpush1.bf16.xpose.msra.mxu0 0
      %1401 = vmatprep.subr.bf16.mxu0 0
      %1402 = vmatpush1.bf16.xpose.msra.mxu0 0
      %1403 = vmatprep.subr.bf16.mxu0 0
      %1404 = vmatpush1.bf16.xpose.msra.mxu0 0
      %1405 = vmatprep.subr.bf16.mxu0 0
      %1406 = vmatpush1.bf16.xpose.msra.mxu0 0
      %1407 = vmatprep.subr.bf16.mxu0 0
      %1408 = vmatpush1.bf16.xpose.msra.mxu0 0
      %1409 = vmatprep.subr.bf16.mxu0 0
      %1410 = vmatpush1.bf16.xpose.msra.mxu0 0
      %1411 = vmatprep.subr.bf16.mxu0 0
      %1412 = vmatpush1.bf16.xpose.msra.mxu0 0
      %1413 = vmatprep.mubr.bf16.mxu0 %v465
      %1414 = vmatmul.mubr.bf16.gmra.mrb[0].mxu0 %v463
      %v1415 = vpop.f32.mrb[0].mxu0
      %v1416 = vadd.f32 %v1376, %v1415
      %v1417 = vpop.f32.mrb[0].mxu0
      %v1418 = vpop.f32.mrb[0].mxu0
      %v1419 = vpop.f32.mrb[0].mxu0
      %1420 = vdwg.mxu0
      %1421 = vmatprep.subr.bf16.mxu0 %v830
      %1422 = vmatpush1.bf16.xpose.msra.mxu0 %v829
      %1423 = vmatprep.subr.bf16.mxu0 %v855
      %1424 = vmatpush1.bf16.xpose.msra.mxu0 %v854
      %1425 = vmatprep.subr.bf16.mxu0 %v880
      %1426 = vmatpush1.bf16.xpose.msra.mxu0 %v879
      %1427 = vmatprep.subr.bf16.mxu0 %v905
      %1428 = vmatpush1.bf16.xpose.msra.mxu0 %v904
      %1429 = vmatprep.subr.bf16.mxu0 0
      %1430 = vmatpush1.bf16.xpose.msra.mxu0 0
      %1431 = vmatprep.subr.bf16.mxu0 0
      %1432 = vmatpush1.bf16.xpose.msra.mxu0 0
      %1433 = vmatprep.subr.bf16.mxu0 0
      %1434 = vmatpush1.bf16.xpose.msra.mxu0 0
      %1435 = vmatprep.subr.bf16.mxu0 0
      %1436 = vmatpush1.bf16.xpose.msra.mxu0 0
      %1437 = vmatprep.subr.bf16.mxu0 0
      %1438 = vmatpush1.bf16.xpose.msra.mxu0 0
      %1439 = vmatprep.subr.bf16.mxu0 0
      %1440 = vmatpush1.bf16.xpose.msra.mxu0 0
      %1441 = vmatprep.subr.bf16.mxu0 0
      %1442 = vmatpush1.bf16.xpose.msra.mxu0 0
      %1443 = vmatprep.subr.bf16.mxu0 0
      %1444 = vmatpush1.bf16.xpose.msra.mxu0 0
      %1445 = vmatprep.subr.bf16.mxu0 0
      %1446 = vmatpush1.bf16.xpose.msra.mxu0 0
      %1447 = vmatprep.subr.bf16.mxu0 0
      %1448 = vmatpush1.bf16.xpose.msra.mxu0 0
      %1449 = vmatprep.subr.bf16.mxu0 0
      %1450 = vmatpush1.bf16.xpose.msra.mxu0 0
      %1451 = vmatprep.subr.bf16.mxu0 0
      %1452 = vmatpush1.bf16.xpose.msra.mxu0 0
      %1453 = vmatprep.mubr.bf16.mxu0 %v462
      %1454 = vmatmul.mubr.bf16.gmra.mrb[0].mxu0 %v448
      %v1455 = vpop.f32.mrb[0].mxu0
      %v1456 = vadd.f32 %v1416, %v1455
      %v1457 = vpop.f32.mrb[0].mxu0
      %v1458 = vpop.f32.mrb[0].mxu0
      %v1459 = vpop.f32.mrb[0].mxu0
      %1460 = vdwg.mxu0
      %1461 = vmatprep.subr.bf16.mxu0 %v832
      %1462 = vmatpush1.bf16.xpose.msra.mxu0 %v831
      %1463 = vmatprep.subr.bf16.mxu0 %v857
      %1464 = vmatpush1.bf16.xpose.msra.mxu0 %v856
      %1465 = vmatprep.subr.bf16.mxu0 %v882
      %1466 = vmatpush1.bf16.xpose.msra.mxu0 %v881
      %1467 = vmatprep.subr.bf16.mxu0 %v907
      %1468 = vmatpush1.bf16.xpose.msra.mxu0 %v906
      %1469 = vmatprep.subr.bf16.mxu0 0
      %1470 = vmatpush1.bf16.xpose.msra.mxu0 0
      %1471 = vmatprep.subr.bf16.mxu0 0
      %1472 = vmatpush1.bf16.xpose.msra.mxu0 0
      %1473 = vmatprep.subr.bf16.mxu0 0
      %1474 = vmatpush1.bf16.xpose.msra.mxu0 0
      %1475 = vmatprep.subr.bf16.mxu0 0
      %1476 = vmatpush1.bf16.xpose.msra.mxu0 0
      %1477 = vmatprep.subr.bf16.mxu0 0
      %1478 = vmatpush1.bf16.xpose.msra.mxu0 0
      %1479 = vmatprep.subr.bf16.mxu0 0
      %1480 = vmatpush1.bf16.xpose.msra.mxu0 0
      %1481 = vmatprep.subr.bf16.mxu0 0
      %1482 = vmatpush1.bf16.xpose.msra.mxu0 0
      %1483 = vmatprep.subr.bf16.mxu0 0
      %1484 = vmatpush1.bf16.xpose.msra.mxu0 0
      %1485 = vmatprep.subr.bf16.mxu0 0
      %1486 = vmatpush1.bf16.xpose.msra.mxu0 0
      %1487 = vmatprep.subr.bf16.mxu0 0
      %1488 = vmatpush1.bf16.xpose.msra.mxu0 0
      %1489 = vmatprep.subr.bf16.mxu0 0
      %1490 = vmatpush1.bf16.xpose.msra.mxu0 0
      %1491 = vmatprep.subr.bf16.mxu0 0
      %1492 = vmatpush1.bf16.xpose.msra.mxu0 0
      %1493 = vmatprep.mubr.bf16.mxu0 %v466
      %1494 = vmatmul.mubr.bf16.gmra.mrb[0].mxu0 %v464
      %v1495 = vpop.f32.mrb[0].mxu0
      %v1496 = vadd.f32 %v1456, %v1495
      %v1497 = vpop.f32.mrb[0].mxu0
      %v1498 = vpop.f32.mrb[0].mxu0
      %v1499 = vpop.f32.mrb[0].mxu0
      %1500 = vdwg.mxu0
      %1501 = vmatprep.subr.bf16.mxu0 0
      %1502 = vmatpush1.bf16.xpose.msra.mxu0 %v1010
      %1503 = vmatprep.subr.bf16.mxu0 0
      %1504 = vmatpush1.bf16.xpose.msra.mxu0 %v1013
      %1505 = vmatprep.subr.bf16.mxu0 0
      %1506 = vmatpush1.bf16.xpose.msra.mxu0 %v1016
      %1507 = vmatprep.subr.bf16.mxu0 0
      %1508 = vmatpush1.bf16.xpose.msra.mxu0 %v1019
      %1509 = vmatprep.subr.bf16.mxu0 0
      %1510 = vmatpush1.bf16.xpose.msra.mxu0 0
      %1511 = vmatprep.subr.bf16.mxu0 0
      %1512 = vmatpush1.bf16.xpose.msra.mxu0 0
      %1513 = vmatprep.subr.bf16.mxu0 0
      %1514 = vmatpush1.bf16.xpose.msra.mxu0 0
      %1515 = vmatprep.subr.bf16.mxu0 0
      %1516 = vmatpush1.bf16.xpose.msra.mxu0 0
      %1517 = vmatprep.subr.bf16.mxu0 0
      %1518 = vmatpush1.bf16.xpose.msra.mxu0 0
      %1519 = vmatprep.subr.bf16.mxu0 0
      %1520 = vmatpush1.bf16.xpose.msra.mxu0 0
      %1521 = vmatprep.subr.bf16.mxu0 0
      %1522 = vmatpush1.bf16.xpose.msra.mxu0 0
      %1523 = vmatprep.subr.bf16.mxu0 0
      %1524 = vmatpush1.bf16.xpose.msra.mxu0 0
      %1525 = vmatprep.subr.bf16.mxu0 0
      %1526 = vmatpush1.bf16.xpose.msra.mxu0 0
      %1527 = vmatprep.subr.bf16.mxu0 0
      %1528 = vmatpush1.bf16.xpose.msra.mxu0 0
      %1529 = vmatprep.subr.bf16.mxu0 0
      %1530 = vmatpush1.bf16.xpose.msra.mxu0 0
      %1531 = vmatprep.subr.bf16.mxu0 0
      %1532 = vmatpush1.bf16.xpose.msra.mxu0 0
      %1533 = vmatprep.mubr.bf16.mxu0 0
      %1534 = vmatmul.mubr.bf16.gmra.mrb[0].mxu0 %v1007
      %v1535 = vpop.f32.mrb[0].mxu0
      %v1536 = vadd.f32 %v1496, %v1535
      %v1537 = vpop.f32.mrb[0].mxu0
      %v1538 = vpop.f32.mrb[0].mxu0
      %v1539 = vpop.f32.mrb[0].mxu0
      %1540 = vdwg.mxu0
      %vm1541 = vcmask 517120
      %1542 = vst.msk [vmem:[%s199] sm:$0x3] %vm1541, %v1536
      %p1543 = scmp.lt.s32.totalorder %s14, 1
      %s1544 = scalar_select %p1543, %s14, 1
      %s1545 = smul.addr %s1544, 2
      %s1546 = scalar_lea.vmem %s3, %s1545
      // Predicated region
      $region33: #{rnd_forward.7} parent=31 // pred_check
        %p1547 = pneg %p110
      $region34: #{rnd_forward.7} parent=31 // pred_check_branch
        %1549 = sbr.rel (%p1547) target = $region36
      $region35: #{rnd_forward.7} parent=31 // pred_region
        _
      $region36: #{rnd_forward.7} parent=31 // pred_fallthru
        _
    $region32: #{rnd_forward.7} parent=5 // pred_fallthru
      _
    %p1550 = scmp.le.s32.totalorder 2, %s9
    // Predicated region
    $region37: #{rnd_forward.7} parent=5 // pred_check
      %p1551 = pneg %p1550
    $region38: #{rnd_forward.7} parent=5 // pred_check_branch
      %1553 = sbr.rel (%p1551) target = $region40
    $region39: #{rnd_forward.7} parent=5 // pred_region
      %s1554 = ssub.s32 %s9, 2
      // Predicated region
      $region41: #{rnd_forward.7} parent=39 // pred_check
        %p1555 = pneg %p116
      $region42: #{rnd_forward.7} parent=39 // pred_check_branch
        %1557 = sbr.rel (%p1555) target = $region44
      $region43: #{rnd_forward.7} parent=39 // pred_region
        %p1558 = scmp.lt.s32.totalorder %s15, 1
        %s1559 = scalar_select %p1558, %s15, 1
        %s1560 = smul.addr %s1559, 2
        %s1561 = scalar_lea.vmem %s3, %s1560
      $region44: #{rnd_forward.7} parent=39 // pred_fallthru
        _
    $region40: #{rnd_forward.7} parent=5 // pred_fallthru
      _
  $region6: #{rnd_forward.7} parent=0 // loop_footer
    %s13 = sadd.s32 1, %s9
  $region7: #{rnd_forward.7} parent=0 // loop_footer_branch
    %8 = sbr.rel target = $region3
  $region8: #{rnd_forward.7} parent=0 // loop_exit
    _

</llo_original>
